<compile_context>
chip_gen: v6e
topology: v6e:2x2x1
jax: 0.10.0
libtpu: 0.0.40
codegen_flags: <defaults>
</compile_context>

<pallas_src>
import jax
import jax.numpy as jnp
from jax import lax
from jax.experimental import pallas as pl
from jax.experimental.pallas import tpu as pltpu
import numpy as np


def _round_up(a, b):
    return (a + b - 1) // b * b


def _pool_compute_dtype():
    # bf16 VPU exists on v6e/v7x; v5e and older lack it -> keep pool sums in f32 there.
    # A wrong guess only costs a little perf (both paths are valid on every chip).
    try:
        kind = jax.devices()[0].device_kind.lower()
    except Exception:
        return jnp.float32
    for old in ("v2", "v3", "v4", "v5"):
        if old in kind:
            return jnp.float32
    return jnp.bfloat16


# ---------------------------------------------------------------------------
# Kernel: ReLU -> AvgPool(5,3) (as sums) -> fused Conv1x1(+BN1) -> ReLU ->
#         Conv2x2(+BN2) -> ReLU -> Linear   (all in one VMEM-resident tile)
# ---------------------------------------------------------------------------
def _make_aux_head_kernel(pool_dtype):
    def aux_head_kernel(x_ref, w1_ref, b1_ref, w2_ref, b2_ref, wfc_ref, bfc_ref,
                        out_ref):
        # x: (Nt, 64, C) bf16, flat spatial index = 8*h + w, channels on lanes.
        xr = jnp.maximum(x_ref[...].astype(pool_dtype), 0)      # ReLU

        # AvgPool2d(5, stride=3, padding=0) on 8x8 -> 2x2 output, window offsets {0,3}.
        # Windows lie fully inside the input so count_include_pad is irrelevant.
        # Separable window SUMS; the 1/25 scale is folded into the conv1 weight.
        vs = []                                                  # per oh: (Nt, 8, C) f32
        for i in (0, 1):
            r0 = 3 * i
            acc = xr[:, r0 * 8:(r0 + 1) * 8, :]
            for dh in range(1, 5):
                r = r0 + dh
                acc = acc + xr[:, r * 8:(r + 1) * 8, :]
            vs.append(acc.astype(jnp.float32))
        pooled = []                                              # (oh, ow)-major: (Nt, C) bf16
        for i in (0, 1):
            for j in (0, 1):
                acc = vs[i][:, 3 * j, :]
                for dw in range(1, 5):
                    acc = acc + vs[i][:, 3 * j + dw, :]
                pooled.append(acc.astype(jnp.bfloat16))

        # (Nt, 4C), columns ordered (kh, kw, c_in) -- matches block-diagonal w1.
        z1 = jnp.concatenate(pooled, axis=1)

        # Fused Conv2d(C,128,1) for all 4 windows + folded BN1 scale/shift, then ReLU.
        h1 = jnp.dot(z1, w1_ref[...], preferred_element_type=jnp.float32)
        h1 = jnp.maximum(h1 + b1_ref[...], 0.0)                  # (Nt, 512) f32

        # Conv2d(128,768,2): full (kh,kw,c_mid) contraction == one (512,768) matmul.
        h2 = jnp.dot(h1.astype(jnp.bfloat16), w2_ref[...],
                     preferred_element_type=jnp.float32)
        h2 = jnp.maximum(h2 + b2_ref[...], 0.0)                  # (Nt, 768) f32

        # Classifier: Linear(768, num_classes), padded to 128 lanes.
        out = jnp.dot(h2.astype(jnp.bfloat16), wfc_ref[...],
                      preferred_element_type=jnp.float32) + bfc_ref[...]
        out_ref[...] = out.astype(out_ref.dtype)

    return aux_head_kernel


def auxiliary_head_cifar(x, params):
    """x: (N, C, 8, 8) float32 NCHW.  Returns (N, num_classes) float32."""
    (w1, g1, be1, m1, v1, w2, g2, be2, m2, v2, wfc, bfc) = params
    eps = 1e-5
    N, C = x.shape[0], x.shape[1]
    assert x.shape[2] == 8 and x.shape[3] == 8, "module assumes 8x8 spatial input"
    num_classes = wfc.shape[0]

    # ---- fold BatchNorm (inference) + 1/25 avg-pool scale into scale/shift ---------
    s1 = g1 / jnp.sqrt(v1 + eps)                             # (128,)
    s2 = g2 / jnp.sqrt(v2 + eps)                             # (768,)

    # Conv1 (128, C, 1, 1) -> (C, 128); fold 1/25 avg scale + BN1 scale.
    w1t = w1.reshape(128, C).T * (s1 / 25.0)[None, :]        # (C, 128)
    # Block-diagonal (4C, 512): window p only feeds columns [p*128, (p+1)*128).
    w1blk = jnp.kron(jnp.eye(4, dtype=jnp.float32), w1t).astype(jnp.bfloat16)
    b1 = jnp.tile(be1 - m1 * s1, 4).reshape(1, 512).astype(jnp.float32)

    # Conv2 (768, 128, 2, 2): contraction order (kh, kw, c_mid); fold BN2 scale.
    w2t = (jnp.transpose(w2, (0, 2, 3, 1)).reshape(768, 512).T
           * s2[None, :]).astype(jnp.bfloat16)               # (512, 768)
    b2 = (be2 - m2 * s2).reshape(1, 768).astype(jnp.float32)

    # Classifier, padded to a lane-dense 128-wide output.
    nc_pad = _round_up(num_classes, 128)
    wfct = jnp.zeros((768, nc_pad), jnp.float32).at[:, :num_classes].set(wfc.T)
    wfct = wfct.astype(jnp.bfloat16)
    bfcp = jnp.zeros((1, nc_pad), jnp.float32).at[:, :num_classes].set(bfc)

    # ---- x -> bf16, NHWC, spatial flattened (cast fused into the transpose copy) ----
    x_cl = jnp.transpose(x, (0, 2, 3, 1)).astype(jnp.bfloat16).reshape(N, 64, C)

    # Batch tile: <= 128 rows (VMEM-safe on all generations, >= 2 grid steps for
    # typical batches so v7x megacore shards the grid), shrunk adaptively for very
    # wide C so the bf16 x tile stays <= ~2 MiB.
    rows_for_2mib = max(8, ((2 << 20) // (64 * C * 2)) // 8 * 8)
    n_tile = min(128, rows_for_2mib, _round_up(N, 8))
    n_pad = _round_up(N, n_tile)
    if n_pad != N:
        x_cl = jnp.pad(x_cl, ((0, n_pad - N), (0, 0), (0, 0)))

    flops = 2 * n_pad * (4 * C * 512 + 512 * 768 + 768 * nc_pad)
    bytes_accessed = (x_cl.size * 2 + w1blk.size * 2 + w2t.size * 2 + wfct.size * 2
                      + b1.size * 4 + b2.size * 4 + bfcp.size * 4 + n_pad * nc_pad * 4)
    cost = pl.CostEstimate(flops=int(flops), transcendentals=0,
                           bytes_accessed=int(bytes_accessed))

    kernel = _make_aux_head_kernel(_pool_compute_dtype())

    out = pl.pallas_call(
        kernel,
        out_shape=jax.ShapeDtypeStruct((n_pad, nc_pad), jnp.float32),
        grid=(n_pad // n_tile,),
        in_specs=[
            pl.BlockSpec((n_tile, 64, C), lambda i: (i, 0, 0)),   # x tile (bf16)
            pl.BlockSpec((4 * C, 512), lambda i: (0, 0)),         # w1 block-diag (resident)
            pl.BlockSpec((1, 512), lambda i: (0, 0)),             # b1
            pl.BlockSpec((512, 768), lambda i: (0, 0)),           # w2
            pl.BlockSpec((1, 768), lambda i: (0, 0)),             # b2
            pl.BlockSpec((768, nc_pad), lambda i: (0, 0)),        # fc weight
            pl.BlockSpec((1, nc_pad), lambda i: (0, 0)),          # fc bias
        ],
        out_specs=pl.BlockSpec((n_tile, nc_pad), lambda i: (i, 0)),
        compiler_params=pltpu.CompilerParams(
            dimension_semantics=("parallel",),
            vmem_limit_bytes=32 * 1024 * 1024),
        cost_estimate=cost,
    )(x_cl, w1blk, b1, w2t, b2, wfct, bfcp)

    return out[:N, :num_classes]


# ---------------------------------------------------------------------------
# Pure-JAX f32 reference with PyTorch NCHW semantics, for verification.
# ---------------------------------------------------------------------------
def torch_reference(x, params, eps=1e-5):
    (w1, g1, be1, m1, v1, w2, g2, be2, m2, v2, wfc, bfc) = params
    xr = jnp.maximum(x, 0.0)
    p = lax.reduce_window(xr, 0.0, lax.add, (1, 1, 5, 5), (1, 1, 3, 3), 'VALID') / 25.0
    dn = ('NCHW', 'OIHW', 'NCHW')
    y1 = lax.conv_general_dilated(p, w1, (1, 1), 'VALID', dimension_numbers=dn)
    y1 = (y1 - m1[None, :, None, None]) / jnp.sqrt(v1 + eps)[None, :, None, None]
    y1 = y1 * g1[None, :, None, None] + be1[None, :, None, None]
    y1 = jnp.maximum(y1, 0.0)
    y2 = lax.conv_general_dilated(y1, w2, (1, 1), 'VALID', dimension_numbers=dn)
    y2 = (y2 - m2[None, :, None, None]) / jnp.sqrt(v2 + eps)[None, :, None, None]
    y2 = y2 * g2[None, :, None, None] + be2[None, :, None, None]
    y2 = jnp.maximum(y2, 0.0)
    flat = y2.reshape(y2.shape[0], -1)
    return flat @ wfc.T + bfc


if __name__ == "__main__":
    N, C, num_classes = 2, 128, 10     # module assumes 8x8 spatial input
    key = jax.random.PRNGKey(0)
    ks = jax.random.split(key, 13)

    x = jax.random.normal(ks[0], (N, C, 8, 8), dtype=jnp.float32)

    w1 = jax.random.normal(ks[1], (128, C, 1, 1), dtype=jnp.float32) * 0.1
    g1 = 1.0 + 0.1 * jax.random.normal(ks[2], (128,), dtype=jnp.float32)
    be1 = 0.1 * jax.random.normal(ks[3], (128,), dtype=jnp.float32)
    m1 = 0.1 * jax.random.normal(ks[4], (128,), dtype=jnp.float32)
    v1 = 0.5 + jnp.abs(jax.random.normal(ks[5], (128,), dtype=jnp.float32))

    w2 = jax.random.normal(ks[6], (768, 128, 2, 2), dtype=jnp.float32) * 0.05
    g2 = 1.0 + 0.1 * jax.random.normal(ks[7], (768,), dtype=jnp.float32)
    be2 = 0.1 * jax.random.normal(ks[8], (768,), dtype=jnp.float32)
    m2 = 0.1 * jax.random.normal(ks[9], (768,), dtype=jnp.float32)
    v2 = 0.5 + jnp.abs(jax.random.normal(ks[10], (768,), dtype=jnp.float32))

    wfc = jax.random.normal(ks[11], (num_classes, 768), dtype=jnp.float32) * 0.05
    bfc = 0.1 * jax.random.normal(ks[12], (num_classes,), dtype=jnp.float32)

    params = (w1, g1, be1, m1, v1, w2, g2, be2, m2, v2, wfc, bfc)

    out = jax.block_until_ready(auxiliary_head_cifar(x, params))
    ref = jax.block_until_ready(torch_reference(x, params))

    # bf16 input + bf16 matmul operands (f32 accumulation) vs pure-f32 reference.
    np.testing.assert_allclose(np.asarray(out), np.asarray(ref), rtol=5e-2, atol=5e-2)
    print("KERNEL_OK")
</pallas_src>

<mosaic_0001>
module attributes {stable_mosaic.version = 11 : i64} {
  func.func @aux_head_kernel(%arg0: i32, %arg1: memref<8x64x128xbf16, #tpu.memory_space<vmem>>, %arg2: memref<512x512xbf16, #tpu.memory_space<vmem>>, %arg3: memref<1x512xf32, #tpu.memory_space<vmem>>, %arg4: memref<512x768xbf16, #tpu.memory_space<vmem>>, %arg5: memref<1x768xf32, #tpu.memory_space<vmem>>, %arg6: memref<768x128xbf16, #tpu.memory_space<vmem>>, %arg7: memref<1x128xf32, #tpu.memory_space<vmem>>, %arg8: memref<8x128xf32, #tpu.memory_space<vmem>>) attributes {dimension_semantics = [#tpu.dimension_semantics<parallel>], iteration_bounds = array<i64: 1>, scalar_prefetch = 0 : i64, scratch_operands = 0 : i64, tpu.core_type = #tpu.core_type<tc>, window_params = [{transform_indices = @transform_0, window_bounds = array<i64: 8, 64, 128>}, {pipeline_mode = #tpu.pipeline_mode<synchronous>, transform_indices = @transform_1, window_bounds = array<i64: 512, 512>}, {pipeline_mode = #tpu.pipeline_mode<synchronous>, transform_indices = @transform_2, window_bounds = array<i64: 1, 512>}, {pipeline_mode = #tpu.pipeline_mode<synchronous>, transform_indices = @transform_3, window_bounds = array<i64: 512, 768>}, {pipeline_mode = #tpu.pipeline_mode<synchronous>, transform_indices = @transform_4, window_bounds = array<i64: 1, 768>}, {pipeline_mode = #tpu.pipeline_mode<synchronous>, transform_indices = @transform_5, window_bounds = array<i64: 768, 128>}, {pipeline_mode = #tpu.pipeline_mode<synchronous>, transform_indices = @transform_6, window_bounds = array<i64: 1, 128>}, {transform_indices = @transform_7, window_bounds = array<i64: 8, 128>}]} {
    %c0 = arith.constant 0 : index
    %c0_0 = arith.constant 0 : index
    %c0_1 = arith.constant 0 : index
    %0 = vector.load %arg1[%c0, %c0_0, %c0_1] : memref<8x64x128xbf16, #tpu.memory_space<vmem>>, vector<8x64x128xbf16>
    %cst = arith.constant 0.000000e+00 : bf16
    %1 = vector.broadcast %cst : bf16 to vector<8x64x128xbf16>
    %2 = arith.maximumf %0, %1 : vector<8x64x128xbf16>
    %3 = vector.extract_strided_slice %2 {offsets = [0, 0, 0], sizes = [8, 8, 128], strides = [1, 1, 1]} : vector<8x64x128xbf16> to vector<8x8x128xbf16>
    %4 = vector.extract_strided_slice %2 {offsets = [0, 8, 0], sizes = [8, 8, 128], strides = [1, 1, 1]} : vector<8x64x128xbf16> to vector<8x8x128xbf16>
    %5 = arith.addf %3, %4 : vector<8x8x128xbf16>
    %6 = vector.extract_strided_slice %2 {offsets = [0, 16, 0], sizes = [8, 8, 128], strides = [1, 1, 1]} : vector<8x64x128xbf16> to vector<8x8x128xbf16>
    %7 = arith.addf %5, %6 : vector<8x8x128xbf16>
    %8 = vector.extract_strided_slice %2 {offsets = [0, 24, 0], sizes = [8, 8, 128], strides = [1, 1, 1]} : vector<8x64x128xbf16> to vector<8x8x128xbf16>
    %9 = arith.addf %7, %8 : vector<8x8x128xbf16>
    %10 = vector.extract_strided_slice %2 {offsets = [0, 32, 0], sizes = [8, 8, 128], strides = [1, 1, 1]} : vector<8x64x128xbf16> to vector<8x8x128xbf16>
    %11 = arith.addf %9, %10 : vector<8x8x128xbf16>
    %12 = arith.extf %11 : vector<8x8x128xbf16> to vector<8x8x128xf32>
    %13 = vector.extract_strided_slice %2 {offsets = [0, 24, 0], sizes = [8, 8, 128], strides = [1, 1, 1]} : vector<8x64x128xbf16> to vector<8x8x128xbf16>
    %14 = vector.extract_strided_slice %2 {offsets = [0, 32, 0], sizes = [8, 8, 128], strides = [1, 1, 1]} : vector<8x64x128xbf16> to vector<8x8x128xbf16>
    %15 = arith.addf %13, %14 : vector<8x8x128xbf16>
    %16 = vector.extract_strided_slice %2 {offsets = [0, 40, 0], sizes = [8, 8, 128], strides = [1, 1, 1]} : vector<8x64x128xbf16> to vector<8x8x128xbf16>
    %17 = arith.addf %15, %16 : vector<8x8x128xbf16>
    %18 = vector.extract_strided_slice %2 {offsets = [0, 48, 0], sizes = [8, 8, 128], strides = [1, 1, 1]} : vector<8x64x128xbf16> to vector<8x8x128xbf16>
    %19 = arith.addf %17, %18 : vector<8x8x128xbf16>
    %20 = vector.extract_strided_slice %2 {offsets = [0, 56, 0], sizes = [8, 8, 128], strides = [1, 1, 1]} : vector<8x64x128xbf16> to vector<8x8x128xbf16>
    %21 = arith.addf %19, %20 : vector<8x8x128xbf16>
    %22 = arith.extf %21 : vector<8x8x128xbf16> to vector<8x8x128xf32>
    %23 = vector.extract_strided_slice %12 {offsets = [0, 0, 0], sizes = [8, 1, 128], strides = [1, 1, 1]} : vector<8x8x128xf32> to vector<8x1x128xf32>
    %24 = vector.shape_cast %23 : vector<8x1x128xf32> to vector<8x128xf32>
    %25 = vector.extract_strided_slice %12 {offsets = [0, 1, 0], sizes = [8, 1, 128], strides = [1, 1, 1]} : vector<8x8x128xf32> to vector<8x1x128xf32>
    %26 = vector.shape_cast %25 : vector<8x1x128xf32> to vector<8x128xf32>
    %27 = arith.addf %24, %26 : vector<8x128xf32>
    %28 = vector.extract_strided_slice %12 {offsets = [0, 2, 0], sizes = [8, 1, 128], strides = [1, 1, 1]} : vector<8x8x128xf32> to vector<8x1x128xf32>
    %29 = vector.shape_cast %28 : vector<8x1x128xf32> to vector<8x128xf32>
    %30 = arith.addf %27, %29 : vector<8x128xf32>
    %31 = vector.extract_strided_slice %12 {offsets = [0, 3, 0], sizes = [8, 1, 128], strides = [1, 1, 1]} : vector<8x8x128xf32> to vector<8x1x128xf32>
    %32 = vector.shape_cast %31 : vector<8x1x128xf32> to vector<8x128xf32>
    %33 = arith.addf %30, %32 : vector<8x128xf32>
    %34 = vector.extract_strided_slice %12 {offsets = [0, 4, 0], sizes = [8, 1, 128], strides = [1, 1, 1]} : vector<8x8x128xf32> to vector<8x1x128xf32>
    %35 = vector.shape_cast %34 : vector<8x1x128xf32> to vector<8x128xf32>
    %36 = arith.addf %33, %35 : vector<8x128xf32>
    %37 = arith.truncf %36 : vector<8x128xf32> to vector<8x128xbf16>
    %38 = vector.extract_strided_slice %12 {offsets = [0, 3, 0], sizes = [8, 1, 128], strides = [1, 1, 1]} : vector<8x8x128xf32> to vector<8x1x128xf32>
    %39 = vector.shape_cast %38 : vector<8x1x128xf32> to vector<8x128xf32>
    %40 = vector.extract_strided_slice %12 {offsets = [0, 4, 0], sizes = [8, 1, 128], strides = [1, 1, 1]} : vector<8x8x128xf32> to vector<8x1x128xf32>
    %41 = vector.shape_cast %40 : vector<8x1x128xf32> to vector<8x128xf32>
    %42 = arith.addf %39, %41 : vector<8x128xf32>
    %43 = vector.extract_strided_slice %12 {offsets = [0, 5, 0], sizes = [8, 1, 128], strides = [1, 1, 1]} : vector<8x8x128xf32> to vector<8x1x128xf32>
    %44 = vector.shape_cast %43 : vector<8x1x128xf32> to vector<8x128xf32>
    %45 = arith.addf %42, %44 : vector<8x128xf32>
    %46 = vector.extract_strided_slice %12 {offsets = [0, 6, 0], sizes = [8, 1, 128], strides = [1, 1, 1]} : vector<8x8x128xf32> to vector<8x1x128xf32>
    %47 = vector.shape_cast %46 : vector<8x1x128xf32> to vector<8x128xf32>
    %48 = arith.addf %45, %47 : vector<8x128xf32>
    %49 = vector.extract_strided_slice %12 {offsets = [0, 7, 0], sizes = [8, 1, 128], strides = [1, 1, 1]} : vector<8x8x128xf32> to vector<8x1x128xf32>
    %50 = vector.shape_cast %49 : vector<8x1x128xf32> to vector<8x128xf32>
    %51 = arith.addf %48, %50 : vector<8x128xf32>
    %52 = arith.truncf %51 : vector<8x128xf32> to vector<8x128xbf16>
    %53 = vector.extract_strided_slice %22 {offsets = [0, 0, 0], sizes = [8, 1, 128], strides = [1, 1, 1]} : vector<8x8x128xf32> to vector<8x1x128xf32>
    %54 = vector.shape_cast %53 : vector<8x1x128xf32> to vector<8x128xf32>
    %55 = vector.extract_strided_slice %22 {offsets = [0, 1, 0], sizes = [8, 1, 128], strides = [1, 1, 1]} : vector<8x8x128xf32> to vector<8x1x128xf32>
    %56 = vector.shape_cast %55 : vector<8x1x128xf32> to vector<8x128xf32>
    %57 = arith.addf %54, %56 : vector<8x128xf32>
    %58 = vector.extract_strided_slice %22 {offsets = [0, 2, 0], sizes = [8, 1, 128], strides = [1, 1, 1]} : vector<8x8x128xf32> to vector<8x1x128xf32>
    %59 = vector.shape_cast %58 : vector<8x1x128xf32> to vector<8x128xf32>
    %60 = arith.addf %57, %59 : vector<8x128xf32>
    %61 = vector.extract_strided_slice %22 {offsets = [0, 3, 0], sizes = [8, 1, 128], strides = [1, 1, 1]} : vector<8x8x128xf32> to vector<8x1x128xf32>
    %62 = vector.shape_cast %61 : vector<8x1x128xf32> to vector<8x128xf32>
    %63 = arith.addf %60, %62 : vector<8x128xf32>
    %64 = vector.extract_strided_slice %22 {offsets = [0, 4, 0], sizes = [8, 1, 128], strides = [1, 1, 1]} : vector<8x8x128xf32> to vector<8x1x128xf32>
    %65 = vector.shape_cast %64 : vector<8x1x128xf32> to vector<8x128xf32>
    %66 = arith.addf %63, %65 : vector<8x128xf32>
    %67 = arith.truncf %66 : vector<8x128xf32> to vector<8x128xbf16>
    %68 = vector.extract_strided_slice %22 {offsets = [0, 3, 0], sizes = [8, 1, 128], strides = [1, 1, 1]} : vector<8x8x128xf32> to vector<8x1x128xf32>
    %69 = vector.shape_cast %68 : vector<8x1x128xf32> to vector<8x128xf32>
    %70 = vector.extract_strided_slice %22 {offsets = [0, 4, 0], sizes = [8, 1, 128], strides = [1, 1, 1]} : vector<8x8x128xf32> to vector<8x1x128xf32>
    %71 = vector.shape_cast %70 : vector<8x1x128xf32> to vector<8x128xf32>
    %72 = arith.addf %69, %71 : vector<8x128xf32>
    %73 = vector.extract_strided_slice %22 {offsets = [0, 5, 0], sizes = [8, 1, 128], strides = [1, 1, 1]} : vector<8x8x128xf32> to vector<8x1x128xf32>
    %74 = vector.shape_cast %73 : vector<8x1x128xf32> to vector<8x128xf32>
    %75 = arith.addf %72, %74 : vector<8x128xf32>
    %76 = vector.extract_strided_slice %22 {offsets = [0, 6, 0], sizes = [8, 1, 128], strides = [1, 1, 1]} : vector<8x8x128xf32> to vector<8x1x128xf32>
    %77 = vector.shape_cast %76 : vector<8x1x128xf32> to vector<8x128xf32>
    %78 = arith.addf %75, %77 : vector<8x128xf32>
    %79 = vector.extract_strided_slice %22 {offsets = [0, 7, 0], sizes = [8, 1, 128], strides = [1, 1, 1]} : vector<8x8x128xf32> to vector<8x1x128xf32>
    %80 = vector.shape_cast %79 : vector<8x1x128xf32> to vector<8x128xf32>
    %81 = arith.addf %78, %80 : vector<8x128xf32>
    %82 = arith.truncf %81 : vector<8x128xf32> to vector<8x128xbf16>
    %83 = tpu.concatenate %37, %52, %67, %82 in 1 : vector<8x128xbf16>, vector<8x128xbf16>, vector<8x128xbf16>, vector<8x128xbf16> -> vector<8x512xbf16>
    %c0_2 = arith.constant 0 : index
    %c0_3 = arith.constant 0 : index
    %84 = vector.load %arg2[%c0_2, %c0_3] : memref<512x512xbf16, #tpu.memory_space<vmem>>, vector<512x512xbf16>
    %cst_4 = arith.constant dense<0.000000e+00> : vector<8x512xf32>
    %85 = tpu.matmul %83, %84, %cst_4 {dimension_numbers = #tpu.dot_dimension_numbers<[1], [0], [0], [1], [0, 0, 1, 1], [], []>} : vector<8x512xbf16>, vector<512x512xbf16>, vector<8x512xf32> -> vector<8x512xf32>
    %c0_5 = arith.constant 0 : index
    %c0_6 = arith.constant 0 : index
    %86 = vector.load %arg3[%c0_5, %c0_6] : memref<1x512xf32, #tpu.memory_space<vmem>>, vector<1x512xf32>
    %87 = vector.broadcast %86 : vector<1x512xf32> to vector<8x512xf32>
    %88 = arith.addf %85, %87 : vector<8x512xf32>
    %cst_7 = arith.constant 0.000000e+00 : f32
    %89 = vector.broadcast %cst_7 : f32 to vector<8x512xf32>
    %90 = arith.maximumf %88, %89 : vector<8x512xf32>
    %91 = arith.truncf %90 : vector<8x512xf32> to vector<8x512xbf16>
    %c0_8 = arith.constant 0 : index
    %c0_9 = arith.constant 0 : index
    %92 = vector.load %arg4[%c0_8, %c0_9] : memref<512x768xbf16, #tpu.memory_space<vmem>>, vector<512x768xbf16>
    %cst_10 = arith.constant dense<0.000000e+00> : vector<8x768xf32>
    %93 = tpu.matmul %91, %92, %cst_10 {dimension_numbers = #tpu.dot_dimension_numbers<[1], [0], [0], [1], [0, 0, 1, 1], [], []>} : vector<8x512xbf16>, vector<512x768xbf16>, vector<8x768xf32> -> vector<8x768xf32>
    %c0_11 = arith.constant 0 : index
    %c0_12 = arith.constant 0 : index
    %94 = vector.load %arg5[%c0_11, %c0_12] : memref<1x768xf32, #tpu.memory_space<vmem>>, vector<1x768xf32>
    %95 = vector.broadcast %94 : vector<1x768xf32> to vector<8x768xf32>
    %96 = arith.addf %93, %95 : vector<8x768xf32>
    %cst_13 = arith.constant 0.000000e+00 : f32
    %97 = vector.broadcast %cst_13 : f32 to vector<8x768xf32>
    %98 = arith.maximumf %96, %97 : vector<8x768xf32>
    %99 = arith.truncf %98 : vector<8x768xf32> to vector<8x768xbf16>
    %c0_14 = arith.constant 0 : index
    %c0_15 = arith.constant 0 : index
    %100 = vector.load %arg6[%c0_14, %c0_15] : memref<768x128xbf16, #tpu.memory_space<vmem>>, vector<768x128xbf16>
    %cst_16 = arith.constant dense<0.000000e+00> : vector<8x128xf32>
    %101 = tpu.matmul %99, %100, %cst_16 {dimension_numbers = #tpu.dot_dimension_numbers<[1], [0], [0], [1], [0, 0, 1, 1], [], []>} : vector<8x768xbf16>, vector<768x128xbf16>, vector<8x128xf32> -> vector<8x128xf32>
    %c0_17 = arith.constant 0 : index
    %c0_18 = arith.constant 0 : index
    %102 = vector.load %arg7[%c0_17, %c0_18] : memref<1x128xf32, #tpu.memory_space<vmem>>, vector<1x128xf32>
    %103 = vector.broadcast %102 : vector<1x128xf32> to vector<8x128xf32>
    %104 = arith.addf %101, %103 : vector<8x128xf32>
    %c0_19 = arith.constant 0 : index
    %c0_20 = arith.constant 0 : index
    %105 = vector.load %arg8[%c0_19, %c0_20] : memref<8x128xf32, #tpu.memory_space<vmem>>, vector<8x128xf32>
    tpu.vector_store %arg8[%c0_19, %c0_20], %104 {strides = array<i32>} : memref<8x128xf32, #tpu.memory_space<vmem>>, vector<8x128xf32>,
    return
  }
  func.func @transform_0(%arg0: i32) -> (i32, i32, i32) {
    %c0_i32 = arith.constant 0 : i32
    %c0_i32_0 = arith.constant 0 : i32
    %c0_i32_1 = arith.constant 0 : i32
    return %arg0, %c0_i32, %c0_i32_0 : i32, i32, i32
  }
  func.func @transform_1(%arg0: i32) -> (i32, i32) {
    %c0_i32 = arith.constant 0 : i32
    %c0_i32_0 = arith.constant 0 : i32
    %c0_i32_1 = arith.constant 0 : i32
    return %c0_i32, %c0_i32_0 : i32, i32
  }
  func.func @transform_2(%arg0: i32) -> (i32, i32) {
    %c0_i32 = arith.constant 0 : i32
    %c0_i32_0 = arith.constant 0 : i32
    %c0_i32_1 = arith.constant 0 : i32
    return %c0_i32, %c0_i32_0 : i32, i32
  }
  func.func @transform_3(%arg0: i32) -> (i32, i32) {
    %c0_i32 = arith.constant 0 : i32
    %c0_i32_0 = arith.constant 0 : i32
    %c0_i32_1 = arith.constant 0 : i32
    return %c0_i32, %c0_i32_0 : i32, i32
  }
  func.func @transform_4(%arg0: i32) -> (i32, i32) {
    %c0_i32 = arith.constant 0 : i32
    %c0_i32_0 = arith.constant 0 : i32
    %c0_i32_1 = arith.constant 0 : i32
    return %c0_i32, %c0_i32_0 : i32, i32
  }
  func.func @transform_5(%arg0: i32) -> (i32, i32) {
    %c0_i32 = arith.constant 0 : i32
    %c0_i32_0 = arith.constant 0 : i32
    %c0_i32_1 = arith.constant 0 : i32
    return %c0_i32, %c0_i32_0 : i32, i32
  }
  func.func @transform_6(%arg0: i32) -> (i32, i32) {
    %c0_i32 = arith.constant 0 : i32
    %c0_i32_0 = arith.constant 0 : i32
    %c0_i32_1 = arith.constant 0 : i32
    return %c0_i32, %c0_i32_0 : i32, i32
  }
  func.func @transform_7(%arg0: i32) -> (i32, i32) {
    %c0_i32 = arith.constant 0 : i32
    %c0_i32_0 = arith.constant 0 : i32
    return %arg0, %c0_i32 : i32, i32
  }
}

</mosaic_0001>

<llo_original>
// kernel: tpu_custom_call.1
$region0: #{tpu_custom_call.1}
  #allocation0 [shape = 'u32[]', space=smem, size = 0x4, offset = 0x4, fixed_abs, tag = 'smem constant byte address 0x4 - core index']
  #allocation1 [shape = 'u32[144,128]{1,0:T(1,128)}', space=vmem, size = 0x12000, scoped, tag = 'internal scratch']
  %s0 = inlined_call_operand.hbm [shape: bf16[8,64,128], index: 0, kind: input, shape index: {}]
  %s1 = inlined_call_operand.hbm [shape: bf16[512,512], index: 1, kind: input, shape index: {}]
  %s2 = inlined_call_operand.hbm [shape: f32[1,512], index: 2, kind: input, shape index: {}]
  %s3 = inlined_call_operand.hbm [shape: bf16[512,768], index: 3, kind: input, shape index: {}]
  %s4 = inlined_call_operand.vmem [shape: f32[1,768], index: 4, kind: input, shape index: {}]
  %s5 = inlined_call_operand.hbm [shape: bf16[768,128], index: 5, kind: input, shape index: {}]
  %s6 = inlined_call_operand.vmem [shape: f32[1,128], index: 6, kind: input, shape index: {}]
  %s7 = inlined_call_operand.hbm [shape: f32[8,128], index: 7, kind: output, shape index: {}]
  %s8 = sld [smem:[#allocation0]]
  $region58: #{tpu_custom_call.1} parent=0
    _
  %s10 = ssub.s32 1, %s8
  %s11 = scalar_select 0, %s10, %s8
  $region1: #{tpu_custom_call.1} parent=0
    #allocation2 [shape = 'u8[131072]{0}', space=vmem, size = 0x20000, scoped, tag = 'input window, operand 0, single buffered']
    #allocation3 [shape = 's32[1]{0}', space=sflag, size = 0x4, scoped, tag = 'scoped memory for tpu_custom_call.1']
    #allocation4 [shape = 's32[1]{0}', space=sflag, size = 0x4, scoped, tag = 'scoped memory for tpu_custom_call.1']
    #allocation5 [shape = 'u8[524288]{0}', space=vmem, size = 0x80000, scoped, tag = 'input window, operand 1, single buffered']
    #allocation6 [shape = 's32[1]{0}', space=sflag, size = 0x4, scoped, tag = 'scoped memory for tpu_custom_call.1']
    #allocation7 [shape = 'u8[2048]{0}', space=vmem, size = 0x800, scoped, tag = 'input window, operand 2, single buffered']
    #allocation8 [shape = 'u8[786432]{0}', space=vmem, size = 0xc0000, scoped, tag = 'input window, operand 3, single buffered']
    #allocation9 [shape = 's32[1]{0}', space=sflag, size = 0x4, scoped, tag = 'scoped memory for tpu_custom_call.1']
    #allocation10 [shape = 'u8[196608]{0}', space=vmem, size = 0x30000, scoped, tag = 'input window, operand 5, single buffered']
    #allocation11 [shape = 'u8[4096]{0}', space=vmem, size = 0x1000, scoped, tag = 'output window, operand 0, single buffered']
    %12 = vsyncpa [#allocation3], 0
    %13 = vsyncpa [#allocation6], 0
    %14 = vsyncpa [#allocation9], 0
    %15 = vsyncpa [#allocation4], 0
    // Predicated region
    $region2: #{tpu_custom_call.1} parent=1 // pred_check
      _
    $region3: #{tpu_custom_call.1} parent=1 // pred_check_branch
      %17 = sbr.rel (0) target = $region5
    $region4: #{tpu_custom_call.1} parent=1 // pred_region
      %s19 = ssub.s32 4096, 4096
      %20 = vsyncadd [#allocation3], %s19
      %s21 = sshll.u32 [#allocation2], 4
      %s22 = int_to_ptr.vmem [resolvable:$true] %s21
      %27 = dma.hbm_to_vmem [thread:$0]  %s0, 4096, %s22, [#allocation3], 64, 64, 4
    $region5: #{tpu_custom_call.1} parent=1 // pred_fallthru
      _
    // Predicated region
    $region6: #{tpu_custom_call.1} parent=1 // pred_check
      _
    $region7: #{tpu_custom_call.1} parent=1 // pred_check_branch
      %29 = sbr.rel (0) target = $region9
    $region8: #{tpu_custom_call.1} parent=1 // pred_region
      %s31 = ssub.s32 16384, 16384
      %32 = vsyncadd [#allocation6], %s31
      %s33 = sshll.u32 [#allocation5], 4
      %s34 = int_to_ptr.vmem [resolvable:$true] %s33
      %39 = dma.hbm_to_vmem [thread:$0]  %s1, 16384, %s34, [#allocation6], 256, 256, 16
    $region9: #{tpu_custom_call.1} parent=1 // pred_fallthru
      _
    // Predicated region
    $region10: #{tpu_custom_call.1} parent=1 // pred_check
      _
    $region11: #{tpu_custom_call.1} parent=1 // pred_check_branch
      %41 = sbr.rel (0) target = $region13
    $region12: #{tpu_custom_call.1} parent=1 // pred_region
      %s43 = ssub.s32 64, 64
      %44 = vsyncadd [#allocation6], %s43
      %s46 = sshll.u32 [#allocation7], 4
      %s47 = int_to_ptr.vmem [resolvable:$true] %s46
      %49 = dma.hbm_to_vmem [thread:$0]  %s2, 64, %s47, [#allocation6]
    $region13: #{tpu_custom_call.1} parent=1 // pred_fallthru
      _
    // Predicated region
    $region14: #{tpu_custom_call.1} parent=1 // pred_check
      _
    $region15: #{tpu_custom_call.1} parent=1 // pred_check_branch
      %51 = sbr.rel (0) target = $region17
    $region16: #{tpu_custom_call.1} parent=1 // pred_region
      %s53 = ssub.s32 24576, 24576
      %54 = vsyncadd [#allocation9], %s53
      %s55 = sshll.u32 [#allocation8], 4
      %s56 = int_to_ptr.vmem [resolvable:$true] %s55
      %61 = dma.hbm_to_vmem [thread:$0]  %s3, 24576, %s56, [#allocation9], 384, 384, 24
    $region17: #{tpu_custom_call.1} parent=1 // pred_fallthru
      _
    // Predicated region
    $region18: #{tpu_custom_call.1} parent=1 // pred_check
      _
    $region19: #{tpu_custom_call.1} parent=1 // pred_check_branch
      %63 = sbr.rel (0) target = $region21
    $region20: #{tpu_custom_call.1} parent=1 // pred_region
      _
    $region21: #{tpu_custom_call.1} parent=1 // pred_fallthru
      _
    // Predicated region
    $region22: #{tpu_custom_call.1} parent=1 // pred_check
      _
    $region23: #{tpu_custom_call.1} parent=1 // pred_check_branch
      %65 = sbr.rel (0) target = $region25
    $region24: #{tpu_custom_call.1} parent=1 // pred_region
      %s67 = ssub.s32 6144, 6144
      %68 = vsyncadd [#allocation9], %s67
      %s69 = sshll.u32 [#allocation10], 4
      %s70 = int_to_ptr.vmem [resolvable:$true] %s69
      %75 = dma.hbm_to_vmem [thread:$0]  %s5, 6144, %s70, [#allocation9], 64, 64, 4
    $region25: #{tpu_custom_call.1} parent=1 // pred_fallthru
      _
    // Predicated region
    $region26: #{tpu_custom_call.1} parent=1 // pred_check
      _
    $region27: #{tpu_custom_call.1} parent=1 // pred_check_branch
      %77 = sbr.rel (0) target = $region29
    $region28: #{tpu_custom_call.1} parent=1 // pred_region
      _
    $region29: #{tpu_custom_call.1} parent=1 // pred_fallthru
      _
    // Predicated region
    $region30: #{tpu_custom_call.1} parent=1 // pred_check
      _
    $region31: #{tpu_custom_call.1} parent=1 // pred_check_branch
      %79 = sbr.rel (0) target = $region33
    $region32: #{tpu_custom_call.1} parent=1 // pred_region
      %80 = dma.done [#allocation3], 4096
    $region33: #{tpu_custom_call.1} parent=1 // pred_fallthru
      _
    // Predicated region
    $region34: #{tpu_custom_call.1} parent=1 // pred_check
      _
    $region35: #{tpu_custom_call.1} parent=1 // pred_check_branch
      %82 = sbr.rel (0) target = $region37
    $region36: #{tpu_custom_call.1} parent=1 // pred_region
      %83 = dma.done [#allocation6], 16384
    $region37: #{tpu_custom_call.1} parent=1 // pred_fallthru
      _
    // Predicated region
    $region38: #{tpu_custom_call.1} parent=1 // pred_check
      _
    $region39: #{tpu_custom_call.1} parent=1 // pred_check_branch
      %85 = sbr.rel (0) target = $region41
    $region40: #{tpu_custom_call.1} parent=1 // pred_region
      %86 = dma.done [#allocation6], 64
    $region41: #{tpu_custom_call.1} parent=1 // pred_fallthru
      _
    // Predicated region
    $region42: #{tpu_custom_call.1} parent=1 // pred_check
      _
    $region43: #{tpu_custom_call.1} parent=1 // pred_check_branch
      %88 = sbr.rel (0) target = $region45
    $region44: #{tpu_custom_call.1} parent=1 // pred_region
      %89 = dma.done [#allocation9], 24576
    $region45: #{tpu_custom_call.1} parent=1 // pred_fallthru
      _
    // Predicated region
    $region46: #{tpu_custom_call.1} parent=1 // pred_check
      _
    $region47: #{tpu_custom_call.1} parent=1 // pred_check_branch
      %91 = sbr.rel (0) target = $region49
    $region48: #{tpu_custom_call.1} parent=1 // pred_region
      %92 = dma.done [#allocation9], 6144
    $region49: #{tpu_custom_call.1} parent=1 // pred_fallthru
      _
    %v94 = vld [vmem:[#allocation2] sm:$0xf]
    %v95 = vld [vmem:[#allocation2 + $0x4] sm:$0xf]
    %v96 = vld [vmem:[#allocation2 + $0x8] sm:$0xf]
    %v97 = vld [vmem:[#allocation2 + $0xc] sm:$0xf]
    %v98 = vld [vmem:[#allocation2 + $0x10] sm:$0xf]
    %v99 = vld [vmem:[#allocation2 + $0x14] sm:$0xf]
    %v100 = vld [vmem:[#allocation2 + $0x18] sm:$0xf]
    %v101 = vld [vmem:[#allocation2 + $0x1c] sm:$0xf]
    %v102 = vld [vmem:[#allocation2 + $0x20] sm:$0xf]
    %v103 = vld [vmem:[#allocation2 + $0x24] sm:$0xf]
    %v104 = vld [vmem:[#allocation2 + $0x28] sm:$0xf]
    %v105 = vld [vmem:[#allocation2 + $0x2c] sm:$0xf]
    %v106 = vld [vmem:[#allocation2 + $0x30] sm:$0xf]
    %v107 = vld [vmem:[#allocation2 + $0x34] sm:$0xf]
    %v108 = vld [vmem:[#allocation2 + $0x38] sm:$0xf]
    %v109 = vld [vmem:[#allocation2 + $0x3c] sm:$0xf]
    %v110 = vld [vmem:[#allocation2 + $0x40] sm:$0xf]
    %v111 = vld [vmem:[#allocation2 + $0x44] sm:$0xf]
    %v112 = vld [vmem:[#allocation2 + $0x48] sm:$0xf]
    %v113 = vld [vmem:[#allocation2 + $0x4c] sm:$0xf]
    %v114 = vld [vmem:[#allocation2 + $0x50] sm:$0xf]
    %v115 = vld [vmem:[#allocation2 + $0x54] sm:$0xf]
    %v116 = vld [vmem:[#allocation2 + $0x58] sm:$0xf]
    %v117 = vld [vmem:[#allocation2 + $0x5c] sm:$0xf]
    %v118 = vld [vmem:[#allocation2 + $0x60] sm:$0xf]
    %v119 = vld [vmem:[#allocation2 + $0x64] sm:$0xf]
    %v120 = vld [vmem:[#allocation2 + $0x68] sm:$0xf]
    %v121 = vld [vmem:[#allocation2 + $0x6c] sm:$0xf]
    %v122 = vld [vmem:[#allocation2 + $0x70] sm:$0xf]
    %v123 = vld [vmem:[#allocation2 + $0x74] sm:$0xf]
    %v124 = vld [vmem:[#allocation2 + $0x78] sm:$0xf]
    %v125 = vld [vmem:[#allocation2 + $0x7c] sm:$0xf]
    %v126 = vld [vmem:[#allocation2 + $0x80] sm:$0xf]
    %v127 = vld [vmem:[#allocation2 + $0x84] sm:$0xf]
    %v128 = vld [vmem:[#allocation2 + $0x88] sm:$0xf]
    %v129 = vld [vmem:[#allocation2 + $0x8c] sm:$0xf]
    %v130 = vld [vmem:[#allocation2 + $0x90] sm:$0xf]
    %v131 = vld [vmem:[#allocation2 + $0x94] sm:$0xf]
    %v132 = vld [vmem:[#allocation2 + $0x98] sm:$0xf]
    %v133 = vld [vmem:[#allocation2 + $0x9c] sm:$0xf]
    %v134 = vld [vmem:[#allocation2 + $0xa0] sm:$0xf]
    %v135 = vld [vmem:[#allocation2 + $0xa4] sm:$0xf]
    %v136 = vld [vmem:[#allocation2 + $0xa8] sm:$0xf]
    %v137 = vld [vmem:[#allocation2 + $0xac] sm:$0xf]
    %v138 = vld [vmem:[#allocation2 + $0xb0] sm:$0xf]
    %v139 = vld [vmem:[#allocation2 + $0xb4] sm:$0xf]
    %v140 = vld [vmem:[#allocation2 + $0xb8] sm:$0xf]
    %v141 = vld [vmem:[#allocation2 + $0xbc] sm:$0xf]
    %v142 = vld [vmem:[#allocation2 + $0xc0] sm:$0xf]
    %v143 = vld [vmem:[#allocation2 + $0xc4] sm:$0xf]
    %v144 = vld [vmem:[#allocation2 + $0xc8] sm:$0xf]
    %v145 = vld [vmem:[#allocation2 + $0xcc] sm:$0xf]
    %v146 = vld [vmem:[#allocation2 + $0xd0] sm:$0xf]
    %v147 = vld [vmem:[#allocation2 + $0xd4] sm:$0xf]
    %v148 = vld [vmem:[#allocation2 + $0xd8] sm:$0xf]
    %v149 = vld [vmem:[#allocation2 + $0xdc] sm:$0xf]
    %v150 = vld [vmem:[#allocation2 + $0xe0] sm:$0xf]
    %v151 = vld [vmem:[#allocation2 + $0xe4] sm:$0xf]
    %v152 = vld [vmem:[#allocation2 + $0xe8] sm:$0xf]
    %v153 = vld [vmem:[#allocation2 + $0xec] sm:$0xf]
    %v154 = vld [vmem:[#allocation2 + $0xf0] sm:$0xf]
    %v155 = vld [vmem:[#allocation2 + $0xf4] sm:$0xf]
    %v156 = vld [vmem:[#allocation2 + $0xf8] sm:$0xf]
    %v157 = vld [vmem:[#allocation2 + $0xfc] sm:$0xf]
    %v158 = vmax.bf16 %v94, 0
    %v159 = vmax.bf16 %v95, 0
    %v160 = vmax.bf16 %v96, 0
    %v161 = vmax.bf16 %v97, 0
    %v162 = vmax.bf16 %v98, 0
    %v163 = vmax.bf16 %v99, 0
    %v164 = vmax.bf16 %v100, 0
    %v165 = vmax.bf16 %v101, 0
    %v166 = vmax.bf16 %v102, 0
    %v167 = vmax.bf16 %v103, 0
    %v168 = vmax.bf16 %v104, 0
    %v169 = vmax.bf16 %v105, 0
    %v170 = vmax.bf16 %v106, 0
    %v171 = vmax.bf16 %v107, 0
    %v172 = vmax.bf16 %v108, 0
    %v173 = vmax.bf16 %v109, 0
    %v174 = vmax.bf16 %v110, 0
    %v175 = vmax.bf16 %v111, 0
    %v176 = vmax.bf16 %v112, 0
    %v177 = vmax.bf16 %v113, 0
    %v178 = vmax.bf16 %v114, 0
    %v179 = vmax.bf16 %v115, 0
    %v180 = vmax.bf16 %v116, 0
    %v181 = vmax.bf16 %v117, 0
    %v182 = vmax.bf16 %v118, 0
    %v183 = vmax.bf16 %v119, 0
    %v184 = vmax.bf16 %v120, 0
    %v185 = vmax.bf16 %v121, 0
    %v186 = vmax.bf16 %v122, 0
    %v187 = vmax.bf16 %v123, 0
    %v188 = vmax.bf16 %v124, 0
    %v189 = vmax.bf16 %v125, 0
    %v190 = vmax.bf16 %v126, 0
    %v191 = vmax.bf16 %v127, 0
    %v192 = vmax.bf16 %v128, 0
    %v193 = vmax.bf16 %v129, 0
    %v194 = vmax.bf16 %v130, 0
    %v195 = vmax.bf16 %v131, 0
    %v196 = vmax.bf16 %v132, 0
    %v197 = vmax.bf16 %v133, 0
    %v198 = vmax.bf16 %v134, 0
    %v199 = vmax.bf16 %v135, 0
    %v200 = vmax.bf16 %v136, 0
    %v201 = vmax.bf16 %v137, 0
    %v202 = vmax.bf16 %v138, 0
    %v203 = vmax.bf16 %v139, 0
    %v204 = vmax.bf16 %v140, 0
    %v205 = vmax.bf16 %v141, 0
    %v206 = vmax.bf16 %v142, 0
    %v207 = vmax.bf16 %v143, 0
    %v208 = vmax.bf16 %v144, 0
    %v209 = vmax.bf16 %v145, 0
    %v210 = vmax.bf16 %v146, 0
    %v211 = vmax.bf16 %v147, 0
    %v212 = vmax.bf16 %v148, 0
    %v213 = vmax.bf16 %v149, 0
    %v214 = vmax.bf16 %v150, 0
    %v215 = vmax.bf16 %v151, 0
    %v216 = vmax.bf16 %v152, 0
    %v217 = vmax.bf16 %v153, 0
    %v218 = vmax.bf16 %v154, 0
    %v219 = vmax.bf16 %v155, 0
    %v220 = vmax.bf16 %v156, 0
    %v221 = vmax.bf16 %v157, 0
    %v222 = vadd.bf16 %v158, %v159
    %v223 = vadd.bf16 %v166, %v167
    %v224 = vadd.bf16 %v174, %v175
    %v225 = vadd.bf16 %v182, %v183
    %v226 = vadd.bf16 %v190, %v191
    %v227 = vadd.bf16 %v198, %v199
    %v228 = vadd.bf16 %v206, %v207
    %v229 = vadd.bf16 %v214, %v215
    %v230 = vadd.bf16 %v222, %v160
    %v231 = vadd.bf16 %v223, %v168
    %v232 = vadd.bf16 %v224, %v176
    %v233 = vadd.bf16 %v225, %v184
    %v234 = vadd.bf16 %v226, %v192
    %v235 = vadd.bf16 %v227, %v200
    %v236 = vadd.bf16 %v228, %v208
    %v237 = vadd.bf16 %v229, %v216
    %v238 = vadd.bf16 %v230, %v161
    %v239 = vadd.bf16 %v231, %v169
    %v240 = vadd.bf16 %v232, %v177
    %v241 = vadd.bf16 %v233, %v185
    %v242 = vadd.bf16 %v234, %v193
    %v243 = vadd.bf16 %v235, %v201
    %v244 = vadd.bf16 %v236, %v209
    %v245 = vadd.bf16 %v237, %v217
    %v246 = vadd.bf16 %v238, %v162
    %v247 = vadd.bf16 %v239, %v170
    %v248 = vadd.bf16 %v240, %v178
    %v249 = vadd.bf16 %v241, %v186
    %v250 = vadd.bf16 %v242, %v194
    %v251 = vadd.bf16 %v243, %v202
    %v252 = vadd.bf16 %v244, %v210
    %v253 = vadd.bf16 %v245, %v218
    %v254 = vunpack.c.l.bf16 %v246
    %v255 = vunpack.c.l.bf16 %v247
    %v256 = vunpack.c.l.bf16 %v248
    %v257 = vunpack.c.l.bf16 %v249
    %v258 = vunpack.c.l.bf16 %v250
    %v259 = vunpack.c.l.bf16 %v251
    %v260 = vunpack.c.l.bf16 %v252
    %v261 = vunpack.c.l.bf16 %v253
    %v262 = vadd.bf16 %v161, %v162
    %v263 = vadd.bf16 %v169, %v170
    %v264 = vadd.bf16 %v177, %v178
    %v265 = vadd.bf16 %v185, %v186
    %v266 = vadd.bf16 %v193, %v194
    %v267 = vadd.bf16 %v201, %v202
    %v268 = vadd.bf16 %v209, %v210
    %v269 = vadd.bf16 %v217, %v218
    %v270 = vadd.bf16 %v262, %v163
    %v271 = vadd.bf16 %v263, %v171
    %v272 = vadd.bf16 %v264, %v179
    %v273 = vadd.bf16 %v265, %v187
    %v274 = vadd.bf16 %v266, %v195
    %v275 = vadd.bf16 %v267, %v203
    %v276 = vadd.bf16 %v268, %v211
    %v277 = vadd.bf16 %v269, %v219
    %v278 = vadd.bf16 %v270, %v164
    %v279 = vadd.bf16 %v271, %v172
    %v280 = vadd.bf16 %v272, %v180
    %v281 = vadd.bf16 %v273, %v188
    %v282 = vadd.bf16 %v274, %v196
    %v283 = vadd.bf16 %v275, %v204
    %v284 = vadd.bf16 %v276, %v212
    %v285 = vadd.bf16 %v277, %v220
    %v286 = vadd.bf16 %v278, %v165
    %v287 = vadd.bf16 %v279, %v173
    %v288 = vadd.bf16 %v280, %v181
    %v289 = vadd.bf16 %v281, %v189
    %v290 = vadd.bf16 %v282, %v197
    %v291 = vadd.bf16 %v283, %v205
    %v292 = vadd.bf16 %v284, %v213
    %v293 = vadd.bf16 %v285, %v221
    %v294 = vunpack.c.l.bf16 %v286
    %v295 = vunpack.c.l.bf16 %v287
    %v296 = vunpack.c.l.bf16 %v288
    %v297 = vunpack.c.l.bf16 %v289
    %v298 = vunpack.c.l.bf16 %v290
    %v299 = vunpack.c.l.bf16 %v291
    %v300 = vunpack.c.l.bf16 %v292
    %v301 = vunpack.c.l.bf16 %v293
    %v310 = vrot.slane %v254, 1
    %v311 = vrot.slane %v255, 1
    %v312 = vrot.slane %v256, 1
    %v313 = vrot.slane %v257, 1
    %v314 = vrot.slane %v258, 1
    %v315 = vrot.slane %v259, 1
    %v316 = vrot.slane %v260, 1
    %v317 = vrot.slane %v261, 1
    %v326 = vadd.f32 %v254, %v310
    %v327 = vadd.f32 %v255, %v311
    %v328 = vadd.f32 %v256, %v312
    %v329 = vadd.f32 %v257, %v313
    %v330 = vadd.f32 %v258, %v314
    %v331 = vadd.f32 %v259, %v315
    %v332 = vadd.f32 %v260, %v316
    %v333 = vadd.f32 %v261, %v317
    %v334 = vrot.slane %v254, 2
    %v335 = vrot.slane %v255, 2
    %v336 = vrot.slane %v256, 2
    %v337 = vrot.slane %v257, 2
    %v338 = vrot.slane %v258, 2
    %v339 = vrot.slane %v259, 2
    %v340 = vrot.slane %v260, 2
    %v341 = vrot.slane %v261, 2
    %v350 = vadd.f32 %v326, %v334
    %v351 = vadd.f32 %v327, %v335
    %v352 = vadd.f32 %v328, %v336
    %v353 = vadd.f32 %v329, %v337
    %v354 = vadd.f32 %v330, %v338
    %v355 = vadd.f32 %v331, %v339
    %v356 = vadd.f32 %v332, %v340
    %v357 = vadd.f32 %v333, %v341
    %v358 = vrot.slane %v254, 3
    %v359 = vrot.slane %v255, 3
    %v360 = vrot.slane %v256, 3
    %v361 = vrot.slane %v257, 3
    %v362 = vrot.slane %v258, 3
    %v363 = vrot.slane %v259, 3
    %v364 = vrot.slane %v260, 3
    %v365 = vrot.slane %v261, 3
    %v374 = vadd.f32 %v350, %v358
    %v375 = vadd.f32 %v351, %v359
    %v376 = vadd.f32 %v352, %v360
    %v377 = vadd.f32 %v353, %v361
    %v378 = vadd.f32 %v354, %v362
    %v379 = vadd.f32 %v355, %v363
    %v380 = vadd.f32 %v356, %v364
    %v381 = vadd.f32 %v357, %v365
    %v382 = vrot.slane %v254, 4
    %v383 = vrot.slane %v255, 4
    %v384 = vrot.slane %v256, 4
    %v385 = vrot.slane %v257, 4
    %v386 = vrot.slane %v258, 4
    %v387 = vrot.slane %v259, 4
    %v388 = vrot.slane %v260, 4
    %v389 = vrot.slane %v261, 4
    %v398 = vadd.f32 %v374, %v382
    %v399 = vadd.f32 %v375, %v383
    %v400 = vadd.f32 %v376, %v384
    %v401 = vadd.f32 %v377, %v385
    %v402 = vadd.f32 %v378, %v386
    %v403 = vadd.f32 %v379, %v387
    %v404 = vadd.f32 %v380, %v388
    %v405 = vadd.f32 %v381, %v389
    %v406 = vpack.c.bf16 %v398, %v398
    %v407 = vpack.c.bf16 %v399, %v399
    %v408 = vpack.c.bf16 %v400, %v400
    %v409 = vpack.c.bf16 %v401, %v401
    %v410 = vpack.c.bf16 %v402, %v402
    %v411 = vpack.c.bf16 %v403, %v403
    %v412 = vpack.c.bf16 %v404, %v404
    %v413 = vpack.c.bf16 %v405, %v405
    %v422 = vrot.slane %v294, 1
    %v423 = vrot.slane %v295, 1
    %v424 = vrot.slane %v296, 1
    %v425 = vrot.slane %v297, 1
    %v426 = vrot.slane %v298, 1
    %v427 = vrot.slane %v299, 1
    %v428 = vrot.slane %v300, 1
    %v429 = vrot.slane %v301, 1
    %v438 = vadd.f32 %v294, %v422
    %v439 = vadd.f32 %v295, %v423
    %v440 = vadd.f32 %v296, %v424
    %v441 = vadd.f32 %v297, %v425
    %v442 = vadd.f32 %v298, %v426
    %v443 = vadd.f32 %v299, %v427
    %v444 = vadd.f32 %v300, %v428
    %v445 = vadd.f32 %v301, %v429
    %v446 = vrot.slane %v294, 2
    %v447 = vrot.slane %v295, 2
    %v448 = vrot.slane %v296, 2
    %v449 = vrot.slane %v297, 2
    %v450 = vrot.slane %v298, 2
    %v451 = vrot.slane %v299, 2
    %v452 = vrot.slane %v300, 2
    %v453 = vrot.slane %v301, 2
    %v462 = vadd.f32 %v438, %v446
    %v463 = vadd.f32 %v439, %v447
    %v464 = vadd.f32 %v440, %v448
    %v465 = vadd.f32 %v441, %v449
    %v466 = vadd.f32 %v442, %v450
    %v467 = vadd.f32 %v443, %v451
    %v468 = vadd.f32 %v444, %v452
    %v469 = vadd.f32 %v445, %v453
    %v470 = vrot.slane %v294, 3
    %v471 = vrot.slane %v295, 3
    %v472 = vrot.slane %v296, 3
    %v473 = vrot.slane %v297, 3
    %v474 = vrot.slane %v298, 3
    %v475 = vrot.slane %v299, 3
    %v476 = vrot.slane %v300, 3
    %v477 = vrot.slane %v301, 3
    %v486 = vadd.f32 %v462, %v470
    %v487 = vadd.f32 %v463, %v471
    %v488 = vadd.f32 %v464, %v472
    %v489 = vadd.f32 %v465, %v473
    %v490 = vadd.f32 %v466, %v474
    %v491 = vadd.f32 %v467, %v475
    %v492 = vadd.f32 %v468, %v476
    %v493 = vadd.f32 %v469, %v477
    %v494 = vrot.slane %v294, 4
    %v495 = vrot.slane %v295, 4
    %v496 = vrot.slane %v296, 4
    %v497 = vrot.slane %v297, 4
    %v498 = vrot.slane %v298, 4
    %v499 = vrot.slane %v299, 4
    %v500 = vrot.slane %v300, 4
    %v501 = vrot.slane %v301, 4
    %v510 = vadd.f32 %v486, %v494
    %v511 = vadd.f32 %v487, %v495
    %v512 = vadd.f32 %v488, %v496
    %v513 = vadd.f32 %v489, %v497
    %v514 = vadd.f32 %v490, %v498
    %v515 = vadd.f32 %v491, %v499
    %v516 = vadd.f32 %v492, %v500
    %v517 = vadd.f32 %v493, %v501
    %v518 = vpack.c.bf16 %v510, %v510
    %v519 = vpack.c.bf16 %v511, %v511
    %v520 = vpack.c.bf16 %v512, %v512
    %v521 = vpack.c.bf16 %v513, %v513
    %v522 = vpack.c.bf16 %v514, %v514
    %v523 = vpack.c.bf16 %v515, %v515
    %v524 = vpack.c.bf16 %v516, %v516
    %v525 = vpack.c.bf16 %v517, %v517
    %v534 = vunpack.c.l.b16 %v406
    %v535 = vunpack.c.l.b16 %v407
    %v536 = vunpack.c.l.b16 %v408
    %v537 = vunpack.c.l.b16 %v409
    %v538 = vunpack.c.l.b16 %v410
    %v539 = vunpack.c.l.b16 %v411
    %v540 = vunpack.c.l.b16 %v412
    %v541 = vunpack.c.l.b16 %v413
    %v542 = vrot.slane %v535, 7
    %vm543 = vcmask 1041409
    %v544 = vsel %vm543, %v542, %v534
    %v545 = vrot.slane %v536, 6
    %vm546 = vcmask 1042434
    %v547 = vsel %vm546, %v545, %v544
    %v548 = vrot.slane %v537, 5
    %vm549 = vcmask 1043459
    %v550 = vsel %vm549, %v548, %v547
    %v551 = vrot.slane %v538, 4
    %vm552 = vcmask 1044484
    %v553 = vsel %vm552, %v551, %v550
    %v554 = vrot.slane %v539, 3
    %vm555 = vcmask 1045509
    %v556 = vsel %vm555, %v554, %v553
    %v557 = vrot.slane %v540, 2
    %vm558 = vcmask 1046534
    %v559 = vsel %vm558, %v557, %v556
    %v560 = vrot.slane %v541, 1
    %vm561 = vcmask 1047559
    %v562 = vsel %vm561, %v560, %v559
    %v563 = vpack.c.b16 %v562, %v562
    %v565 = vrot.slane %v534, 3
    %v566 = vrot.slane %v535, 2
    %v567 = vsel %vm543, %v566, %v565
    %v568 = vrot.slane %v536, 1
    %v569 = vsel %vm546, %v568, %v567
    %v570 = vsel %vm549, %v537, %v569
    %v571 = vrot.slane %v538, 7
    %v572 = vsel %vm552, %v571, %v570
    %v573 = vrot.slane %v539, 6
    %v574 = vsel %vm555, %v573, %v572
    %v575 = vrot.slane %v540, 5
    %v576 = vsel %vm558, %v575, %v574
    %v577 = vrot.slane %v541, 4
    %v578 = vsel %vm561, %v577, %v576
    %v579 = vpack.c.b16 %v578, %v578
    %v589 = vunpack.c.l.b16 %v518
    %v590 = vunpack.c.l.b16 %v519
    %v591 = vunpack.c.l.b16 %v520
    %v592 = vunpack.c.l.b16 %v521
    %v593 = vunpack.c.l.b16 %v522
    %v594 = vunpack.c.l.b16 %v523
    %v595 = vunpack.c.l.b16 %v524
    %v596 = vunpack.c.l.b16 %v525
    %v597 = vrot.slane %v590, 7
    %v598 = vsel %vm543, %v597, %v589
    %v599 = vrot.slane %v591, 6
    %v600 = vsel %vm546, %v599, %v598
    %v601 = vrot.slane %v592, 5
    %v602 = vsel %vm549, %v601, %v600
    %v603 = vrot.slane %v593, 4
    %v604 = vsel %vm552, %v603, %v602
    %v605 = vrot.slane %v594, 3
    %v606 = vsel %vm555, %v605, %v604
    %v607 = vrot.slane %v595, 2
    %v608 = vsel %vm558, %v607, %v606
    %v609 = vrot.slane %v596, 1
    %v610 = vsel %vm561, %v609, %v608
    %v611 = vpack.c.b16 %v610, %v610
    %v613 = vrot.slane %v589, 3
    %v614 = vrot.slane %v590, 2
    %v615 = vsel %vm543, %v614, %v613
    %v616 = vrot.slane %v591, 1
    %v617 = vsel %vm546, %v616, %v615
    %v618 = vsel %vm549, %v592, %v617
    %v619 = vrot.slane %v593, 7
    %v620 = vsel %vm552, %v619, %v618
    %v621 = vrot.slane %v594, 6
    %v622 = vsel %vm555, %v621, %v620
    %v623 = vrot.slane %v595, 5
    %v624 = vsel %vm558, %v623, %v622
    %v625 = vrot.slane %v596, 4
    %v626 = vsel %vm561, %v625, %v624
    %v627 = vpack.c.b16 %v626, %v626
    %v629 = vld [vmem:[#allocation5] sm:$0xff]
    %v630 = vld [vmem:[#allocation5 + $0x8] sm:$0xff]
    %v631 = vld [vmem:[#allocation5 + $0x10] sm:$0xff]
    %v632 = vld [vmem:[#allocation5 + $0x18] sm:$0xff]
    %v633 = vld [vmem:[#allocation5 + $0x20] sm:$0xff]
    %v634 = vld [vmem:[#allocation5 + $0x28] sm:$0xff]
    %v635 = vld [vmem:[#allocation5 + $0x30] sm:$0xff]
    %v636 = vld [vmem:[#allocation5 + $0x38] sm:$0xff]
    %v637 = vld [vmem:[#allocation5 + $0x40] sm:$0xff]
    %v638 = vld [vmem:[#allocation5 + $0x48] sm:$0xff]
    %v639 = vld [vmem:[#allocation5 + $0x50] sm:$0xff]
    %v640 = vld [vmem:[#allocation5 + $0x58] sm:$0xff]
    %v641 = vld [vmem:[#allocation5 + $0x60] sm:$0xff]
    %v642 = vld [vmem:[#allocation5 + $0x68] sm:$0xff]
    %v643 = vld [vmem:[#allocation5 + $0x70] sm:$0xff]
    %v644 = vld [vmem:[#allocation5 + $0x78] sm:$0xff]
    %v645 = vld [vmem:[#allocation5 + $0x80] sm:$0xff]
    %v646 = vld [vmem:[#allocation5 + $0x88] sm:$0xff]
    %v647 = vld [vmem:[#allocation5 + $0x90] sm:$0xff]
    %v648 = vld [vmem:[#allocation5 + $0x98] sm:$0xff]
    %v649 = vld [vmem:[#allocation5 + $0xa0] sm:$0xff]
    %v650 = vld [vmem:[#allocation5 + $0xa8] sm:$0xff]
    %v651 = vld [vmem:[#allocation5 + $0xb0] sm:$0xff]
    %v652 = vld [vmem:[#allocation5 + $0xb8] sm:$0xff]
    %v653 = vld [vmem:[#allocation5 + $0xc0] sm:$0xff]
    %v654 = vld [vmem:[#allocation5 + $0xc8] sm:$0xff]
    %v655 = vld [vmem:[#allocation5 + $0xd0] sm:$0xff]
    %v656 = vld [vmem:[#allocation5 + $0xd8] sm:$0xff]
    %v657 = vld [vmem:[#allocation5 + $0xe0] sm:$0xff]
    %v658 = vld [vmem:[#allocation5 + $0xe8] sm:$0xff]
    %v659 = vld [vmem:[#allocation5 + $0xf0] sm:$0xff]
    %v660 = vld [vmem:[#allocation5 + $0xf8] sm:$0xff]
    %v661 = vld [vmem:[#allocation5 + $0x100] sm:$0xff]
    %v662 = vld [vmem:[#allocation5 + $0x108] sm:$0xff]
    %v663 = vld [vmem:[#allocation5 + $0x110] sm:$0xff]
    %v664 = vld [vmem:[#allocation5 + $0x118] sm:$0xff]
    %v665 = vld [vmem:[#allocation5 + $0x120] sm:$0xff]
    %v666 = vld [vmem:[#allocation5 + $0x128] sm:$0xff]
    %v667 = vld [vmem:[#allocation5 + $0x130] sm:$0xff]
    %v668 = vld [vmem:[#allocation5 + $0x138] sm:$0xff]
    %v669 = vld [vmem:[#allocation5 + $0x140] sm:$0xff]
    %v670 = vld [vmem:[#allocation5 + $0x148] sm:$0xff]
    %v671 = vld [vmem:[#allocation5 + $0x150] sm:$0xff]
    %v672 = vld [vmem:[#allocation5 + $0x158] sm:$0xff]
    %v673 = vld [vmem:[#allocation5 + $0x160] sm:$0xff]
    %v674 = vld [vmem:[#allocation5 + $0x168] sm:$0xff]
    %v675 = vld [vmem:[#allocation5 + $0x170] sm:$0xff]
    %v676 = vld [vmem:[#allocation5 + $0x178] sm:$0xff]
    %v677 = vld [vmem:[#allocation5 + $0x180] sm:$0xff]
    %v678 = vld [vmem:[#allocation5 + $0x188] sm:$0xff]
    %v679 = vld [vmem:[#allocation5 + $0x190] sm:$0xff]
    %v680 = vld [vmem:[#allocation5 + $0x198] sm:$0xff]
    %v681 = vld [vmem:[#allocation5 + $0x1a0] sm:$0xff]
    %v682 = vld [vmem:[#allocation5 + $0x1a8] sm:$0xff]
    %v683 = vld [vmem:[#allocation5 + $0x1b0] sm:$0xff]
    %v684 = vld [vmem:[#allocation5 + $0x1b8] sm:$0xff]
    %v685 = vld [vmem:[#allocation5 + $0x1c0] sm:$0xff]
    %v686 = vld [vmem:[#allocation5 + $0x1c8] sm:$0xff]
    %v687 = vld [vmem:[#allocation5 + $0x1d0] sm:$0xff]
    %v688 = vld [vmem:[#allocation5 + $0x1d8] sm:$0xff]
    %v689 = vld [vmem:[#allocation5 + $0x1e0] sm:$0xff]
    %v690 = vld [vmem:[#allocation5 + $0x1e8] sm:$0xff]
    %v691 = vld [vmem:[#allocation5 + $0x1f0] sm:$0xff]
    %v692 = vld [vmem:[#allocation5 + $0x1f8] sm:$0xff]
    %v693 = vld [vmem:[#allocation5 + $0x200] sm:$0xff]
    %v694 = vld [vmem:[#allocation5 + $0x208] sm:$0xff]
    %v695 = vld [vmem:[#allocation5 + $0x210] sm:$0xff]
    %v696 = vld [vmem:[#allocation5 + $0x218] sm:$0xff]
    %v697 = vld [vmem:[#allocation5 + $0x220] sm:$0xff]
    %v698 = vld [vmem:[#allocation5 + $0x228] sm:$0xff]
    %v699 = vld [vmem:[#allocation5 + $0x230] sm:$0xff]
    %v700 = vld [vmem:[#allocation5 + $0x238] sm:$0xff]
    %v701 = vld [vmem:[#allocation5 + $0x240] sm:$0xff]
    %v702 = vld [vmem:[#allocation5 + $0x248] sm:$0xff]
    %v703 = vld [vmem:[#allocation5 + $0x250] sm:$0xff]
    %v704 = vld [vmem:[#allocation5 + $0x258] sm:$0xff]
    %v705 = vld [vmem:[#allocation5 + $0x260] sm:$0xff]
    %v706 = vld [vmem:[#allocation5 + $0x268] sm:$0xff]
    %v707 = vld [vmem:[#allocation5 + $0x270] sm:$0xff]
    %v708 = vld [vmem:[#allocation5 + $0x278] sm:$0xff]
    %v709 = vld [vmem:[#allocation5 + $0x280] sm:$0xff]
    %v710 = vld [vmem:[#allocation5 + $0x288] sm:$0xff]
    %v711 = vld [vmem:[#allocation5 + $0x290] sm:$0xff]
    %v712 = vld [vmem:[#allocation5 + $0x298] sm:$0xff]
    %v713 = vld [vmem:[#allocation5 + $0x2a0] sm:$0xff]
    %v714 = vld [vmem:[#allocation5 + $0x2a8] sm:$0xff]
    %v715 = vld [vmem:[#allocation5 + $0x2b0] sm:$0xff]
    %v716 = vld [vmem:[#allocation5 + $0x2b8] sm:$0xff]
    %v717 = vld [vmem:[#allocation5 + $0x2c0] sm:$0xff]
    %v718 = vld [vmem:[#allocation5 + $0x2c8] sm:$0xff]
    %v719 = vld [vmem:[#allocation5 + $0x2d0] sm:$0xff]
    %v720 = vld [vmem:[#allocation5 + $0x2d8] sm:$0xff]
    %v721 = vld [vmem:[#allocation5 + $0x2e0] sm:$0xff]
    %v722 = vld [vmem:[#allocation5 + $0x2e8] sm:$0xff]
    %v723 = vld [vmem:[#allocation5 + $0x2f0] sm:$0xff]
    %v724 = vld [vmem:[#allocation5 + $0x2f8] sm:$0xff]
    %v725 = vld [vmem:[#allocation5 + $0x300] sm:$0xff]
    %v726 = vld [vmem:[#allocation5 + $0x308] sm:$0xff]
    %v727 = vld [vmem:[#allocation5 + $0x310] sm:$0xff]
    %v728 = vld [vmem:[#allocation5 + $0x318] sm:$0xff]
    %v729 = vld [vmem:[#allocation5 + $0x320] sm:$0xff]
    %v730 = vld [vmem:[#allocation5 + $0x328] sm:$0xff]
    %v731 = vld [vmem:[#allocation5 + $0x330] sm:$0xff]
    %v732 = vld [vmem:[#allocation5 + $0x338] sm:$0xff]
    %v733 = vld [vmem:[#allocation5 + $0x340] sm:$0xff]
    %v734 = vld [vmem:[#allocation5 + $0x348] sm:$0xff]
    %v735 = vld [vmem:[#allocation5 + $0x350] sm:$0xff]
    %v736 = vld [vmem:[#allocation5 + $0x358] sm:$0xff]
    %v737 = vld [vmem:[#allocation5 + $0x360] sm:$0xff]
    %v738 = vld [vmem:[#allocation5 + $0x368] sm:$0xff]
    %v739 = vld [vmem:[#allocation5 + $0x370] sm:$0xff]
    %v740 = vld [vmem:[#allocation5 + $0x378] sm:$0xff]
    %v741 = vld [vmem:[#allocation5 + $0x380] sm:$0xff]
    %v742 = vld [vmem:[#allocation5 + $0x388] sm:$0xff]
    %v743 = vld [vmem:[#allocation5 + $0x390] sm:$0xff]
    %v744 = vld [vmem:[#allocation5 + $0x398] sm:$0xff]
    %v745 = vld [vmem:[#allocation5 + $0x3a0] sm:$0xff]
    %v746 = vld [vmem:[#allocation5 + $0x3a8] sm:$0xff]
    %v747 = vld [vmem:[#allocation5 + $0x3b0] sm:$0xff]
    %v748 = vld [vmem:[#allocation5 + $0x3b8] sm:$0xff]
    %v749 = vld [vmem:[#allocation5 + $0x3c0] sm:$0xff]
    %v750 = vld [vmem:[#allocation5 + $0x3c8] sm:$0xff]
    %v751 = vld [vmem:[#allocation5 + $0x3d0] sm:$0xff]
    %v752 = vld [vmem:[#allocation5 + $0x3d8] sm:$0xff]
    %v753 = vld [vmem:[#allocation5 + $0x3e0] sm:$0xff]
    %v754 = vld [vmem:[#allocation5 + $0x3e8] sm:$0xff]
    %v755 = vld [vmem:[#allocation5 + $0x3f0] sm:$0xff]
    %v756 = vld [vmem:[#allocation5 + $0x3f8] sm:$0xff]
    %v757 = vld [vmem:[#allocation7] sm:$0xf]
    %v759 = vlaneseq
    %v760 = vshrl.u32 %v759, 7
    %v761 = vsub.s32 0, %v760
    %v762 = vrot.slane %v757, %v761
    %v763 = vlaneseq
    %v764 = vshrl.u32 %v763, 7
    %v765 = vsub.s32 1, %v764
    %v766 = vrot.slane %v757, %v765
    %v767 = vlaneseq
    %v768 = vshrl.u32 %v767, 7
    %v769 = vsub.s32 2, %v768
    %v770 = vrot.slane %v757, %v769
    %v771 = vlaneseq
    %v772 = vshrl.u32 %v771, 7
    %v773 = vsub.s32 3, %v772
    %v774 = vrot.slane %v757, %v773
    %v907 = vunpack.c.l.b16 %v629
    %v908 = vunpack.c.h.b16 %v629
    %v909 = vunpack.c.l.b16 %v630
    %v910 = vunpack.c.h.b16 %v630
    %v911 = vunpack.c.l.b16 %v631
    %v912 = vunpack.c.h.b16 %v631
    %v913 = vunpack.c.l.b16 %v632
    %v914 = vunpack.c.h.b16 %v632
    %v915 = vunpack.c.l.b16 %v633
    %v916 = vunpack.c.h.b16 %v633
    %v917 = vunpack.c.l.b16 %v634
    %v918 = vunpack.c.h.b16 %v634
    %v919 = vunpack.c.l.b16 %v635
    %v920 = vunpack.c.h.b16 %v635
    %v921 = vunpack.c.l.b16 %v636
    %v922 = vunpack.c.h.b16 %v636
    %v923 = vunpack.c.l.b16 %v637
    %v924 = vunpack.c.h.b16 %v637
    %v925 = vunpack.c.l.b16 %v638
    %v926 = vunpack.c.h.b16 %v638
    %v927 = vunpack.c.l.b16 %v639
    %v928 = vunpack.c.h.b16 %v639
    %v929 = vunpack.c.l.b16 %v640
    %v930 = vunpack.c.h.b16 %v640
    %v931 = vunpack.c.l.b16 %v641
    %v932 = vunpack.c.h.b16 %v641
    %v933 = vunpack.c.l.b16 %v642
    %v934 = vunpack.c.h.b16 %v642
    %v935 = vunpack.c.l.b16 %v643
    %v936 = vunpack.c.h.b16 %v643
    %v937 = vunpack.c.l.b16 %v644
    %v938 = vunpack.c.h.b16 %v644
    %v939 = vunpack.c.l.b16 %v645
    %v940 = vunpack.c.h.b16 %v645
    %v941 = vunpack.c.l.b16 %v646
    %v942 = vunpack.c.h.b16 %v646
    %v943 = vunpack.c.l.b16 %v647
    %v944 = vunpack.c.h.b16 %v647
    %v945 = vunpack.c.l.b16 %v648
    %v946 = vunpack.c.h.b16 %v648
    %v947 = vunpack.c.l.b16 %v649
    %v948 = vunpack.c.h.b16 %v649
    %v949 = vunpack.c.l.b16 %v650
    %v950 = vunpack.c.h.b16 %v650
    %v951 = vunpack.c.l.b16 %v651
    %v952 = vunpack.c.h.b16 %v651
    %v953 = vunpack.c.l.b16 %v652
    %v954 = vunpack.c.h.b16 %v652
    %v955 = vunpack.c.l.b16 %v653
    %v956 = vunpack.c.h.b16 %v653
    %v957 = vunpack.c.l.b16 %v654
    %v958 = vunpack.c.h.b16 %v654
    %v959 = vunpack.c.l.b16 %v655
    %v960 = vunpack.c.h.b16 %v655
    %v961 = vunpack.c.l.b16 %v656
    %v962 = vunpack.c.h.b16 %v656
    %v963 = vunpack.c.l.b16 %v657
    %v964 = vunpack.c.h.b16 %v657
    %v965 = vunpack.c.l.b16 %v658
    %v966 = vunpack.c.h.b16 %v658
    %v967 = vunpack.c.l.b16 %v659
    %v968 = vunpack.c.h.b16 %v659
    %v969 = vunpack.c.l.b16 %v660
    %v970 = vunpack.c.h.b16 %v660
    %v971 = vunpack.c.l.b16 %v661
    %v972 = vunpack.c.h.b16 %v661
    %v973 = vunpack.c.l.b16 %v662
    %v974 = vunpack.c.h.b16 %v662
    %v975 = vunpack.c.l.b16 %v663
    %v976 = vunpack.c.h.b16 %v663
    %v977 = vunpack.c.l.b16 %v664
    %v978 = vunpack.c.h.b16 %v664
    %v979 = vunpack.c.l.b16 %v665
    %v980 = vunpack.c.h.b16 %v665
    %v981 = vunpack.c.l.b16 %v666
    %v982 = vunpack.c.h.b16 %v666
    %v983 = vunpack.c.l.b16 %v667
    %v984 = vunpack.c.h.b16 %v667
    %v985 = vunpack.c.l.b16 %v668
    %v986 = vunpack.c.h.b16 %v668
    %v987 = vunpack.c.l.b16 %v669
    %v988 = vunpack.c.h.b16 %v669
    %v989 = vunpack.c.l.b16 %v670
    %v990 = vunpack.c.h.b16 %v670
    %v991 = vunpack.c.l.b16 %v671
    %v992 = vunpack.c.h.b16 %v671
    %v993 = vunpack.c.l.b16 %v672
    %v994 = vunpack.c.h.b16 %v672
    %v995 = vunpack.c.l.b16 %v673
    %v996 = vunpack.c.h.b16 %v673
    %v997 = vunpack.c.l.b16 %v674
    %v998 = vunpack.c.h.b16 %v674
    %v999 = vunpack.c.l.b16 %v675
    %v1000 = vunpack.c.h.b16 %v675
    %v1001 = vunpack.c.l.b16 %v676
    %v1002 = vunpack.c.h.b16 %v676
    %v1003 = vunpack.c.l.b16 %v677
    %v1004 = vunpack.c.h.b16 %v677
    %v1005 = vunpack.c.l.b16 %v678
    %v1006 = vunpack.c.h.b16 %v678
    %v1007 = vunpack.c.l.b16 %v679
    %v1008 = vunpack.c.h.b16 %v679
    %v1009 = vunpack.c.l.b16 %v680
    %v1010 = vunpack.c.h.b16 %v680
    %v1011 = vunpack.c.l.b16 %v681
    %v1012 = vunpack.c.h.b16 %v681
    %v1013 = vunpack.c.l.b16 %v682
    %v1014 = vunpack.c.h.b16 %v682
    %v1015 = vunpack.c.l.b16 %v683
    %v1016 = vunpack.c.h.b16 %v683
    %v1017 = vunpack.c.l.b16 %v684
    %v1018 = vunpack.c.h.b16 %v684
    %v1019 = vunpack.c.l.b16 %v685
    %v1020 = vunpack.c.h.b16 %v685
    %v1021 = vunpack.c.l.b16 %v686
    %v1022 = vunpack.c.h.b16 %v686
    %v1023 = vunpack.c.l.b16 %v687
    %v1024 = vunpack.c.h.b16 %v687
    %v1025 = vunpack.c.l.b16 %v688
    %v1026 = vunpack.c.h.b16 %v688
    %v1027 = vunpack.c.l.b16 %v689
    %v1028 = vunpack.c.h.b16 %v689
    %v1029 = vunpack.c.l.b16 %v690
    %v1030 = vunpack.c.h.b16 %v690
    %v1031 = vunpack.c.l.b16 %v691
    %v1032 = vunpack.c.h.b16 %v691
    %v1033 = vunpack.c.l.b16 %v692
    %v1034 = vunpack.c.h.b16 %v692
    %v1035 = vunpack.c.l.b16 %v693
    %v1036 = vunpack.c.h.b16 %v693
    %v1037 = vunpack.c.l.b16 %v694
    %v1038 = vunpack.c.h.b16 %v694
    %v1039 = vunpack.c.l.b16 %v695
    %v1040 = vunpack.c.h.b16 %v695
    %v1041 = vunpack.c.l.b16 %v696
    %v1042 = vunpack.c.h.b16 %v696
    %v1043 = vunpack.c.l.b16 %v697
    %v1044 = vunpack.c.h.b16 %v697
    %v1045 = vunpack.c.l.b16 %v698
    %v1046 = vunpack.c.h.b16 %v698
    %v1047 = vunpack.c.l.b16 %v699
    %v1048 = vunpack.c.h.b16 %v699
    %v1049 = vunpack.c.l.b16 %v700
    %v1050 = vunpack.c.h.b16 %v700
    %v1051 = vunpack.c.l.b16 %v701
    %v1052 = vunpack.c.h.b16 %v701
    %v1053 = vunpack.c.l.b16 %v702
    %v1054 = vunpack.c.h.b16 %v702
    %v1055 = vunpack.c.l.b16 %v703
    %v1056 = vunpack.c.h.b16 %v703
    %v1057 = vunpack.c.l.b16 %v704
    %v1058 = vunpack.c.h.b16 %v704
    %v1059 = vunpack.c.l.b16 %v705
    %v1060 = vunpack.c.h.b16 %v705
    %v1061 = vunpack.c.l.b16 %v706
    %v1062 = vunpack.c.h.b16 %v706
    %v1063 = vunpack.c.l.b16 %v707
    %v1064 = vunpack.c.h.b16 %v707
    %v1065 = vunpack.c.l.b16 %v708
    %v1066 = vunpack.c.h.b16 %v708
    %v1067 = vunpack.c.l.b16 %v709
    %v1068 = vunpack.c.h.b16 %v709
    %v1069 = vunpack.c.l.b16 %v710
    %v1070 = vunpack.c.h.b16 %v710
    %v1071 = vunpack.c.l.b16 %v711
    %v1072 = vunpack.c.h.b16 %v711
    %v1073 = vunpack.c.l.b16 %v712
    %v1074 = vunpack.c.h.b16 %v712
    %v1075 = vunpack.c.l.b16 %v713
    %v1076 = vunpack.c.h.b16 %v713
    %v1077 = vunpack.c.l.b16 %v714
    %v1078 = vunpack.c.h.b16 %v714
    %v1079 = vunpack.c.l.b16 %v715
    %v1080 = vunpack.c.h.b16 %v715
    %v1081 = vunpack.c.l.b16 %v716
    %v1082 = vunpack.c.h.b16 %v716
    %v1083 = vunpack.c.l.b16 %v717
    %v1084 = vunpack.c.h.b16 %v717
    %v1085 = vunpack.c.l.b16 %v718
    %v1086 = vunpack.c.h.b16 %v718
    %v1087 = vunpack.c.l.b16 %v719
    %v1088 = vunpack.c.h.b16 %v719
    %v1089 = vunpack.c.l.b16 %v720
    %v1090 = vunpack.c.h.b16 %v720
    %v1091 = vunpack.c.l.b16 %v721
    %v1092 = vunpack.c.h.b16 %v721
    %v1093 = vunpack.c.l.b16 %v722
    %v1094 = vunpack.c.h.b16 %v722
    %v1095 = vunpack.c.l.b16 %v723
    %v1096 = vunpack.c.h.b16 %v723
    %v1097 = vunpack.c.l.b16 %v724
    %v1098 = vunpack.c.h.b16 %v724
    %v1099 = vunpack.c.l.b16 %v725
    %v1100 = vunpack.c.h.b16 %v725
    %v1101 = vunpack.c.l.b16 %v726
    %v1102 = vunpack.c.h.b16 %v726
    %v1103 = vunpack.c.l.b16 %v727
    %v1104 = vunpack.c.h.b16 %v727
    %v1105 = vunpack.c.l.b16 %v728
    %v1106 = vunpack.c.h.b16 %v728
    %v1107 = vunpack.c.l.b16 %v729
    %v1108 = vunpack.c.h.b16 %v729
    %v1109 = vunpack.c.l.b16 %v730
    %v1110 = vunpack.c.h.b16 %v730
    %v1111 = vunpack.c.l.b16 %v731
    %v1112 = vunpack.c.h.b16 %v731
    %v1113 = vunpack.c.l.b16 %v732
    %v1114 = vunpack.c.h.b16 %v732
    %v1115 = vunpack.c.l.b16 %v733
    %v1116 = vunpack.c.h.b16 %v733
    %v1117 = vunpack.c.l.b16 %v734
    %v1118 = vunpack.c.h.b16 %v734
    %v1119 = vunpack.c.l.b16 %v735
    %v1120 = vunpack.c.h.b16 %v735
    %v1121 = vunpack.c.l.b16 %v736
    %v1122 = vunpack.c.h.b16 %v736
    %v1123 = vunpack.c.l.b16 %v737
    %v1124 = vunpack.c.h.b16 %v737
    %v1125 = vunpack.c.l.b16 %v738
    %v1126 = vunpack.c.h.b16 %v738
    %v1127 = vunpack.c.l.b16 %v739
    %v1128 = vunpack.c.h.b16 %v739
    %v1129 = vunpack.c.l.b16 %v740
    %v1130 = vunpack.c.h.b16 %v740
    %v1131 = vunpack.c.l.b16 %v741
    %v1132 = vunpack.c.h.b16 %v741
    %v1133 = vunpack.c.l.b16 %v742
    %v1134 = vunpack.c.h.b16 %v742
    %v1135 = vunpack.c.l.b16 %v743
    %v1136 = vunpack.c.h.b16 %v743
    %v1137 = vunpack.c.l.b16 %v744
    %v1138 = vunpack.c.h.b16 %v744
    %v1139 = vunpack.c.l.b16 %v745
    %v1140 = vunpack.c.h.b16 %v745
    %v1141 = vunpack.c.l.b16 %v746
    %v1142 = vunpack.c.h.b16 %v746
    %v1143 = vunpack.c.l.b16 %v747
    %v1144 = vunpack.c.h.b16 %v747
    %v1145 = vunpack.c.l.b16 %v748
    %v1146 = vunpack.c.h.b16 %v748
    %v1147 = vunpack.c.l.b16 %v749
    %v1148 = vunpack.c.h.b16 %v749
    %v1149 = vunpack.c.l.b16 %v750
    %v1150 = vunpack.c.h.b16 %v750
    %v1151 = vunpack.c.l.b16 %v751
    %v1152 = vunpack.c.h.b16 %v751
    %v1153 = vunpack.c.l.b16 %v752
    %v1154 = vunpack.c.h.b16 %v752
    %v1155 = vunpack.c.l.b16 %v753
    %v1156 = vunpack.c.h.b16 %v753
    %v1157 = vunpack.c.l.b16 %v754
    %v1158 = vunpack.c.h.b16 %v754
    %v1159 = vunpack.c.l.b16 %v755
    %v1160 = vunpack.c.h.b16 %v755
    %v1161 = vunpack.c.l.b16 %v756
    %v1162 = vunpack.c.h.b16 %v756
    %v1163 = vpack.c.b16 %v911, %v907
    %v1164 = vpack.c.b16 %v912, %v908
    %v1165 = vpack.c.b16 %v913, %v909
    %v1166 = vpack.c.b16 %v914, %v910
    %v1167 = vpack.c.b16 %v919, %v915
    %v1168 = vpack.c.b16 %v920, %v916
    %v1169 = vpack.c.b16 %v921, %v917
    %v1170 = vpack.c.b16 %v922, %v918
    %v1171 = vpack.c.b16 %v927, %v923
    %v1172 = vpack.c.b16 %v928, %v924
    %v1173 = vpack.c.b16 %v929, %v925
    %v1174 = vpack.c.b16 %v930, %v926
    %v1175 = vpack.c.b16 %v935, %v931
    %v1176 = vpack.c.b16 %v936, %v932
    %v1177 = vpack.c.b16 %v937, %v933
    %v1178 = vpack.c.b16 %v938, %v934
    %v1179 = vpack.c.b16 %v943, %v939
    %v1180 = vpack.c.b16 %v944, %v940
    %v1181 = vpack.c.b16 %v945, %v941
    %v1182 = vpack.c.b16 %v946, %v942
    %v1183 = vpack.c.b16 %v951, %v947
    %v1184 = vpack.c.b16 %v952, %v948
    %v1185 = vpack.c.b16 %v953, %v949
    %v1186 = vpack.c.b16 %v954, %v950
    %v1187 = vpack.c.b16 %v959, %v955
    %v1188 = vpack.c.b16 %v960, %v956
    %v1189 = vpack.c.b16 %v961, %v957
    %v1190 = vpack.c.b16 %v962, %v958
    %v1191 = vpack.c.b16 %v967, %v963
    %v1192 = vpack.c.b16 %v968, %v964
    %v1193 = vpack.c.b16 %v969, %v965
    %v1194 = vpack.c.b16 %v970, %v966
    %v1195 = vpack.c.b16 %v975, %v971
    %v1196 = vpack.c.b16 %v976, %v972
    %v1197 = vpack.c.b16 %v977, %v973
    %v1198 = vpack.c.b16 %v978, %v974
    %v1199 = vpack.c.b16 %v983, %v979
    %v1200 = vpack.c.b16 %v984, %v980
    %v1201 = vpack.c.b16 %v985, %v981
    %v1202 = vpack.c.b16 %v986, %v982
    %v1203 = vpack.c.b16 %v991, %v987
    %v1204 = vpack.c.b16 %v992, %v988
    %v1205 = vpack.c.b16 %v993, %v989
    %v1206 = vpack.c.b16 %v994, %v990
    %v1207 = vpack.c.b16 %v999, %v995
    %v1208 = vpack.c.b16 %v1000, %v996
    %v1209 = vpack.c.b16 %v1001, %v997
    %v1210 = vpack.c.b16 %v1002, %v998
    %v1211 = vpack.c.b16 %v1007, %v1003
    %v1212 = vpack.c.b16 %v1008, %v1004
    %v1213 = vpack.c.b16 %v1009, %v1005
    %v1214 = vpack.c.b16 %v1010, %v1006
    %v1215 = vpack.c.b16 %v1015, %v1011
    %v1216 = vpack.c.b16 %v1016, %v1012
    %v1217 = vpack.c.b16 %v1017, %v1013
    %v1218 = vpack.c.b16 %v1018, %v1014
    %v1219 = vpack.c.b16 %v1023, %v1019
    %v1220 = vpack.c.b16 %v1024, %v1020
    %v1221 = vpack.c.b16 %v1025, %v1021
    %v1222 = vpack.c.b16 %v1026, %v1022
    %v1223 = vpack.c.b16 %v1031, %v1027
    %v1224 = vpack.c.b16 %v1032, %v1028
    %v1225 = vpack.c.b16 %v1033, %v1029
    %v1226 = vpack.c.b16 %v1034, %v1030
    %v1227 = vpack.c.b16 %v1039, %v1035
    %v1228 = vpack.c.b16 %v1040, %v1036
    %v1229 = vpack.c.b16 %v1041, %v1037
    %v1230 = vpack.c.b16 %v1042, %v1038
    %v1231 = vpack.c.b16 %v1047, %v1043
    %v1232 = vpack.c.b16 %v1048, %v1044
    %v1233 = vpack.c.b16 %v1049, %v1045
    %v1234 = vpack.c.b16 %v1050, %v1046
    %v1235 = vpack.c.b16 %v1055, %v1051
    %v1236 = vpack.c.b16 %v1056, %v1052
    %v1237 = vpack.c.b16 %v1057, %v1053
    %v1238 = vpack.c.b16 %v1058, %v1054
    %v1239 = vpack.c.b16 %v1063, %v1059
    %v1240 = vpack.c.b16 %v1064, %v1060
    %v1241 = vpack.c.b16 %v1065, %v1061
    %v1242 = vpack.c.b16 %v1066, %v1062
    %v1243 = vpack.c.b16 %v1071, %v1067
    %v1244 = vpack.c.b16 %v1072, %v1068
    %v1245 = vpack.c.b16 %v1073, %v1069
    %v1246 = vpack.c.b16 %v1074, %v1070
    %v1247 = vpack.c.b16 %v1079, %v1075
    %v1248 = vpack.c.b16 %v1080, %v1076
    %v1249 = vpack.c.b16 %v1081, %v1077
    %v1250 = vpack.c.b16 %v1082, %v1078
    %v1251 = vpack.c.b16 %v1087, %v1083
    %v1252 = vpack.c.b16 %v1088, %v1084
    %v1253 = vpack.c.b16 %v1089, %v1085
    %v1254 = vpack.c.b16 %v1090, %v1086
    %v1255 = vpack.c.b16 %v1095, %v1091
    %v1256 = vpack.c.b16 %v1096, %v1092
    %v1257 = vpack.c.b16 %v1097, %v1093
    %v1258 = vpack.c.b16 %v1098, %v1094
    %v1259 = vpack.c.b16 %v1103, %v1099
    %v1260 = vpack.c.b16 %v1104, %v1100
    %v1261 = vpack.c.b16 %v1105, %v1101
    %v1262 = vpack.c.b16 %v1106, %v1102
    %v1263 = vpack.c.b16 %v1111, %v1107
    %v1264 = vpack.c.b16 %v1112, %v1108
    %v1265 = vpack.c.b16 %v1113, %v1109
    %v1266 = vpack.c.b16 %v1114, %v1110
    %v1267 = vpack.c.b16 %v1119, %v1115
    %v1268 = vpack.c.b16 %v1120, %v1116
    %v1269 = vpack.c.b16 %v1121, %v1117
    %v1270 = vpack.c.b16 %v1122, %v1118
    %v1271 = vpack.c.b16 %v1127, %v1123
    %v1272 = vpack.c.b16 %v1128, %v1124
    %v1273 = vpack.c.b16 %v1129, %v1125
    %v1274 = vpack.c.b16 %v1130, %v1126
    %v1275 = vpack.c.b16 %v1135, %v1131
    %v1276 = vpack.c.b16 %v1136, %v1132
    %v1277 = vpack.c.b16 %v1137, %v1133
    %v1278 = vpack.c.b16 %v1138, %v1134
    %v1279 = vpack.c.b16 %v1143, %v1139
    %v1280 = vpack.c.b16 %v1144, %v1140
    %v1281 = vpack.c.b16 %v1145, %v1141
    %v1282 = vpack.c.b16 %v1146, %v1142
    %v1283 = vpack.c.b16 %v1151, %v1147
    %v1284 = vpack.c.b16 %v1152, %v1148
    %v1285 = vpack.c.b16 %v1153, %v1149
    %v1286 = vpack.c.b16 %v1154, %v1150
    %v1287 = vpack.c.b16 %v1159, %v1155
    %v1288 = vpack.c.b16 %v1160, %v1156
    %v1289 = vpack.c.b16 %v1161, %v1157
    %v1290 = vpack.c.b16 %v1162, %v1158
    %1419 = vmatprep.subr.bf16.mxu0 %v1192
    %1420 = vmatpush1.bf16.msra.mxu0 %v1191
    %1421 = vmatprep.subr.bf16.mxu0 %v1188
    %1422 = vmatpush1.bf16.msra.mxu0 %v1187
    %1423 = vmatprep.subr.bf16.mxu0 %v1184
    %1424 = vmatpush1.bf16.msra.mxu0 %v1183
    %1425 = vmatprep.subr.bf16.mxu0 %v1180
    %1426 = vmatpush1.bf16.msra.mxu0 %v1179
    %1427 = vmatprep.subr.bf16.mxu0 %v1176
    %1428 = vmatpush1.bf16.msra.mxu0 %v1175
    %1429 = vmatprep.subr.bf16.mxu0 %v1172
    %1430 = vmatpush1.bf16.msra.mxu0 %v1171
    %1431 = vmatprep.subr.bf16.mxu0 %v1168
    %1432 = vmatpush1.bf16.msra.mxu0 %v1167
    %1433 = vmatprep.subr.bf16.mxu0 %v1164
    %1434 = vmatpush1.bf16.msra.mxu0 %v1163
    %1435 = vmatprep.subr.bf16.mxu0 %v1224
    %1436 = vmatpush2.bf16.msra.mxu0 %v1223
    %1437 = vmatprep.subr.bf16.mxu0 %v1220
    %1438 = vmatpush2.bf16.msra.mxu0 %v1219
    %1439 = vmatprep.subr.bf16.mxu0 %v1216
    %1440 = vmatpush2.bf16.msra.mxu0 %v1215
    %1441 = vmatprep.subr.bf16.mxu0 %v1212
    %1442 = vmatpush2.bf16.msra.mxu0 %v1211
    %1443 = vmatprep.subr.bf16.mxu0 %v1208
    %1444 = vmatpush2.bf16.msra.mxu0 %v1207
    %1445 = vmatprep.subr.bf16.mxu0 %v1204
    %1446 = vmatpush2.bf16.msra.mxu0 %v1203
    %1447 = vmatprep.subr.bf16.mxu0 %v1200
    %1448 = vmatpush2.bf16.msra.mxu0 %v1199
    %1449 = vmatprep.subr.bf16.mxu0 %v1196
    %1450 = vmatpush2.bf16.msra.mxu0 %v1195
    %1451 = vmatprep.mubr.bf16.mxu0 %v579
    %1452 = vmatmul.mubr.bf16.gmra.mxu0 %v563
    %v1453 = vpop.f32.mrf.mxu0
    %v1454 = vadd.f32 %v762, %v1453
    %v1455 = vpop.f32.mrf.mxu0
    %v1456 = vadd.f32 %v766, %v1455
    %v1457 = vpop.f32.mrf.mxu0
    %v1458 = vpop.f32.mrf.mxu0
    %1459 = vdwg.mxu0
    %1460 = vmatprep.subr.bf16.mxu0 %v1256
    %1461 = vmatpush1.bf16.msra.mxu0 %v1255
    %1462 = vmatprep.subr.bf16.mxu0 %v1252
    %1463 = vmatpush1.bf16.msra.mxu0 %v1251
    %1464 = vmatprep.subr.bf16.mxu0 %v1248
    %1465 = vmatpush1.bf16.msra.mxu0 %v1247
    %1466 = vmatprep.subr.bf16.mxu0 %v1244
    %1467 = vmatpush1.bf16.msra.mxu0 %v1243
    %1468 = vmatprep.subr.bf16.mxu0 %v1240
    %1469 = vmatpush1.bf16.msra.mxu0 %v1239
    %1470 = vmatprep.subr.bf16.mxu0 %v1236
    %1471 = vmatpush1.bf16.msra.mxu0 %v1235
    %1472 = vmatprep.subr.bf16.mxu0 %v1232
    %1473 = vmatpush1.bf16.msra.mxu0 %v1231
    %1474 = vmatprep.subr.bf16.mxu0 %v1228
    %1475 = vmatpush1.bf16.msra.mxu0 %v1227
    %1476 = vmatprep.subr.bf16.mxu0 %v1288
    %1477 = vmatpush2.bf16.msra.mxu0 %v1287
    %1478 = vmatprep.subr.bf16.mxu0 %v1284
    %1479 = vmatpush2.bf16.msra.mxu0 %v1283
    %1480 = vmatprep.subr.bf16.mxu0 %v1280
    %1481 = vmatpush2.bf16.msra.mxu0 %v1279
    %1482 = vmatprep.subr.bf16.mxu0 %v1276
    %1483 = vmatpush2.bf16.msra.mxu0 %v1275
    %1484 = vmatprep.subr.bf16.mxu0 %v1272
    %1485 = vmatpush2.bf16.msra.mxu0 %v1271
    %1486 = vmatprep.subr.bf16.mxu0 %v1268
    %1487 = vmatpush2.bf16.msra.mxu0 %v1267
    %1488 = vmatprep.subr.bf16.mxu0 %v1264
    %1489 = vmatpush2.bf16.msra.mxu0 %v1263
    %1490 = vmatprep.subr.bf16.mxu0 %v1260
    %1491 = vmatpush2.bf16.msra.mxu0 %v1259
    %1492 = vmatprep.mubr.bf16.mxu0 %v627
    %1493 = vmatmul.mubr.bf16.gmra.mxu0 %v611
    %v1494 = vpop.f32.mrf.mxu0
    %v1495 = vadd.f32 %v1454, %v1494
    %v1496 = vpop.f32.mrf.mxu0
    %v1497 = vadd.f32 %v1456, %v1496
    %v1498 = vpop.f32.mrf.mxu0
    %v1499 = vpop.f32.mrf.mxu0
    %1500 = vdwg.mxu0
    %1501 = vmatprep.subr.bf16.mxu0 %v1194
    %1502 = vmatpush1.bf16.msra.mxu0 %v1193
    %1503 = vmatprep.subr.bf16.mxu0 %v1190
    %1504 = vmatpush1.bf16.msra.mxu0 %v1189
    %1505 = vmatprep.subr.bf16.mxu0 %v1186
    %1506 = vmatpush1.bf16.msra.mxu0 %v1185
    %1507 = vmatprep.subr.bf16.mxu0 %v1182
    %1508 = vmatpush1.bf16.msra.mxu0 %v1181
    %1509 = vmatprep.subr.bf16.mxu0 %v1178
    %1510 = vmatpush1.bf16.msra.mxu0 %v1177
    %1511 = vmatprep.subr.bf16.mxu0 %v1174
    %1512 = vmatpush1.bf16.msra.mxu0 %v1173
    %1513 = vmatprep.subr.bf16.mxu0 %v1170
    %1514 = vmatpush1.bf16.msra.mxu0 %v1169
    %1515 = vmatprep.subr.bf16.mxu0 %v1166
    %1516 = vmatpush1.bf16.msra.mxu0 %v1165
    %1517 = vmatprep.subr.bf16.mxu0 %v1226
    %1518 = vmatpush2.bf16.msra.mxu0 %v1225
    %1519 = vmatprep.subr.bf16.mxu0 %v1222
    %1520 = vmatpush2.bf16.msra.mxu0 %v1221
    %1521 = vmatprep.subr.bf16.mxu0 %v1218
    %1522 = vmatpush2.bf16.msra.mxu0 %v1217
    %1523 = vmatprep.subr.bf16.mxu0 %v1214
    %1524 = vmatpush2.bf16.msra.mxu0 %v1213
    %1525 = vmatprep.subr.bf16.mxu0 %v1210
    %1526 = vmatpush2.bf16.msra.mxu0 %v1209
    %1527 = vmatprep.subr.bf16.mxu0 %v1206
    %1528 = vmatpush2.bf16.msra.mxu0 %v1205
    %1529 = vmatprep.subr.bf16.mxu0 %v1202
    %1530 = vmatpush2.bf16.msra.mxu0 %v1201
    %1531 = vmatprep.subr.bf16.mxu0 %v1198
    %1532 = vmatpush2.bf16.msra.mxu0 %v1197
    %1533 = vmatprep.mubr.bf16.mxu0 %v579
    %1534 = vmatmul.mubr.bf16.gmra.mxu0 %v563
    %v1535 = vpop.f32.mrf.mxu0
    %v1536 = vadd.f32 %v770, %v1535
    %v1537 = vpop.f32.mrf.mxu0
    %v1538 = vadd.f32 %v774, %v1537
    %v1539 = vpop.f32.mrf.mxu0
    %v1540 = vpop.f32.mrf.mxu0
    %1541 = vdwg.mxu0
    %1542 = vmatprep.subr.bf16.mxu0 %v1258
    %1543 = vmatpush1.bf16.msra.mxu0 %v1257
    %1544 = vmatprep.subr.bf16.mxu0 %v1254
    %1545 = vmatpush1.bf16.msra.mxu0 %v1253
    %1546 = vmatprep.subr.bf16.mxu0 %v1250
    %1547 = vmatpush1.bf16.msra.mxu0 %v1249
    %1548 = vmatprep.subr.bf16.mxu0 %v1246
    %1549 = vmatpush1.bf16.msra.mxu0 %v1245
    %1550 = vmatprep.subr.bf16.mxu0 %v1242
    %1551 = vmatpush1.bf16.msra.mxu0 %v1241
    %1552 = vmatprep.subr.bf16.mxu0 %v1238
    %1553 = vmatpush1.bf16.msra.mxu0 %v1237
    %1554 = vmatprep.subr.bf16.mxu0 %v1234
    %1555 = vmatpush1.bf16.msra.mxu0 %v1233
    %1556 = vmatprep.subr.bf16.mxu0 %v1230
    %1557 = vmatpush1.bf16.msra.mxu0 %v1229
    %1558 = vmatprep.subr.bf16.mxu0 %v1290
    %1559 = vmatpush2.bf16.msra.mxu0 %v1289
    %1560 = vmatprep.subr.bf16.mxu0 %v1286
    %1561 = vmatpush2.bf16.msra.mxu0 %v1285
    %1562 = vmatprep.subr.bf16.mxu0 %v1282
    %1563 = vmatpush2.bf16.msra.mxu0 %v1281
    %1564 = vmatprep.subr.bf16.mxu0 %v1278
    %1565 = vmatpush2.bf16.msra.mxu0 %v1277
    %1566 = vmatprep.subr.bf16.mxu0 %v1274
    %1567 = vmatpush2.bf16.msra.mxu0 %v1273
    %1568 = vmatprep.subr.bf16.mxu0 %v1270
    %1569 = vmatpush2.bf16.msra.mxu0 %v1269
    %1570 = vmatprep.subr.bf16.mxu0 %v1266
    %1571 = vmatpush2.bf16.msra.mxu0 %v1265
    %1572 = vmatprep.subr.bf16.mxu0 %v1262
    %1573 = vmatpush2.bf16.msra.mxu0 %v1261
    %1574 = vmatprep.mubr.bf16.mxu0 %v627
    %1575 = vmatmul.mubr.bf16.gmra.mxu0 %v611
    %v1576 = vpop.f32.mrf.mxu0
    %v1577 = vadd.f32 %v1536, %v1576
    %v1578 = vpop.f32.mrf.mxu0
    %v1579 = vadd.f32 %v1538, %v1578
    %v1580 = vpop.f32.mrf.mxu0
    %v1581 = vpop.f32.mrf.mxu0
    %1582 = vdwg.mxu0
    %v1583 = vmax.f32 %v1495, 0.0
    %v1584 = vmax.f32 %v1497, 0.0
    %v1585 = vmax.f32 %v1577, 0.0
    %v1586 = vmax.f32 %v1579, 0.0
    %v1587 = vpack.c.bf16 %v1583, %v1583
    %v1588 = vpack.c.bf16 %v1584, %v1584
    %v1589 = vpack.c.bf16 %v1585, %v1585
    %v1590 = vpack.c.bf16 %v1586, %v1586
    %v1591 = vld [vmem:[#allocation8] sm:$0xff]
    %v1592 = vld [vmem:[#allocation8 + $0x8] sm:$0xff]
    %v1593 = vld [vmem:[#allocation8 + $0x10] sm:$0xff]
    %v1594 = vld [vmem:[#allocation8 + $0x18] sm:$0xff]
    %v1595 = vld [vmem:[#allocation8 + $0x20] sm:$0xff]
    %v1596 = vld [vmem:[#allocation8 + $0x28] sm:$0xff]
    %v1597 = vld [vmem:[#allocation8 + $0x30] sm:$0xff]
    %v1598 = vld [vmem:[#allocation8 + $0x38] sm:$0xff]
    %v1599 = vld [vmem:[#allocation8 + $0x40] sm:$0xff]
    %v1600 = vld [vmem:[#allocation8 + $0x48] sm:$0xff]
    %v1601 = vld [vmem:[#allocation8 + $0x50] sm:$0xff]
    %v1602 = vld [vmem:[#allocation8 + $0x58] sm:$0xff]
    %v1603 = vld [vmem:[#allocation8 + $0x60] sm:$0xff]
    %v1604 = vld [vmem:[#allocation8 + $0x68] sm:$0xff]
    %v1605 = vld [vmem:[#allocation8 + $0x70] sm:$0xff]
    %v1606 = vld [vmem:[#allocation8 + $0x78] sm:$0xff]
    %v1607 = vld [vmem:[#allocation8 + $0x80] sm:$0xff]
    %v1608 = vld [vmem:[#allocation8 + $0x88] sm:$0xff]
    %v1609 = vld [vmem:[#allocation8 + $0x90] sm:$0xff]
    %v1610 = vld [vmem:[#allocation8 + $0x98] sm:$0xff]
    %v1611 = vld [vmem:[#allocation8 + $0xa0] sm:$0xff]
    %v1612 = vld [vmem:[#allocation8 + $0xa8] sm:$0xff]
    %v1613 = vld [vmem:[#allocation8 + $0xb0] sm:$0xff]
    %v1614 = vld [vmem:[#allocation8 + $0xb8] sm:$0xff]
    %v1615 = vld [vmem:[#allocation8 + $0xc0] sm:$0xff]
    %v1616 = vld [vmem:[#allocation8 + $0xc8] sm:$0xff]
    %v1617 = vld [vmem:[#allocation8 + $0xd0] sm:$0xff]
    %v1618 = vld [vmem:[#allocation8 + $0xd8] sm:$0xff]
    %v1619 = vld [vmem:[#allocation8 + $0xe0] sm:$0xff]
    %v1620 = vld [vmem:[#allocation8 + $0xe8] sm:$0xff]
    %v1621 = vld [vmem:[#allocation8 + $0xf0] sm:$0xff]
    %v1622 = vld [vmem:[#allocation8 + $0xf8] sm:$0xff]
    %v1623 = vld [vmem:[#allocation8 + $0x100] sm:$0xff]
    %v1624 = vld [vmem:[#allocation8 + $0x108] sm:$0xff]
    %v1625 = vld [vmem:[#allocation8 + $0x110] sm:$0xff]
    %v1626 = vld [vmem:[#allocation8 + $0x118] sm:$0xff]
    %v1627 = vld [vmem:[#allocation8 + $0x120] sm:$0xff]
    %v1628 = vld [vmem:[#allocation8 + $0x128] sm:$0xff]
    %v1629 = vld [vmem:[#allocation8 + $0x130] sm:$0xff]
    %v1630 = vld [vmem:[#allocation8 + $0x138] sm:$0xff]
    %v1631 = vld [vmem:[#allocation8 + $0x140] sm:$0xff]
    %v1632 = vld [vmem:[#allocation8 + $0x148] sm:$0xff]
    %v1633 = vld [vmem:[#allocation8 + $0x150] sm:$0xff]
    %v1634 = vld [vmem:[#allocation8 + $0x158] sm:$0xff]
    %v1635 = vld [vmem:[#allocation8 + $0x160] sm:$0xff]
    %v1636 = vld [vmem:[#allocation8 + $0x168] sm:$0xff]
    %v1637 = vld [vmem:[#allocation8 + $0x170] sm:$0xff]
    %v1638 = vld [vmem:[#allocation8 + $0x178] sm:$0xff]
    %v1639 = vld [vmem:[#allocation8 + $0x180] sm:$0xff]
    %v1640 = vld [vmem:[#allocation8 + $0x188] sm:$0xff]
    %v1641 = vld [vmem:[#allocation8 + $0x190] sm:$0xff]
    %v1642 = vld [vmem:[#allocation8 + $0x198] sm:$0xff]
    %v1643 = vld [vmem:[#allocation8 + $0x1a0] sm:$0xff]
    %v1644 = vld [vmem:[#allocation8 + $0x1a8] sm:$0xff]
    %v1645 = vld [vmem:[#allocation8 + $0x1b0] sm:$0xff]
    %v1646 = vld [vmem:[#allocation8 + $0x1b8] sm:$0xff]
    %v1647 = vld [vmem:[#allocation8 + $0x1c0] sm:$0xff]
    %v1648 = vld [vmem:[#allocation8 + $0x1c8] sm:$0xff]
    %v1649 = vld [vmem:[#allocation8 + $0x1d0] sm:$0xff]
    %v1650 = vld [vmem:[#allocation8 + $0x1d8] sm:$0xff]
    %v1651 = vld [vmem:[#allocation8 + $0x1e0] sm:$0xff]
    %v1652 = vld [vmem:[#allocation8 + $0x1e8] sm:$0xff]
    %v1653 = vld [vmem:[#allocation8 + $0x1f0] sm:$0xff]
    %v1654 = vld [vmem:[#allocation8 + $0x1f8] sm:$0xff]
    %v1655 = vld [vmem:[#allocation8 + $0x200] sm:$0xff]
    %v1656 = vld [vmem:[#allocation8 + $0x208] sm:$0xff]
    %v1657 = vld [vmem:[#allocation8 + $0x210] sm:$0xff]
    %v1658 = vld [vmem:[#allocation8 + $0x218] sm:$0xff]
    %v1659 = vld [vmem:[#allocation8 + $0x220] sm:$0xff]
    %v1660 = vld [vmem:[#allocation8 + $0x228] sm:$0xff]
    %v1661 = vld [vmem:[#allocation8 + $0x230] sm:$0xff]
    %v1662 = vld [vmem:[#allocation8 + $0x238] sm:$0xff]
    %v1663 = vld [vmem:[#allocation8 + $0x240] sm:$0xff]
    %v1664 = vld [vmem:[#allocation8 + $0x248] sm:$0xff]
    %v1665 = vld [vmem:[#allocation8 + $0x250] sm:$0xff]
    %v1666 = vld [vmem:[#allocation8 + $0x258] sm:$0xff]
    %v1667 = vld [vmem:[#allocation8 + $0x260] sm:$0xff]
    %v1668 = vld [vmem:[#allocation8 + $0x268] sm:$0xff]
    %v1669 = vld [vmem:[#allocation8 + $0x270] sm:$0xff]
    %v1670 = vld [vmem:[#allocation8 + $0x278] sm:$0xff]
    %v1671 = vld [vmem:[#allocation8 + $0x280] sm:$0xff]
    %v1672 = vld [vmem:[#allocation8 + $0x288] sm:$0xff]
    %v1673 = vld [vmem:[#allocation8 + $0x290] sm:$0xff]
    %v1674 = vld [vmem:[#allocation8 + $0x298] sm:$0xff]
    %v1675 = vld [vmem:[#allocation8 + $0x2a0] sm:$0xff]
    %v1676 = vld [vmem:[#allocation8 + $0x2a8] sm:$0xff]
    %v1677 = vld [vmem:[#allocation8 + $0x2b0] sm:$0xff]
    %v1678 = vld [vmem:[#allocation8 + $0x2b8] sm:$0xff]
    %v1679 = vld [vmem:[#allocation8 + $0x2c0] sm:$0xff]
    %v1680 = vld [vmem:[#allocation8 + $0x2c8] sm:$0xff]
    %v1681 = vld [vmem:[#allocation8 + $0x2d0] sm:$0xff]
    %v1682 = vld [vmem:[#allocation8 + $0x2d8] sm:$0xff]
    %v1683 = vld [vmem:[#allocation8 + $0x2e0] sm:$0xff]
    %v1684 = vld [vmem:[#allocation8 + $0x2e8] sm:$0xff]
    %v1685 = vld [vmem:[#allocation8 + $0x2f0] sm:$0xff]
    %v1686 = vld [vmem:[#allocation8 + $0x2f8] sm:$0xff]
    %v1687 = vld [vmem:[#allocation8 + $0x300] sm:$0xff]
    %v1688 = vld [vmem:[#allocation8 + $0x308] sm:$0xff]
    %v1689 = vld [vmem:[#allocation8 + $0x310] sm:$0xff]
    %v1690 = vld [vmem:[#allocation8 + $0x318] sm:$0xff]
    %v1691 = vld [vmem:[#allocation8 + $0x320] sm:$0xff]
    %v1692 = vld [vmem:[#allocation8 + $0x328] sm:$0xff]
    %v1693 = vld [vmem:[#allocation8 + $0x330] sm:$0xff]
    %v1694 = vld [vmem:[#allocation8 + $0x338] sm:$0xff]
    %v1695 = vld [vmem:[#allocation8 + $0x340] sm:$0xff]
    %v1696 = vld [vmem:[#allocation8 + $0x348] sm:$0xff]
    %v1697 = vld [vmem:[#allocation8 + $0x350] sm:$0xff]
    %v1698 = vld [vmem:[#allocation8 + $0x358] sm:$0xff]
    %v1699 = vld [vmem:[#allocation8 + $0x360] sm:$0xff]
    %v1700 = vld [vmem:[#allocation8 + $0x368] sm:$0xff]
    %v1701 = vld [vmem:[#allocation8 + $0x370] sm:$0xff]
    %v1702 = vld [vmem:[#allocation8 + $0x378] sm:$0xff]
    %v1703 = vld [vmem:[#allocation8 + $0x380] sm:$0xff]
    %v1704 = vld [vmem:[#allocation8 + $0x388] sm:$0xff]
    %v1705 = vld [vmem:[#allocation8 + $0x390] sm:$0xff]
    %v1706 = vld [vmem:[#allocation8 + $0x398] sm:$0xff]
    %v1707 = vld [vmem:[#allocation8 + $0x3a0] sm:$0xff]
    %v1708 = vld [vmem:[#allocation8 + $0x3a8] sm:$0xff]
    %v1709 = vld [vmem:[#allocation8 + $0x3b0] sm:$0xff]
    %v1710 = vld [vmem:[#allocation8 + $0x3b8] sm:$0xff]
    %v1711 = vld [vmem:[#allocation8 + $0x3c0] sm:$0xff]
    %v1712 = vld [vmem:[#allocation8 + $0x3c8] sm:$0xff]
    %v1713 = vld [vmem:[#allocation8 + $0x3d0] sm:$0xff]
    %v1714 = vld [vmem:[#allocation8 + $0x3d8] sm:$0xff]
    %v1715 = vld [vmem:[#allocation8 + $0x3e0] sm:$0xff]
    %v1716 = vld [vmem:[#allocation8 + $0x3e8] sm:$0xff]
    %v1717 = vld [vmem:[#allocation8 + $0x3f0] sm:$0xff]
    %v1718 = vld [vmem:[#allocation8 + $0x3f8] sm:$0xff]
    %v1719 = vld [vmem:[#allocation8 + $0x400] sm:$0xff]
    %v1720 = vld [vmem:[#allocation8 + $0x408] sm:$0xff]
    %v1721 = vld [vmem:[#allocation8 + $0x410] sm:$0xff]
    %v1722 = vld [vmem:[#allocation8 + $0x418] sm:$0xff]
    %v1723 = vld [vmem:[#allocation8 + $0x420] sm:$0xff]
    %v1724 = vld [vmem:[#allocation8 + $0x428] sm:$0xff]
    %v1725 = vld [vmem:[#allocation8 + $0x430] sm:$0xff]
    %v1726 = vld [vmem:[#allocation8 + $0x438] sm:$0xff]
    %v1727 = vld [vmem:[#allocation8 + $0x440] sm:$0xff]
    %v1728 = vld [vmem:[#allocation8 + $0x448] sm:$0xff]
    %v1729 = vld [vmem:[#allocation8 + $0x450] sm:$0xff]
    %v1730 = vld [vmem:[#allocation8 + $0x458] sm:$0xff]
    %v1731 = vld [vmem:[#allocation8 + $0x460] sm:$0xff]
    %v1732 = vld [vmem:[#allocation8 + $0x468] sm:$0xff]
    %v1733 = vld [vmem:[#allocation8 + $0x470] sm:$0xff]
    %v1734 = vld [vmem:[#allocation8 + $0x478] sm:$0xff]
    %v1735 = vld [vmem:[#allocation8 + $0x480] sm:$0xff]
    %v1736 = vld [vmem:[#allocation8 + $0x488] sm:$0xff]
    %v1737 = vld [vmem:[#allocation8 + $0x490] sm:$0xff]
    %v1738 = vld [vmem:[#allocation8 + $0x498] sm:$0xff]
    %v1739 = vld [vmem:[#allocation8 + $0x4a0] sm:$0xff]
    %v1740 = vld [vmem:[#allocation8 + $0x4a8] sm:$0xff]
    %v1741 = vld [vmem:[#allocation8 + $0x4b0] sm:$0xff]
    %v1742 = vld [vmem:[#allocation8 + $0x4b8] sm:$0xff]
    %v1743 = vld [vmem:[#allocation8 + $0x4c0] sm:$0xff]
    %v1744 = vld [vmem:[#allocation8 + $0x4c8] sm:$0xff]
    %v1745 = vld [vmem:[#allocation8 + $0x4d0] sm:$0xff]
    %v1746 = vld [vmem:[#allocation8 + $0x4d8] sm:$0xff]
    %v1747 = vld [vmem:[#allocation8 + $0x4e0] sm:$0xff]
    %v1748 = vld [vmem:[#allocation8 + $0x4e8] sm:$0xff]
    %v1749 = vld [vmem:[#allocation8 + $0x4f0] sm:$0xff]
    %v1750 = vld [vmem:[#allocation8 + $0x4f8] sm:$0xff]
    %v1751 = vld [vmem:[#allocation8 + $0x500] sm:$0xff]
    %v1752 = vld [vmem:[#allocation8 + $0x508] sm:$0xff]
    %v1753 = vld [vmem:[#allocation8 + $0x510] sm:$0xff]
    %v1754 = vld [vmem:[#allocation8 + $0x518] sm:$0xff]
    %v1755 = vld [vmem:[#allocation8 + $0x520] sm:$0xff]
    %v1756 = vld [vmem:[#allocation8 + $0x528] sm:$0xff]
    %v1757 = vld [vmem:[#allocation8 + $0x530] sm:$0xff]
    %v1758 = vld [vmem:[#allocation8 + $0x538] sm:$0xff]
    %v1759 = vld [vmem:[#allocation8 + $0x540] sm:$0xff]
    %v1760 = vld [vmem:[#allocation8 + $0x548] sm:$0xff]
    %v1761 = vld [vmem:[#allocation8 + $0x550] sm:$0xff]
    %v1762 = vld [vmem:[#allocation8 + $0x558] sm:$0xff]
    %v1763 = vld [vmem:[#allocation8 + $0x560] sm:$0xff]
    %v1764 = vld [vmem:[#allocation8 + $0x568] sm:$0xff]
    %v1765 = vld [vmem:[#allocation8 + $0x570] sm:$0xff]
    %v1766 = vld [vmem:[#allocation8 + $0x578] sm:$0xff]
    %v1767 = vld [vmem:[#allocation8 + $0x580] sm:$0xff]
    %v1768 = vld [vmem:[#allocation8 + $0x588] sm:$0xff]
    %v1769 = vld [vmem:[#allocation8 + $0x590] sm:$0xff]
    %v1770 = vld [vmem:[#allocation8 + $0x598] sm:$0xff]
    %v1771 = vld [vmem:[#allocation8 + $0x5a0] sm:$0xff]
    %v1772 = vld [vmem:[#allocation8 + $0x5a8] sm:$0xff]
    %v1773 = vld [vmem:[#allocation8 + $0x5b0] sm:$0xff]
    %v1774 = vld [vmem:[#allocation8 + $0x5b8] sm:$0xff]
    %v1775 = vld [vmem:[#allocation8 + $0x5c0] sm:$0xff]
    %v1776 = vld [vmem:[#allocation8 + $0x5c8] sm:$0xff]
    %v1777 = vld [vmem:[#allocation8 + $0x5d0] sm:$0xff]
    %v1778 = vld [vmem:[#allocation8 + $0x5d8] sm:$0xff]
    %v1779 = vld [vmem:[#allocation8 + $0x5e0] sm:$0xff]
    %v1780 = vld [vmem:[#allocation8 + $0x5e8] sm:$0xff]
    %v1781 = vld [vmem:[#allocation8 + $0x5f0] sm:$0xff]
    %v1782 = vld [vmem:[#allocation8 + $0x5f8] sm:$0xff]
    %v1783 = vld [vmem:[%s4] sm:$0x3f]
    %v1785 = vlaneseq
    %v1786 = vshrl.u32 %v1785, 7
    %v1787 = vsub.s32 0, %v1786
    %v1788 = vrot.slane %v1783, %v1787
    %v1789 = vlaneseq
    %v1790 = vshrl.u32 %v1789, 7
    %v1791 = vsub.s32 1, %v1790
    %v1792 = vrot.slane %v1783, %v1791
    %v1793 = vlaneseq
    %v1794 = vshrl.u32 %v1793, 7
    %v1795 = vsub.s32 2, %v1794
    %v1796 = vrot.slane %v1783, %v1795
    %v1797 = vlaneseq
    %v1798 = vshrl.u32 %v1797, 7
    %v1799 = vsub.s32 3, %v1798
    %v1800 = vrot.slane %v1783, %v1799
    %v1801 = vlaneseq
    %v1802 = vshrl.u32 %v1801, 7
    %v1803 = vsub.s32 4, %v1802
    %v1804 = vrot.slane %v1783, %v1803
    %v1805 = vlaneseq
    %v1806 = vshrl.u32 %v1805, 7
    %v1807 = vsub.s32 5, %v1806
    %v1808 = vrot.slane %v1783, %v1807
    %v2007 = vunpack.c.l.b16 %v1591
    %v2008 = vunpack.c.h.b16 %v1591
    %v2009 = vunpack.c.l.b16 %v1592
    %v2010 = vunpack.c.h.b16 %v1592
    %v2011 = vunpack.c.l.b16 %v1593
    %v2012 = vunpack.c.h.b16 %v1593
    %v2013 = vunpack.c.l.b16 %v1594
    %v2014 = vunpack.c.h.b16 %v1594
    %v2015 = vunpack.c.l.b16 %v1595
    %v2016 = vunpack.c.h.b16 %v1595
    %v2017 = vunpack.c.l.b16 %v1596
    %v2018 = vunpack.c.h.b16 %v1596
    %v2019 = vunpack.c.l.b16 %v1597
    %v2020 = vunpack.c.h.b16 %v1597
    %v2021 = vunpack.c.l.b16 %v1598
    %v2022 = vunpack.c.h.b16 %v1598
    %v2023 = vunpack.c.l.b16 %v1599
    %v2024 = vunpack.c.h.b16 %v1599
    %v2025 = vunpack.c.l.b16 %v1600
    %v2026 = vunpack.c.h.b16 %v1600
    %v2027 = vunpack.c.l.b16 %v1601
    %v2028 = vunpack.c.h.b16 %v1601
    %v2029 = vunpack.c.l.b16 %v1602
    %v2030 = vunpack.c.h.b16 %v1602
    %v2031 = vunpack.c.l.b16 %v1603
    %v2032 = vunpack.c.h.b16 %v1603
    %v2033 = vunpack.c.l.b16 %v1604
    %v2034 = vunpack.c.h.b16 %v1604
    %v2035 = vunpack.c.l.b16 %v1605
    %v2036 = vunpack.c.h.b16 %v1605
    %v2037 = vunpack.c.l.b16 %v1606
    %v2038 = vunpack.c.h.b16 %v1606
    %v2039 = vunpack.c.l.b16 %v1607
    %v2040 = vunpack.c.h.b16 %v1607
    %v2041 = vunpack.c.l.b16 %v1608
    %v2042 = vunpack.c.h.b16 %v1608
    %v2043 = vunpack.c.l.b16 %v1609
    %v2044 = vunpack.c.h.b16 %v1609
    %v2045 = vunpack.c.l.b16 %v1610
    %v2046 = vunpack.c.h.b16 %v1610
    %v2047 = vunpack.c.l.b16 %v1611
    %v2048 = vunpack.c.h.b16 %v1611
    %v2049 = vunpack.c.l.b16 %v1612
    %v2050 = vunpack.c.h.b16 %v1612
    %v2051 = vunpack.c.l.b16 %v1613
    %v2052 = vunpack.c.h.b16 %v1613
    %v2053 = vunpack.c.l.b16 %v1614
    %v2054 = vunpack.c.h.b16 %v1614
    %v2055 = vunpack.c.l.b16 %v1615
    %v2056 = vunpack.c.h.b16 %v1615
    %v2057 = vunpack.c.l.b16 %v1616
    %v2058 = vunpack.c.h.b16 %v1616
    %v2059 = vunpack.c.l.b16 %v1617
    %v2060 = vunpack.c.h.b16 %v1617
    %v2061 = vunpack.c.l.b16 %v1618
    %v2062 = vunpack.c.h.b16 %v1618
    %v2063 = vunpack.c.l.b16 %v1619
    %v2064 = vunpack.c.h.b16 %v1619
    %v2065 = vunpack.c.l.b16 %v1620
    %v2066 = vunpack.c.h.b16 %v1620
    %v2067 = vunpack.c.l.b16 %v1621
    %v2068 = vunpack.c.h.b16 %v1621
    %v2069 = vunpack.c.l.b16 %v1622
    %v2070 = vunpack.c.h.b16 %v1622
    %v2071 = vunpack.c.l.b16 %v1623
    %v2072 = vunpack.c.h.b16 %v1623
    %v2073 = vunpack.c.l.b16 %v1624
    %v2074 = vunpack.c.h.b16 %v1624
    %v2075 = vunpack.c.l.b16 %v1625
    %v2076 = vunpack.c.h.b16 %v1625
    %v2077 = vunpack.c.l.b16 %v1626
    %v2078 = vunpack.c.h.b16 %v1626
    %v2079 = vunpack.c.l.b16 %v1627
    %v2080 = vunpack.c.h.b16 %v1627
    %v2081 = vunpack.c.l.b16 %v1628
    %v2082 = vunpack.c.h.b16 %v1628
    %v2083 = vunpack.c.l.b16 %v1629
    %v2084 = vunpack.c.h.b16 %v1629
    %v2085 = vunpack.c.l.b16 %v1630
    %v2086 = vunpack.c.h.b16 %v1630
    %v2087 = vunpack.c.l.b16 %v1631
    %v2088 = vunpack.c.h.b16 %v1631
    %v2089 = vunpack.c.l.b16 %v1632
    %v2090 = vunpack.c.h.b16 %v1632
    %v2091 = vunpack.c.l.b16 %v1633
    %v2092 = vunpack.c.h.b16 %v1633
    %v2093 = vunpack.c.l.b16 %v1634
    %v2094 = vunpack.c.h.b16 %v1634
    %v2095 = vunpack.c.l.b16 %v1635
    %v2096 = vunpack.c.h.b16 %v1635
    %v2097 = vunpack.c.l.b16 %v1636
    %v2098 = vunpack.c.h.b16 %v1636
    %v2099 = vunpack.c.l.b16 %v1637
    %v2100 = vunpack.c.h.b16 %v1637
    %v2101 = vunpack.c.l.b16 %v1638
    %v2102 = vunpack.c.h.b16 %v1638
    %v2103 = vunpack.c.l.b16 %v1639
    %v2104 = vunpack.c.h.b16 %v1639
    %v2105 = vunpack.c.l.b16 %v1640
    %v2106 = vunpack.c.h.b16 %v1640
    %v2107 = vunpack.c.l.b16 %v1641
    %v2108 = vunpack.c.h.b16 %v1641
    %v2109 = vunpack.c.l.b16 %v1642
    %v2110 = vunpack.c.h.b16 %v1642
    %v2111 = vunpack.c.l.b16 %v1643
    %v2112 = vunpack.c.h.b16 %v1643
    %v2113 = vunpack.c.l.b16 %v1644
    %v2114 = vunpack.c.h.b16 %v1644
    %v2115 = vunpack.c.l.b16 %v1645
    %v2116 = vunpack.c.h.b16 %v1645
    %v2117 = vunpack.c.l.b16 %v1646
    %v2118 = vunpack.c.h.b16 %v1646
    %v2119 = vunpack.c.l.b16 %v1647
    %v2120 = vunpack.c.h.b16 %v1647
    %v2121 = vunpack.c.l.b16 %v1648
    %v2122 = vunpack.c.h.b16 %v1648
    %v2123 = vunpack.c.l.b16 %v1649
    %v2124 = vunpack.c.h.b16 %v1649
    %v2125 = vunpack.c.l.b16 %v1650
    %v2126 = vunpack.c.h.b16 %v1650
    %v2127 = vunpack.c.l.b16 %v1651
    %v2128 = vunpack.c.h.b16 %v1651
    %v2129 = vunpack.c.l.b16 %v1652
    %v2130 = vunpack.c.h.b16 %v1652
    %v2131 = vunpack.c.l.b16 %v1653
    %v2132 = vunpack.c.h.b16 %v1653
    %v2133 = vunpack.c.l.b16 %v1654
    %v2134 = vunpack.c.h.b16 %v1654
    %v2135 = vunpack.c.l.b16 %v1655
    %v2136 = vunpack.c.h.b16 %v1655
    %v2137 = vunpack.c.l.b16 %v1656
    %v2138 = vunpack.c.h.b16 %v1656
    %v2139 = vunpack.c.l.b16 %v1657
    %v2140 = vunpack.c.h.b16 %v1657
    %v2141 = vunpack.c.l.b16 %v1658
    %v2142 = vunpack.c.h.b16 %v1658
    %v2143 = vunpack.c.l.b16 %v1659
    %v2144 = vunpack.c.h.b16 %v1659
    %v2145 = vunpack.c.l.b16 %v1660
    %v2146 = vunpack.c.h.b16 %v1660
    %v2147 = vunpack.c.l.b16 %v1661
    %v2148 = vunpack.c.h.b16 %v1661
    %v2149 = vunpack.c.l.b16 %v1662
    %v2150 = vunpack.c.h.b16 %v1662
    %v2151 = vunpack.c.l.b16 %v1663
    %v2152 = vunpack.c.h.b16 %v1663
    %v2153 = vunpack.c.l.b16 %v1664
    %v2154 = vunpack.c.h.b16 %v1664
    %v2155 = vunpack.c.l.b16 %v1665
    %v2156 = vunpack.c.h.b16 %v1665
    %v2157 = vunpack.c.l.b16 %v1666
    %v2158 = vunpack.c.h.b16 %v1666
    %v2159 = vunpack.c.l.b16 %v1667
    %v2160 = vunpack.c.h.b16 %v1667
    %v2161 = vunpack.c.l.b16 %v1668
    %v2162 = vunpack.c.h.b16 %v1668
    %v2163 = vunpack.c.l.b16 %v1669
    %v2164 = vunpack.c.h.b16 %v1669
    %v2165 = vunpack.c.l.b16 %v1670
    %v2166 = vunpack.c.h.b16 %v1670
    %v2167 = vunpack.c.l.b16 %v1671
    %v2168 = vunpack.c.h.b16 %v1671
    %v2169 = vunpack.c.l.b16 %v1672
    %v2170 = vunpack.c.h.b16 %v1672
    %v2171 = vunpack.c.l.b16 %v1673
    %v2172 = vunpack.c.h.b16 %v1673
    %v2173 = vunpack.c.l.b16 %v1674
    %v2174 = vunpack.c.h.b16 %v1674
    %v2175 = vunpack.c.l.b16 %v1675
    %v2176 = vunpack.c.h.b16 %v1675
    %v2177 = vunpack.c.l.b16 %v1676
    %v2178 = vunpack.c.h.b16 %v1676
    %v2179 = vunpack.c.l.b16 %v1677
    %v2180 = vunpack.c.h.b16 %v1677
    %v2181 = vunpack.c.l.b16 %v1678
    %v2182 = vunpack.c.h.b16 %v1678
    %v2183 = vunpack.c.l.b16 %v1679
    %v2184 = vunpack.c.h.b16 %v1679
    %v2185 = vunpack.c.l.b16 %v1680
    %v2186 = vunpack.c.h.b16 %v1680
    %v2187 = vunpack.c.l.b16 %v1681
    %v2188 = vunpack.c.h.b16 %v1681
    %v2189 = vunpack.c.l.b16 %v1682
    %v2190 = vunpack.c.h.b16 %v1682
    %v2191 = vunpack.c.l.b16 %v1683
    %v2192 = vunpack.c.h.b16 %v1683
    %v2193 = vunpack.c.l.b16 %v1684
    %v2194 = vunpack.c.h.b16 %v1684
    %v2195 = vunpack.c.l.b16 %v1685
    %v2196 = vunpack.c.h.b16 %v1685
    %v2197 = vunpack.c.l.b16 %v1686
    %v2198 = vunpack.c.h.b16 %v1686
    %v2199 = vunpack.c.l.b16 %v1687
    %v2200 = vunpack.c.h.b16 %v1687
    %v2201 = vunpack.c.l.b16 %v1688
    %v2202 = vunpack.c.h.b16 %v1688
    %v2203 = vunpack.c.l.b16 %v1689
    %v2204 = vunpack.c.h.b16 %v1689
    %v2205 = vunpack.c.l.b16 %v1690
    %v2206 = vunpack.c.h.b16 %v1690
    %v2207 = vunpack.c.l.b16 %v1691
    %v2208 = vunpack.c.h.b16 %v1691
    %v2209 = vunpack.c.l.b16 %v1692
    %v2210 = vunpack.c.h.b16 %v1692
    %v2211 = vunpack.c.l.b16 %v1693
    %v2212 = vunpack.c.h.b16 %v1693
    %v2213 = vunpack.c.l.b16 %v1694
    %v2214 = vunpack.c.h.b16 %v1694
    %v2215 = vunpack.c.l.b16 %v1695
    %v2216 = vunpack.c.h.b16 %v1695
    %v2217 = vunpack.c.l.b16 %v1696
    %v2218 = vunpack.c.h.b16 %v1696
    %v2219 = vunpack.c.l.b16 %v1697
    %v2220 = vunpack.c.h.b16 %v1697
    %v2221 = vunpack.c.l.b16 %v1698
    %v2222 = vunpack.c.h.b16 %v1698
    %v2223 = vunpack.c.l.b16 %v1699
    %v2224 = vunpack.c.h.b16 %v1699
    %v2225 = vunpack.c.l.b16 %v1700
    %v2226 = vunpack.c.h.b16 %v1700
    %v2227 = vunpack.c.l.b16 %v1701
    %v2228 = vunpack.c.h.b16 %v1701
    %v2229 = vunpack.c.l.b16 %v1702
    %v2230 = vunpack.c.h.b16 %v1702
    %v2231 = vunpack.c.l.b16 %v1703
    %v2232 = vunpack.c.h.b16 %v1703
    %v2233 = vunpack.c.l.b16 %v1704
    %v2234 = vunpack.c.h.b16 %v1704
    %v2235 = vunpack.c.l.b16 %v1705
    %v2236 = vunpack.c.h.b16 %v1705
    %v2237 = vunpack.c.l.b16 %v1706
    %v2238 = vunpack.c.h.b16 %v1706
    %v2239 = vunpack.c.l.b16 %v1707
    %v2240 = vunpack.c.h.b16 %v1707
    %v2241 = vunpack.c.l.b16 %v1708
    %v2242 = vunpack.c.h.b16 %v1708
    %v2243 = vunpack.c.l.b16 %v1709
    %v2244 = vunpack.c.h.b16 %v1709
    %v2245 = vunpack.c.l.b16 %v1710
    %v2246 = vunpack.c.h.b16 %v1710
    %v2247 = vunpack.c.l.b16 %v1711
    %v2248 = vunpack.c.h.b16 %v1711
    %v2249 = vunpack.c.l.b16 %v1712
    %v2250 = vunpack.c.h.b16 %v1712
    %v2251 = vunpack.c.l.b16 %v1713
    %v2252 = vunpack.c.h.b16 %v1713
    %v2253 = vunpack.c.l.b16 %v1714
    %v2254 = vunpack.c.h.b16 %v1714
    %v2255 = vunpack.c.l.b16 %v1715
    %v2256 = vunpack.c.h.b16 %v1715
    %v2257 = vunpack.c.l.b16 %v1716
    %v2258 = vunpack.c.h.b16 %v1716
    %v2259 = vunpack.c.l.b16 %v1717
    %v2260 = vunpack.c.h.b16 %v1717
    %v2261 = vunpack.c.l.b16 %v1718
    %v2262 = vunpack.c.h.b16 %v1718
    %v2263 = vunpack.c.l.b16 %v1719
    %v2264 = vunpack.c.h.b16 %v1719
    %v2265 = vunpack.c.l.b16 %v1720
    %v2266 = vunpack.c.h.b16 %v1720
    %v2267 = vunpack.c.l.b16 %v1721
    %v2268 = vunpack.c.h.b16 %v1721
    %v2269 = vunpack.c.l.b16 %v1722
    %v2270 = vunpack.c.h.b16 %v1722
    %v2271 = vunpack.c.l.b16 %v1723
    %v2272 = vunpack.c.h.b16 %v1723
    %v2273 = vunpack.c.l.b16 %v1724
    %v2274 = vunpack.c.h.b16 %v1724
    %v2275 = vunpack.c.l.b16 %v1725
    %v2276 = vunpack.c.h.b16 %v1725
    %v2277 = vunpack.c.l.b16 %v1726
    %v2278 = vunpack.c.h.b16 %v1726
    %v2279 = vunpack.c.l.b16 %v1727
    %v2280 = vunpack.c.h.b16 %v1727
    %v2281 = vunpack.c.l.b16 %v1728
    %v2282 = vunpack.c.h.b16 %v1728
    %v2283 = vunpack.c.l.b16 %v1729
    %v2284 = vunpack.c.h.b16 %v1729
    %v2285 = vunpack.c.l.b16 %v1730
    %v2286 = vunpack.c.h.b16 %v1730
    %v2287 = vunpack.c.l.b16 %v1731
    %v2288 = vunpack.c.h.b16 %v1731
    %v2289 = vunpack.c.l.b16 %v1732
    %v2290 = vunpack.c.h.b16 %v1732
    %v2291 = vunpack.c.l.b16 %v1733
    %v2292 = vunpack.c.h.b16 %v1733
    %v2293 = vunpack.c.l.b16 %v1734
    %v2294 = vunpack.c.h.b16 %v1734
    %v2295 = vunpack.c.l.b16 %v1735
    %v2296 = vunpack.c.h.b16 %v1735
    %v2297 = vunpack.c.l.b16 %v1736
    %v2298 = vunpack.c.h.b16 %v1736
    %v2299 = vunpack.c.l.b16 %v1737
    %v2300 = vunpack.c.h.b16 %v1737
    %v2301 = vunpack.c.l.b16 %v1738
    %v2302 = vunpack.c.h.b16 %v1738
    %v2303 = vunpack.c.l.b16 %v1739
    %v2304 = vunpack.c.h.b16 %v1739
    %v2305 = vunpack.c.l.b16 %v1740
    %v2306 = vunpack.c.h.b16 %v1740
    %v2307 = vunpack.c.l.b16 %v1741
    %v2308 = vunpack.c.h.b16 %v1741
    %v2309 = vunpack.c.l.b16 %v1742
    %v2310 = vunpack.c.h.b16 %v1742
    %v2311 = vunpack.c.l.b16 %v1743
    %v2312 = vunpack.c.h.b16 %v1743
    %v2313 = vunpack.c.l.b16 %v1744
    %v2314 = vunpack.c.h.b16 %v1744
    %v2315 = vunpack.c.l.b16 %v1745
    %v2316 = vunpack.c.h.b16 %v1745
    %v2317 = vunpack.c.l.b16 %v1746
    %v2318 = vunpack.c.h.b16 %v1746
    %v2319 = vunpack.c.l.b16 %v1747
    %v2320 = vunpack.c.h.b16 %v1747
    %v2321 = vunpack.c.l.b16 %v1748
    %v2322 = vunpack.c.h.b16 %v1748
    %v2323 = vunpack.c.l.b16 %v1749
    %v2324 = vunpack.c.h.b16 %v1749
    %v2325 = vunpack.c.l.b16 %v1750
    %v2326 = vunpack.c.h.b16 %v1750
    %v2327 = vunpack.c.l.b16 %v1751
    %v2328 = vunpack.c.h.b16 %v1751
    %v2329 = vunpack.c.l.b16 %v1752
    %v2330 = vunpack.c.h.b16 %v1752
    %v2331 = vunpack.c.l.b16 %v1753
    %v2332 = vunpack.c.h.b16 %v1753
    %v2333 = vunpack.c.l.b16 %v1754
    %v2334 = vunpack.c.h.b16 %v1754
    %v2335 = vunpack.c.l.b16 %v1755
    %v2336 = vunpack.c.h.b16 %v1755
    %v2337 = vunpack.c.l.b16 %v1756
    %v2338 = vunpack.c.h.b16 %v1756
    %v2339 = vunpack.c.l.b16 %v1757
    %v2340 = vunpack.c.h.b16 %v1757
    %v2341 = vunpack.c.l.b16 %v1758
    %v2342 = vunpack.c.h.b16 %v1758
    %v2343 = vunpack.c.l.b16 %v1759
    %v2344 = vunpack.c.h.b16 %v1759
    %v2345 = vunpack.c.l.b16 %v1760
    %v2346 = vunpack.c.h.b16 %v1760
    %v2347 = vunpack.c.l.b16 %v1761
    %v2348 = vunpack.c.h.b16 %v1761
    %v2349 = vunpack.c.l.b16 %v1762
    %v2350 = vunpack.c.h.b16 %v1762
    %v2351 = vunpack.c.l.b16 %v1763
    %v2352 = vunpack.c.h.b16 %v1763
    %v2353 = vunpack.c.l.b16 %v1764
    %v2354 = vunpack.c.h.b16 %v1764
    %v2355 = vunpack.c.l.b16 %v1765
    %v2356 = vunpack.c.h.b16 %v1765
    %v2357 = vunpack.c.l.b16 %v1766
    %v2358 = vunpack.c.h.b16 %v1766
    %v2359 = vunpack.c.l.b16 %v1767
    %v2360 = vunpack.c.h.b16 %v1767
    %v2361 = vunpack.c.l.b16 %v1768
    %v2362 = vunpack.c.h.b16 %v1768
    %v2363 = vunpack.c.l.b16 %v1769
    %v2364 = vunpack.c.h.b16 %v1769
    %v2365 = vunpack.c.l.b16 %v1770
    %v2366 = vunpack.c.h.b16 %v1770
    %v2367 = vunpack.c.l.b16 %v1771
    %v2368 = vunpack.c.h.b16 %v1771
    %v2369 = vunpack.c.l.b16 %v1772
    %v2370 = vunpack.c.h.b16 %v1772
    %v2371 = vunpack.c.l.b16 %v1773
    %v2372 = vunpack.c.h.b16 %v1773
    %v2373 = vunpack.c.l.b16 %v1774
    %v2374 = vunpack.c.h.b16 %v1774
    %v2375 = vunpack.c.l.b16 %v1775
    %v2376 = vunpack.c.h.b16 %v1775
    %v2377 = vunpack.c.l.b16 %v1776
    %v2378 = vunpack.c.h.b16 %v1776
    %v2379 = vunpack.c.l.b16 %v1777
    %v2380 = vunpack.c.h.b16 %v1777
    %v2381 = vunpack.c.l.b16 %v1778
    %v2382 = vunpack.c.h.b16 %v1778
    %v2383 = vunpack.c.l.b16 %v1779
    %v2384 = vunpack.c.h.b16 %v1779
    %v2385 = vunpack.c.l.b16 %v1780
    %v2386 = vunpack.c.h.b16 %v1780
    %v2387 = vunpack.c.l.b16 %v1781
    %v2388 = vunpack.c.h.b16 %v1781
    %v2389 = vunpack.c.l.b16 %v1782
    %v2390 = vunpack.c.h.b16 %v1782
    %v2391 = vpack.c.b16 %v2013, %v2007
    %v2392 = vpack.c.b16 %v2014, %v2008
    %v2393 = vpack.c.b16 %v2015, %v2009
    %v2394 = vpack.c.b16 %v2016, %v2010
    %v2395 = vpack.c.b16 %v2017, %v2011
    %v2396 = vpack.c.b16 %v2018, %v2012
    %v2397 = vpack.c.b16 %v2025, %v2019
    %v2398 = vpack.c.b16 %v2026, %v2020
    %v2399 = vpack.c.b16 %v2027, %v2021
    %v2400 = vpack.c.b16 %v2028, %v2022
    %v2401 = vpack.c.b16 %v2029, %v2023
    %v2402 = vpack.c.b16 %v2030, %v2024
    %v2403 = vpack.c.b16 %v2037, %v2031
    %v2404 = vpack.c.b16 %v2038, %v2032
    %v2405 = vpack.c.b16 %v2039, %v2033
    %v2406 = vpack.c.b16 %v2040, %v2034
    %v2407 = vpack.c.b16 %v2041, %v2035
    %v2408 = vpack.c.b16 %v2042, %v2036
    %v2409 = vpack.c.b16 %v2049, %v2043
    %v2410 = vpack.c.b16 %v2050, %v2044
    %v2411 = vpack.c.b16 %v2051, %v2045
    %v2412 = vpack.c.b16 %v2052, %v2046
    %v2413 = vpack.c.b16 %v2053, %v2047
    %v2414 = vpack.c.b16 %v2054, %v2048
    %v2415 = vpack.c.b16 %v2061, %v2055
    %v2416 = vpack.c.b16 %v2062, %v2056
    %v2417 = vpack.c.b16 %v2063, %v2057
    %v2418 = vpack.c.b16 %v2064, %v2058
    %v2419 = vpack.c.b16 %v2065, %v2059
    %v2420 = vpack.c.b16 %v2066, %v2060
    %v2421 = vpack.c.b16 %v2073, %v2067
    %v2422 = vpack.c.b16 %v2074, %v2068
    %v2423 = vpack.c.b16 %v2075, %v2069
    %v2424 = vpack.c.b16 %v2076, %v2070
    %v2425 = vpack.c.b16 %v2077, %v2071
    %v2426 = vpack.c.b16 %v2078, %v2072
    %v2427 = vpack.c.b16 %v2085, %v2079
    %v2428 = vpack.c.b16 %v2086, %v2080
    %v2429 = vpack.c.b16 %v2087, %v2081
    %v2430 = vpack.c.b16 %v2088, %v2082
    %v2431 = vpack.c.b16 %v2089, %v2083
    %v2432 = vpack.c.b16 %v2090, %v2084
    %v2433 = vpack.c.b16 %v2097, %v2091
    %v2434 = vpack.c.b16 %v2098, %v2092
    %v2435 = vpack.c.b16 %v2099, %v2093
    %v2436 = vpack.c.b16 %v2100, %v2094
    %v2437 = vpack.c.b16 %v2101, %v2095
    %v2438 = vpack.c.b16 %v2102, %v2096
    %v2439 = vpack.c.b16 %v2109, %v2103
    %v2440 = vpack.c.b16 %v2110, %v2104
    %v2441 = vpack.c.b16 %v2111, %v2105
    %v2442 = vpack.c.b16 %v2112, %v2106
    %v2443 = vpack.c.b16 %v2113, %v2107
    %v2444 = vpack.c.b16 %v2114, %v2108
    %v2445 = vpack.c.b16 %v2121, %v2115
    %v2446 = vpack.c.b16 %v2122, %v2116
    %v2447 = vpack.c.b16 %v2123, %v2117
    %v2448 = vpack.c.b16 %v2124, %v2118
    %v2449 = vpack.c.b16 %v2125, %v2119
    %v2450 = vpack.c.b16 %v2126, %v2120
    %v2451 = vpack.c.b16 %v2133, %v2127
    %v2452 = vpack.c.b16 %v2134, %v2128
    %v2453 = vpack.c.b16 %v2135, %v2129
    %v2454 = vpack.c.b16 %v2136, %v2130
    %v2455 = vpack.c.b16 %v2137, %v2131
    %v2456 = vpack.c.b16 %v2138, %v2132
    %v2457 = vpack.c.b16 %v2145, %v2139
    %v2458 = vpack.c.b16 %v2146, %v2140
    %v2459 = vpack.c.b16 %v2147, %v2141
    %v2460 = vpack.c.b16 %v2148, %v2142
    %v2461 = vpack.c.b16 %v2149, %v2143
    %v2462 = vpack.c.b16 %v2150, %v2144
    %v2463 = vpack.c.b16 %v2157, %v2151
    %v2464 = vpack.c.b16 %v2158, %v2152
    %v2465 = vpack.c.b16 %v2159, %v2153
    %v2466 = vpack.c.b16 %v2160, %v2154
    %v2467 = vpack.c.b16 %v2161, %v2155
    %v2468 = vpack.c.b16 %v2162, %v2156
    %v2469 = vpack.c.b16 %v2169, %v2163
    %v2470 = vpack.c.b16 %v2170, %v2164
    %v2471 = vpack.c.b16 %v2171, %v2165
    %v2472 = vpack.c.b16 %v2172, %v2166
    %v2473 = vpack.c.b16 %v2173, %v2167
    %v2474 = vpack.c.b16 %v2174, %v2168
    %v2475 = vpack.c.b16 %v2181, %v2175
    %v2476 = vpack.c.b16 %v2182, %v2176
    %v2477 = vpack.c.b16 %v2183, %v2177
    %v2478 = vpack.c.b16 %v2184, %v2178
    %v2479 = vpack.c.b16 %v2185, %v2179
    %v2480 = vpack.c.b16 %v2186, %v2180
    %v2481 = vpack.c.b16 %v2193, %v2187
    %v2482 = vpack.c.b16 %v2194, %v2188
    %v2483 = vpack.c.b16 %v2195, %v2189
    %v2484 = vpack.c.b16 %v2196, %v2190
    %v2485 = vpack.c.b16 %v2197, %v2191
    %v2486 = vpack.c.b16 %v2198, %v2192
    %v2487 = vpack.c.b16 %v2205, %v2199
    %v2488 = vpack.c.b16 %v2206, %v2200
    %v2489 = vpack.c.b16 %v2207, %v2201
    %v2490 = vpack.c.b16 %v2208, %v2202
    %v2491 = vpack.c.b16 %v2209, %v2203
    %v2492 = vpack.c.b16 %v2210, %v2204
    %v2493 = vpack.c.b16 %v2217, %v2211
    %v2494 = vpack.c.b16 %v2218, %v2212
    %v2495 = vpack.c.b16 %v2219, %v2213
    %v2496 = vpack.c.b16 %v2220, %v2214
    %v2497 = vpack.c.b16 %v2221, %v2215
    %v2498 = vpack.c.b16 %v2222, %v2216
    %v2499 = vpack.c.b16 %v2229, %v2223
    %v2500 = vpack.c.b16 %v2230, %v2224
    %v2501 = vpack.c.b16 %v2231, %v2225
    %v2502 = vpack.c.b16 %v2232, %v2226
    %v2503 = vpack.c.b16 %v2233, %v2227
    %v2504 = vpack.c.b16 %v2234, %v2228
    %v2505 = vpack.c.b16 %v2241, %v2235
    %v2506 = vpack.c.b16 %v2242, %v2236
    %v2507 = vpack.c.b16 %v2243, %v2237
    %v2508 = vpack.c.b16 %v2244, %v2238
    %v2509 = vpack.c.b16 %v2245, %v2239
    %v2510 = vpack.c.b16 %v2246, %v2240
    %v2511 = vpack.c.b16 %v2253, %v2247
    %v2512 = vpack.c.b16 %v2254, %v2248
    %v2513 = vpack.c.b16 %v2255, %v2249
    %v2514 = vpack.c.b16 %v2256, %v2250
    %v2515 = vpack.c.b16 %v2257, %v2251
    %v2516 = vpack.c.b16 %v2258, %v2252
    %v2517 = vpack.c.b16 %v2265, %v2259
    %v2518 = vpack.c.b16 %v2266, %v2260
    %v2519 = vpack.c.b16 %v2267, %v2261
    %v2520 = vpack.c.b16 %v2268, %v2262
    %v2521 = vpack.c.b16 %v2269, %v2263
    %v2522 = vpack.c.b16 %v2270, %v2264
    %v2523 = vpack.c.b16 %v2277, %v2271
    %v2524 = vpack.c.b16 %v2278, %v2272
    %v2525 = vpack.c.b16 %v2279, %v2273
    %v2526 = vpack.c.b16 %v2280, %v2274
    %v2527 = vpack.c.b16 %v2281, %v2275
    %v2528 = vpack.c.b16 %v2282, %v2276
    %v2529 = vpack.c.b16 %v2289, %v2283
    %v2530 = vpack.c.b16 %v2290, %v2284
    %v2531 = vpack.c.b16 %v2291, %v2285
    %v2532 = vpack.c.b16 %v2292, %v2286
    %v2533 = vpack.c.b16 %v2293, %v2287
    %v2534 = vpack.c.b16 %v2294, %v2288
    %v2535 = vpack.c.b16 %v2301, %v2295
    %v2536 = vpack.c.b16 %v2302, %v2296
    %v2537 = vpack.c.b16 %v2303, %v2297
    %v2538 = vpack.c.b16 %v2304, %v2298
    %v2539 = vpack.c.b16 %v2305, %v2299
    %v2540 = vpack.c.b16 %v2306, %v2300
    %v2541 = vpack.c.b16 %v2313, %v2307
    %v2542 = vpack.c.b16 %v2314, %v2308
    %v2543 = vpack.c.b16 %v2315, %v2309
    %v2544 = vpack.c.b16 %v2316, %v2310
    %v2545 = vpack.c.b16 %v2317, %v2311
    %v2546 = vpack.c.b16 %v2318, %v2312
    %v2547 = vpack.c.b16 %v2325, %v2319
    %v2548 = vpack.c.b16 %v2326, %v2320
    %v2549 = vpack.c.b16 %v2327, %v2321
    %v2550 = vpack.c.b16 %v2328, %v2322
    %v2551 = vpack.c.b16 %v2329, %v2323
    %v2552 = vpack.c.b16 %v2330, %v2324
    %v2553 = vpack.c.b16 %v2337, %v2331
    %v2554 = vpack.c.b16 %v2338, %v2332
    %v2555 = vpack.c.b16 %v2339, %v2333
    %v2556 = vpack.c.b16 %v2340, %v2334
    %v2557 = vpack.c.b16 %v2341, %v2335
    %v2558 = vpack.c.b16 %v2342, %v2336
    %v2559 = vpack.c.b16 %v2349, %v2343
    %v2560 = vpack.c.b16 %v2350, %v2344
    %v2561 = vpack.c.b16 %v2351, %v2345
    %v2562 = vpack.c.b16 %v2352, %v2346
    %v2563 = vpack.c.b16 %v2353, %v2347
    %v2564 = vpack.c.b16 %v2354, %v2348
    %v2565 = vpack.c.b16 %v2361, %v2355
    %v2566 = vpack.c.b16 %v2362, %v2356
    %v2567 = vpack.c.b16 %v2363, %v2357
    %v2568 = vpack.c.b16 %v2364, %v2358
    %v2569 = vpack.c.b16 %v2365, %v2359
    %v2570 = vpack.c.b16 %v2366, %v2360
    %v2571 = vpack.c.b16 %v2373, %v2367
    %v2572 = vpack.c.b16 %v2374, %v2368
    %v2573 = vpack.c.b16 %v2375, %v2369
    %v2574 = vpack.c.b16 %v2376, %v2370
    %v2575 = vpack.c.b16 %v2377, %v2371
    %v2576 = vpack.c.b16 %v2378, %v2372
    %v2577 = vpack.c.b16 %v2385, %v2379
    %v2578 = vpack.c.b16 %v2386, %v2380
    %v2579 = vpack.c.b16 %v2387, %v2381
    %v2580 = vpack.c.b16 %v2388, %v2382
    %v2581 = vpack.c.b16 %v2389, %v2383
    %v2582 = vpack.c.b16 %v2390, %v2384
    %2775 = vmatprep.subr.bf16.mxu0 %v2434
    %2776 = vmatpush1.bf16.msra.mxu0 %v2433
    %2777 = vmatprep.subr.bf16.mxu0 %v2428
    %2778 = vmatpush1.bf16.msra.mxu0 %v2427
    %2779 = vmatprep.subr.bf16.mxu0 %v2422
    %2780 = vmatpush1.bf16.msra.mxu0 %v2421
    %2781 = vmatprep.subr.bf16.mxu0 %v2416
    %2782 = vmatpush1.bf16.msra.mxu0 %v2415
    %2783 = vmatprep.subr.bf16.mxu0 %v2410
    %2784 = vmatpush1.bf16.msra.mxu0 %v2409
    %2785 = vmatprep.subr.bf16.mxu0 %v2404
    %2786 = vmatpush1.bf16.msra.mxu0 %v2403
    %2787 = vmatprep.subr.bf16.mxu0 %v2398
    %2788 = vmatpush1.bf16.msra.mxu0 %v2397
    %2789 = vmatprep.subr.bf16.mxu0 %v2392
    %2790 = vmatpush1.bf16.msra.mxu0 %v2391
    %2791 = vmatprep.subr.bf16.mxu0 %v2482
    %2792 = vmatpush2.bf16.msra.mxu0 %v2481
    %2793 = vmatprep.subr.bf16.mxu0 %v2476
    %2794 = vmatpush2.bf16.msra.mxu0 %v2475
    %2795 = vmatprep.subr.bf16.mxu0 %v2470
    %2796 = vmatpush2.bf16.msra.mxu0 %v2469
    %2797 = vmatprep.subr.bf16.mxu0 %v2464
    %2798 = vmatpush2.bf16.msra.mxu0 %v2463
    %2799 = vmatprep.subr.bf16.mxu0 %v2458
    %2800 = vmatpush2.bf16.msra.mxu0 %v2457
    %2801 = vmatprep.subr.bf16.mxu0 %v2452
    %2802 = vmatpush2.bf16.msra.mxu0 %v2451
    %2803 = vmatprep.subr.bf16.mxu0 %v2446
    %2804 = vmatpush2.bf16.msra.mxu0 %v2445
    %2805 = vmatprep.subr.bf16.mxu0 %v2440
    %2806 = vmatpush2.bf16.msra.mxu0 %v2439
    %2807 = vmatprep.mubr.bf16.mxu0 %v1588
    %2808 = vmatmul.mubr.bf16.gmra.mxu0 %v1587
    %v2809 = vpop.f32.mrf.mxu0
    %v2810 = vadd.f32 %v1788, %v2809
    %v2811 = vpop.f32.mrf.mxu0
    %v2812 = vadd.f32 %v1792, %v2811
    %v2813 = vpop.f32.mrf.mxu0
    %v2814 = vpop.f32.mrf.mxu0
    %2815 = vdwg.mxu0
    %2816 = vmatprep.subr.bf16.mxu0 %v2530
    %2817 = vmatpush1.bf16.msra.mxu0 %v2529
    %2818 = vmatprep.subr.bf16.mxu0 %v2524
    %2819 = vmatpush1.bf16.msra.mxu0 %v2523
    %2820 = vmatprep.subr.bf16.mxu0 %v2518
    %2821 = vmatpush1.bf16.msra.mxu0 %v2517
    %2822 = vmatprep.subr.bf16.mxu0 %v2512
    %2823 = vmatpush1.bf16.msra.mxu0 %v2511
    %2824 = vmatprep.subr.bf16.mxu0 %v2506
    %2825 = vmatpush1.bf16.msra.mxu0 %v2505
    %2826 = vmatprep.subr.bf16.mxu0 %v2500
    %2827 = vmatpush1.bf16.msra.mxu0 %v2499
    %2828 = vmatprep.subr.bf16.mxu0 %v2494
    %2829 = vmatpush1.bf16.msra.mxu0 %v2493
    %2830 = vmatprep.subr.bf16.mxu0 %v2488
    %2831 = vmatpush1.bf16.msra.mxu0 %v2487
    %2832 = vmatprep.subr.bf16.mxu0 %v2578
    %2833 = vmatpush2.bf16.msra.mxu0 %v2577
    %2834 = vmatprep.subr.bf16.mxu0 %v2572
    %2835 = vmatpush2.bf16.msra.mxu0 %v2571
    %2836 = vmatprep.subr.bf16.mxu0 %v2566
    %2837 = vmatpush2.bf16.msra.mxu0 %v2565
    %2838 = vmatprep.subr.bf16.mxu0 %v2560
    %2839 = vmatpush2.bf16.msra.mxu0 %v2559
    %2840 = vmatprep.subr.bf16.mxu0 %v2554
    %2841 = vmatpush2.bf16.msra.mxu0 %v2553
    %2842 = vmatprep.subr.bf16.mxu0 %v2548
    %2843 = vmatpush2.bf16.msra.mxu0 %v2547
    %2844 = vmatprep.subr.bf16.mxu0 %v2542
    %2845 = vmatpush2.bf16.msra.mxu0 %v2541
    %2846 = vmatprep.subr.bf16.mxu0 %v2536
    %2847 = vmatpush2.bf16.msra.mxu0 %v2535
    %2848 = vmatprep.mubr.bf16.mxu0 %v1590
    %2849 = vmatmul.mubr.bf16.gmra.mxu0 %v1589
    %v2850 = vpop.f32.mrf.mxu0
    %v2851 = vadd.f32 %v2810, %v2850
    %v2852 = vpop.f32.mrf.mxu0
    %v2853 = vadd.f32 %v2812, %v2852
    %v2854 = vpop.f32.mrf.mxu0
    %v2855 = vpop.f32.mrf.mxu0
    %2856 = vdwg.mxu0
    %2857 = vmatprep.subr.bf16.mxu0 %v2436
    %2858 = vmatpush1.bf16.msra.mxu0 %v2435
    %2859 = vmatprep.subr.bf16.mxu0 %v2430
    %2860 = vmatpush1.bf16.msra.mxu0 %v2429
    %2861 = vmatprep.subr.bf16.mxu0 %v2424
    %2862 = vmatpush1.bf16.msra.mxu0 %v2423
    %2863 = vmatprep.subr.bf16.mxu0 %v2418
    %2864 = vmatpush1.bf16.msra.mxu0 %v2417
    %2865 = vmatprep.subr.bf16.mxu0 %v2412
    %2866 = vmatpush1.bf16.msra.mxu0 %v2411
    %2867 = vmatprep.subr.bf16.mxu0 %v2406
    %2868 = vmatpush1.bf16.msra.mxu0 %v2405
    %2869 = vmatprep.subr.bf16.mxu0 %v2400
    %2870 = vmatpush1.bf16.msra.mxu0 %v2399
    %2871 = vmatprep.subr.bf16.mxu0 %v2394
    %2872 = vmatpush1.bf16.msra.mxu0 %v2393
    %2873 = vmatprep.subr.bf16.mxu0 %v2484
    %2874 = vmatpush2.bf16.msra.mxu0 %v2483
    %2875 = vmatprep.subr.bf16.mxu0 %v2478
    %2876 = vmatpush2.bf16.msra.mxu0 %v2477
    %2877 = vmatprep.subr.bf16.mxu0 %v2472
    %2878 = vmatpush2.bf16.msra.mxu0 %v2471
    %2879 = vmatprep.subr.bf16.mxu0 %v2466
    %2880 = vmatpush2.bf16.msra.mxu0 %v2465
    %2881 = vmatprep.subr.bf16.mxu0 %v2460
    %2882 = vmatpush2.bf16.msra.mxu0 %v2459
    %2883 = vmatprep.subr.bf16.mxu0 %v2454
    %2884 = vmatpush2.bf16.msra.mxu0 %v2453
    %2885 = vmatprep.subr.bf16.mxu0 %v2448
    %2886 = vmatpush2.bf16.msra.mxu0 %v2447
    %2887 = vmatprep.subr.bf16.mxu0 %v2442
    %2888 = vmatpush2.bf16.msra.mxu0 %v2441
    %2889 = vmatprep.mubr.bf16.mxu0 %v1588
    %2890 = vmatmul.mubr.bf16.gmra.mxu0 %v1587
    %v2891 = vpop.f32.mrf.mxu0
    %v2892 = vadd.f32 %v1796, %v2891
    %v2893 = vpop.f32.mrf.mxu0
    %v2894 = vadd.f32 %v1800, %v2893
    %v2895 = vpop.f32.mrf.mxu0
    %v2896 = vpop.f32.mrf.mxu0
    %2897 = vdwg.mxu0
    %2898 = vmatprep.subr.bf16.mxu0 %v2532
    %2899 = vmatpush1.bf16.msra.mxu0 %v2531
    %2900 = vmatprep.subr.bf16.mxu0 %v2526
    %2901 = vmatpush1.bf16.msra.mxu0 %v2525
    %2902 = vmatprep.subr.bf16.mxu0 %v2520
    %2903 = vmatpush1.bf16.msra.mxu0 %v2519
    %2904 = vmatprep.subr.bf16.mxu0 %v2514
    %2905 = vmatpush1.bf16.msra.mxu0 %v2513
    %2906 = vmatprep.subr.bf16.mxu0 %v2508
    %2907 = vmatpush1.bf16.msra.mxu0 %v2507
    %2908 = vmatprep.subr.bf16.mxu0 %v2502
    %2909 = vmatpush1.bf16.msra.mxu0 %v2501
    %2910 = vmatprep.subr.bf16.mxu0 %v2496
    %2911 = vmatpush1.bf16.msra.mxu0 %v2495
    %2912 = vmatprep.subr.bf16.mxu0 %v2490
    %2913 = vmatpush1.bf16.msra.mxu0 %v2489
    %2914 = vmatprep.subr.bf16.mxu0 %v2580
    %2915 = vmatpush2.bf16.msra.mxu0 %v2579
    %2916 = vmatprep.subr.bf16.mxu0 %v2574
    %2917 = vmatpush2.bf16.msra.mxu0 %v2573
    %2918 = vmatprep.subr.bf16.mxu0 %v2568
    %2919 = vmatpush2.bf16.msra.mxu0 %v2567
    %2920 = vmatprep.subr.bf16.mxu0 %v2562
    %2921 = vmatpush2.bf16.msra.mxu0 %v2561
    %2922 = vmatprep.subr.bf16.mxu0 %v2556
    %2923 = vmatpush2.bf16.msra.mxu0 %v2555
    %2924 = vmatprep.subr.bf16.mxu0 %v2550
    %2925 = vmatpush2.bf16.msra.mxu0 %v2549
    %2926 = vmatprep.subr.bf16.mxu0 %v2544
    %2927 = vmatpush2.bf16.msra.mxu0 %v2543
    %2928 = vmatprep.subr.bf16.mxu0 %v2538
    %2929 = vmatpush2.bf16.msra.mxu0 %v2537
    %2930 = vmatprep.mubr.bf16.mxu0 %v1590
    %2931 = vmatmul.mubr.bf16.gmra.mxu0 %v1589
    %v2932 = vpop.f32.mrf.mxu0
    %v2933 = vadd.f32 %v2892, %v2932
    %v2934 = vpop.f32.mrf.mxu0
    %v2935 = vadd.f32 %v2894, %v2934
    %v2936 = vpop.f32.mrf.mxu0
    %v2937 = vpop.f32.mrf.mxu0
    %2938 = vdwg.mxu0
    %2939 = vmatprep.subr.bf16.mxu0 %v2438
    %2940 = vmatpush1.bf16.msra.mxu0 %v2437
    %2941 = vmatprep.subr.bf16.mxu0 %v2432
    %2942 = vmatpush1.bf16.msra.mxu0 %v2431
    %2943 = vmatprep.subr.bf16.mxu0 %v2426
    %2944 = vmatpush1.bf16.msra.mxu0 %v2425
    %2945 = vmatprep.subr.bf16.mxu0 %v2420
    %2946 = vmatpush1.bf16.msra.mxu0 %v2419
    %2947 = vmatprep.subr.bf16.mxu0 %v2414
    %2948 = vmatpush1.bf16.msra.mxu0 %v2413
    %2949 = vmatprep.subr.bf16.mxu0 %v2408
    %2950 = vmatpush1.bf16.msra.mxu0 %v2407
    %2951 = vmatprep.subr.bf16.mxu0 %v2402
    %2952 = vmatpush1.bf16.msra.mxu0 %v2401
    %2953 = vmatprep.subr.bf16.mxu0 %v2396
    %2954 = vmatpush1.bf16.msra.mxu0 %v2395
    %2955 = vmatprep.subr.bf16.mxu0 %v2486
    %2956 = vmatpush2.bf16.msra.mxu0 %v2485
    %2957 = vmatprep.subr.bf16.mxu0 %v2480
    %2958 = vmatpush2.bf16.msra.mxu0 %v2479
    %2959 = vmatprep.subr.bf16.mxu0 %v2474
    %2960 = vmatpush2.bf16.msra.mxu0 %v2473
    %2961 = vmatprep.subr.bf16.mxu0 %v2468
    %2962 = vmatpush2.bf16.msra.mxu0 %v2467
    %2963 = vmatprep.subr.bf16.mxu0 %v2462
    %2964 = vmatpush2.bf16.msra.mxu0 %v2461
    %2965 = vmatprep.subr.bf16.mxu0 %v2456
    %2966 = vmatpush2.bf16.msra.mxu0 %v2455
    %2967 = vmatprep.subr.bf16.mxu0 %v2450
    %2968 = vmatpush2.bf16.msra.mxu0 %v2449
    %2969 = vmatprep.subr.bf16.mxu0 %v2444
    %2970 = vmatpush2.bf16.msra.mxu0 %v2443
    %2971 = vmatprep.mubr.bf16.mxu0 %v1588
    %2972 = vmatmul.mubr.bf16.gmra.mxu0 %v1587
    %v2973 = vpop.f32.mrf.mxu0
    %v2974 = vadd.f32 %v1804, %v2973
    %v2975 = vpop.f32.mrf.mxu0
    %v2976 = vadd.f32 %v1808, %v2975
    %v2977 = vpop.f32.mrf.mxu0
    %v2978 = vpop.f32.mrf.mxu0
    %2979 = vdwg.mxu0
    %2980 = vmatprep.subr.bf16.mxu0 %v2534
    %2981 = vmatpush1.bf16.msra.mxu0 %v2533
    %2982 = vmatprep.subr.bf16.mxu0 %v2528
    %2983 = vmatpush1.bf16.msra.mxu0 %v2527
    %2984 = vmatprep.subr.bf16.mxu0 %v2522
    %2985 = vmatpush1.bf16.msra.mxu0 %v2521
    %2986 = vmatprep.subr.bf16.mxu0 %v2516
    %2987 = vmatpush1.bf16.msra.mxu0 %v2515
    %2988 = vmatprep.subr.bf16.mxu0 %v2510
    %2989 = vmatpush1.bf16.msra.mxu0 %v2509
    %2990 = vmatprep.subr.bf16.mxu0 %v2504
    %2991 = vmatpush1.bf16.msra.mxu0 %v2503
    %2992 = vmatprep.subr.bf16.mxu0 %v2498
    %2993 = vmatpush1.bf16.msra.mxu0 %v2497
    %2994 = vmatprep.subr.bf16.mxu0 %v2492
    %2995 = vmatpush1.bf16.msra.mxu0 %v2491
    %2996 = vmatprep.subr.bf16.mxu0 %v2582
    %2997 = vmatpush2.bf16.msra.mxu0 %v2581
    %2998 = vmatprep.subr.bf16.mxu0 %v2576
    %2999 = vmatpush2.bf16.msra.mxu0 %v2575
    %3000 = vmatprep.subr.bf16.mxu0 %v2570
    %3001 = vmatpush2.bf16.msra.mxu0 %v2569
    %3002 = vmatprep.subr.bf16.mxu0 %v2564
    %3003 = vmatpush2.bf16.msra.mxu0 %v2563
    %3004 = vmatprep.subr.bf16.mxu0 %v2558
    %3005 = vmatpush2.bf16.msra.mxu0 %v2557
    %3006 = vmatprep.subr.bf16.mxu0 %v2552
    %3007 = vmatpush2.bf16.msra.mxu0 %v2551
    %3008 = vmatprep.subr.bf16.mxu0 %v2546
    %3009 = vmatpush2.bf16.msra.mxu0 %v2545
    %3010 = vmatprep.subr.bf16.mxu0 %v2540
    %3011 = vmatpush2.bf16.msra.mxu0 %v2539
    %3012 = vmatprep.mubr.bf16.mxu0 %v1590
    %3013 = vmatmul.mubr.bf16.gmra.mxu0 %v1589
    %v3014 = vpop.f32.mrf.mxu0
    %v3015 = vadd.f32 %v2974, %v3014
    %v3016 = vpop.f32.mrf.mxu0
    %v3017 = vadd.f32 %v2976, %v3016
    %v3018 = vpop.f32.mrf.mxu0
    %v3019 = vpop.f32.mrf.mxu0
    %3020 = vdwg.mxu0
    %v3021 = vmax.f32 %v2851, 0.0
    %v3022 = vmax.f32 %v2853, 0.0
    %v3023 = vmax.f32 %v2933, 0.0
    %v3024 = vmax.f32 %v2935, 0.0
    %v3025 = vmax.f32 %v3015, 0.0
    %v3026 = vmax.f32 %v3017, 0.0
    %v3027 = vpack.c.bf16 %v3021, %v3021
    %v3028 = vpack.c.bf16 %v3022, %v3022
    %v3029 = vpack.c.bf16 %v3023, %v3023
    %v3030 = vpack.c.bf16 %v3024, %v3024
    %v3031 = vpack.c.bf16 %v3025, %v3025
    %v3032 = vpack.c.bf16 %v3026, %v3026
    %v3033 = vld [vmem:[#allocation10] sm:$0xf]
    %v3034 = vld [vmem:[#allocation10 + $0x4] sm:$0xf]
    %v3035 = vld [vmem:[#allocation10 + $0x8] sm:$0xf]
    %v3036 = vld [vmem:[#allocation10 + $0xc] sm:$0xf]
    %v3037 = vld [vmem:[#allocation10 + $0x10] sm:$0xf]
    %v3038 = vld [vmem:[#allocation10 + $0x14] sm:$0xf]
    %v3039 = vld [vmem:[#allocation10 + $0x18] sm:$0xf]
    %v3040 = vld [vmem:[#allocation10 + $0x1c] sm:$0xf]
    %v3041 = vld [vmem:[#allocation10 + $0x20] sm:$0xf]
    %v3042 = vld [vmem:[#allocation10 + $0x24] sm:$0xf]
    %v3043 = vld [vmem:[#allocation10 + $0x28] sm:$0xf]
    %v3044 = vld [vmem:[#allocation10 + $0x2c] sm:$0xf]
    %v3045 = vld [vmem:[#allocation10 + $0x30] sm:$0xf]
    %v3046 = vld [vmem:[#allocation10 + $0x34] sm:$0xf]
    %v3047 = vld [vmem:[#allocation10 + $0x38] sm:$0xf]
    %v3048 = vld [vmem:[#allocation10 + $0x3c] sm:$0xf]
    %v3049 = vld [vmem:[#allocation10 + $0x40] sm:$0xf]
    %v3050 = vld [vmem:[#allocation10 + $0x44] sm:$0xf]
    %v3051 = vld [vmem:[#allocation10 + $0x48] sm:$0xf]
    %v3052 = vld [vmem:[#allocation10 + $0x4c] sm:$0xf]
    %v3053 = vld [vmem:[#allocation10 + $0x50] sm:$0xf]
    %v3054 = vld [vmem:[#allocation10 + $0x54] sm:$0xf]
    %v3055 = vld [vmem:[#allocation10 + $0x58] sm:$0xf]
    %v3056 = vld [vmem:[#allocation10 + $0x5c] sm:$0xf]
    %v3057 = vld [vmem:[#allocation10 + $0x60] sm:$0xf]
    %v3058 = vld [vmem:[#allocation10 + $0x64] sm:$0xf]
    %v3059 = vld [vmem:[#allocation10 + $0x68] sm:$0xf]
    %v3060 = vld [vmem:[#allocation10 + $0x6c] sm:$0xf]
    %v3061 = vld [vmem:[#allocation10 + $0x70] sm:$0xf]
    %v3062 = vld [vmem:[#allocation10 + $0x74] sm:$0xf]
    %v3063 = vld [vmem:[#allocation10 + $0x78] sm:$0xf]
    %v3064 = vld [vmem:[#allocation10 + $0x7c] sm:$0xf]
    %v3065 = vld [vmem:[#allocation10 + $0x80] sm:$0xf]
    %v3066 = vld [vmem:[#allocation10 + $0x84] sm:$0xf]
    %v3067 = vld [vmem:[#allocation10 + $0x88] sm:$0xf]
    %v3068 = vld [vmem:[#allocation10 + $0x8c] sm:$0xf]
    %v3069 = vld [vmem:[#allocation10 + $0x90] sm:$0xf]
    %v3070 = vld [vmem:[#allocation10 + $0x94] sm:$0xf]
    %v3071 = vld [vmem:[#allocation10 + $0x98] sm:$0xf]
    %v3072 = vld [vmem:[#allocation10 + $0x9c] sm:$0xf]
    %v3073 = vld [vmem:[#allocation10 + $0xa0] sm:$0xf]
    %v3074 = vld [vmem:[#allocation10 + $0xa4] sm:$0xf]
    %v3075 = vld [vmem:[#allocation10 + $0xa8] sm:$0xf]
    %v3076 = vld [vmem:[#allocation10 + $0xac] sm:$0xf]
    %v3077 = vld [vmem:[#allocation10 + $0xb0] sm:$0xf]
    %v3078 = vld [vmem:[#allocation10 + $0xb4] sm:$0xf]
    %v3079 = vld [vmem:[#allocation10 + $0xb8] sm:$0xf]
    %v3080 = vld [vmem:[#allocation10 + $0xbc] sm:$0xf]
    %v3081 = vld [vmem:[#allocation10 + $0xc0] sm:$0xf]
    %v3082 = vld [vmem:[#allocation10 + $0xc4] sm:$0xf]
    %v3083 = vld [vmem:[#allocation10 + $0xc8] sm:$0xf]
    %v3084 = vld [vmem:[#allocation10 + $0xcc] sm:$0xf]
    %v3085 = vld [vmem:[#allocation10 + $0xd0] sm:$0xf]
    %v3086 = vld [vmem:[#allocation10 + $0xd4] sm:$0xf]
    %v3087 = vld [vmem:[#allocation10 + $0xd8] sm:$0xf]
    %v3088 = vld [vmem:[#allocation10 + $0xdc] sm:$0xf]
    %v3089 = vld [vmem:[#allocation10 + $0xe0] sm:$0xf]
    %v3090 = vld [vmem:[#allocation10 + $0xe4] sm:$0xf]
    %v3091 = vld [vmem:[#allocation10 + $0xe8] sm:$0xf]
    %v3092 = vld [vmem:[#allocation10 + $0xec] sm:$0xf]
    %v3093 = vld [vmem:[#allocation10 + $0xf0] sm:$0xf]
    %v3094 = vld [vmem:[#allocation10 + $0xf4] sm:$0xf]
    %v3095 = vld [vmem:[#allocation10 + $0xf8] sm:$0xf]
    %v3096 = vld [vmem:[#allocation10 + $0xfc] sm:$0xf]
    %v3097 = vld [vmem:[#allocation10 + $0x100] sm:$0xf]
    %v3098 = vld [vmem:[#allocation10 + $0x104] sm:$0xf]
    %v3099 = vld [vmem:[#allocation10 + $0x108] sm:$0xf]
    %v3100 = vld [vmem:[#allocation10 + $0x10c] sm:$0xf]
    %v3101 = vld [vmem:[#allocation10 + $0x110] sm:$0xf]
    %v3102 = vld [vmem:[#allocation10 + $0x114] sm:$0xf]
    %v3103 = vld [vmem:[#allocation10 + $0x118] sm:$0xf]
    %v3104 = vld [vmem:[#allocation10 + $0x11c] sm:$0xf]
    %v3105 = vld [vmem:[#allocation10 + $0x120] sm:$0xf]
    %v3106 = vld [vmem:[#allocation10 + $0x124] sm:$0xf]
    %v3107 = vld [vmem:[#allocation10 + $0x128] sm:$0xf]
    %v3108 = vld [vmem:[#allocation10 + $0x12c] sm:$0xf]
    %v3109 = vld [vmem:[#allocation10 + $0x130] sm:$0xf]
    %v3110 = vld [vmem:[#allocation10 + $0x134] sm:$0xf]
    %v3111 = vld [vmem:[#allocation10 + $0x138] sm:$0xf]
    %v3112 = vld [vmem:[#allocation10 + $0x13c] sm:$0xf]
    %v3113 = vld [vmem:[#allocation10 + $0x140] sm:$0xf]
    %v3114 = vld [vmem:[#allocation10 + $0x144] sm:$0xf]
    %v3115 = vld [vmem:[#allocation10 + $0x148] sm:$0xf]
    %v3116 = vld [vmem:[#allocation10 + $0x14c] sm:$0xf]
    %v3117 = vld [vmem:[#allocation10 + $0x150] sm:$0xf]
    %v3118 = vld [vmem:[#allocation10 + $0x154] sm:$0xf]
    %v3119 = vld [vmem:[#allocation10 + $0x158] sm:$0xf]
    %v3120 = vld [vmem:[#allocation10 + $0x15c] sm:$0xf]
    %v3121 = vld [vmem:[#allocation10 + $0x160] sm:$0xf]
    %v3122 = vld [vmem:[#allocation10 + $0x164] sm:$0xf]
    %v3123 = vld [vmem:[#allocation10 + $0x168] sm:$0xf]
    %v3124 = vld [vmem:[#allocation10 + $0x16c] sm:$0xf]
    %v3125 = vld [vmem:[#allocation10 + $0x170] sm:$0xf]
    %v3126 = vld [vmem:[#allocation10 + $0x174] sm:$0xf]
    %v3127 = vld [vmem:[#allocation10 + $0x178] sm:$0xf]
    %v3128 = vld [vmem:[#allocation10 + $0x17c] sm:$0xf]
    %v3129 = vld [vmem:[%s6] sm:$0x1]
    %v3131 = vlaneseq
    %v3132 = vshrl.u32 %v3131, 7
    %v3133 = vsub.s32 0, %v3132
    %v3134 = vrot.slane %v3129, %v3133
    %v3232 = vunpack.c.l.b16 %v3033
    %v3233 = vunpack.c.l.b16 %v3034
    %v3234 = vunpack.c.l.b16 %v3035
    %v3235 = vunpack.c.l.b16 %v3036
    %v3236 = vunpack.c.l.b16 %v3037
    %v3237 = vunpack.c.l.b16 %v3038
    %v3238 = vunpack.c.l.b16 %v3039
    %v3239 = vunpack.c.l.b16 %v3040
    %v3240 = vunpack.c.l.b16 %v3041
    %v3241 = vunpack.c.l.b16 %v3042
    %v3242 = vunpack.c.l.b16 %v3043
    %v3243 = vunpack.c.l.b16 %v3044
    %v3244 = vunpack.c.l.b16 %v3045
    %v3245 = vunpack.c.l.b16 %v3046
    %v3246 = vunpack.c.l.b16 %v3047
    %v3247 = vunpack.c.l.b16 %v3048
    %v3248 = vunpack.c.l.b16 %v3049
    %v3249 = vunpack.c.l.b16 %v3050
    %v3250 = vunpack.c.l.b16 %v3051
    %v3251 = vunpack.c.l.b16 %v3052
    %v3252 = vunpack.c.l.b16 %v3053
    %v3253 = vunpack.c.l.b16 %v3054
    %v3254 = vunpack.c.l.b16 %v3055
    %v3255 = vunpack.c.l.b16 %v3056
    %v3256 = vunpack.c.l.b16 %v3057
    %v3257 = vunpack.c.l.b16 %v3058
    %v3258 = vunpack.c.l.b16 %v3059
    %v3259 = vunpack.c.l.b16 %v3060
    %v3260 = vunpack.c.l.b16 %v3061
    %v3261 = vunpack.c.l.b16 %v3062
    %v3262 = vunpack.c.l.b16 %v3063
    %v3263 = vunpack.c.l.b16 %v3064
    %v3264 = vunpack.c.l.b16 %v3065
    %v3265 = vunpack.c.l.b16 %v3066
    %v3266 = vunpack.c.l.b16 %v3067
    %v3267 = vunpack.c.l.b16 %v3068
    %v3268 = vunpack.c.l.b16 %v3069
    %v3269 = vunpack.c.l.b16 %v3070
    %v3270 = vunpack.c.l.b16 %v3071
    %v3271 = vunpack.c.l.b16 %v3072
    %v3272 = vunpack.c.l.b16 %v3073
    %v3273 = vunpack.c.l.b16 %v3074
    %v3274 = vunpack.c.l.b16 %v3075
    %v3275 = vunpack.c.l.b16 %v3076
    %v3276 = vunpack.c.l.b16 %v3077
    %v3277 = vunpack.c.l.b16 %v3078
    %v3278 = vunpack.c.l.b16 %v3079
    %v3279 = vunpack.c.l.b16 %v3080
    %v3280 = vunpack.c.l.b16 %v3081
    %v3281 = vunpack.c.l.b16 %v3082
    %v3282 = vunpack.c.l.b16 %v3083
    %v3283 = vunpack.c.l.b16 %v3084
    %v3284 = vunpack.c.l.b16 %v3085
    %v3285 = vunpack.c.l.b16 %v3086
    %v3286 = vunpack.c.l.b16 %v3087
    %v3287 = vunpack.c.l.b16 %v3088
    %v3288 = vunpack.c.l.b16 %v3089
    %v3289 = vunpack.c.l.b16 %v3090
    %v3290 = vunpack.c.l.b16 %v3091
    %v3291 = vunpack.c.l.b16 %v3092
    %v3292 = vunpack.c.l.b16 %v3093
    %v3293 = vunpack.c.l.b16 %v3094
    %v3294 = vunpack.c.l.b16 %v3095
    %v3295 = vunpack.c.l.b16 %v3096
    %v3296 = vunpack.c.l.b16 %v3097
    %v3297 = vunpack.c.l.b16 %v3098
    %v3298 = vunpack.c.l.b16 %v3099
    %v3299 = vunpack.c.l.b16 %v3100
    %v3300 = vunpack.c.l.b16 %v3101
    %v3301 = vunpack.c.l.b16 %v3102
    %v3302 = vunpack.c.l.b16 %v3103
    %v3303 = vunpack.c.l.b16 %v3104
    %v3304 = vunpack.c.l.b16 %v3105
    %v3305 = vunpack.c.l.b16 %v3106
    %v3306 = vunpack.c.l.b16 %v3107
    %v3307 = vunpack.c.l.b16 %v3108
    %v3308 = vunpack.c.l.b16 %v3109
    %v3309 = vunpack.c.l.b16 %v3110
    %v3310 = vunpack.c.l.b16 %v3111
    %v3311 = vunpack.c.l.b16 %v3112
    %v3312 = vunpack.c.l.b16 %v3113
    %v3313 = vunpack.c.l.b16 %v3114
    %v3314 = vunpack.c.l.b16 %v3115
    %v3315 = vunpack.c.l.b16 %v3116
    %v3316 = vunpack.c.l.b16 %v3117
    %v3317 = vunpack.c.l.b16 %v3118
    %v3318 = vunpack.c.l.b16 %v3119
    %v3319 = vunpack.c.l.b16 %v3120
    %v3320 = vunpack.c.l.b16 %v3121
    %v3321 = vunpack.c.l.b16 %v3122
    %v3322 = vunpack.c.l.b16 %v3123
    %v3323 = vunpack.c.l.b16 %v3124
    %v3324 = vunpack.c.l.b16 %v3125
    %v3325 = vunpack.c.l.b16 %v3126
    %v3326 = vunpack.c.l.b16 %v3127
    %v3327 = vunpack.c.l.b16 %v3128
    %v3328 = vpack.c.b16 %v3233, %v3232
    %v3329 = vpack.c.b16 %v3235, %v3234
    %v3330 = vpack.c.b16 %v3237, %v3236
    %v3331 = vpack.c.b16 %v3239, %v3238
    %v3332 = vpack.c.b16 %v3241, %v3240
    %v3333 = vpack.c.b16 %v3243, %v3242
    %v3334 = vpack.c.b16 %v3245, %v3244
    %v3335 = vpack.c.b16 %v3247, %v3246
    %v3336 = vpack.c.b16 %v3249, %v3248
    %v3337 = vpack.c.b16 %v3251, %v3250
    %v3338 = vpack.c.b16 %v3253, %v3252
    %v3339 = vpack.c.b16 %v3255, %v3254
    %v3340 = vpack.c.b16 %v3257, %v3256
    %v3341 = vpack.c.b16 %v3259, %v3258
    %v3342 = vpack.c.b16 %v3261, %v3260
    %v3343 = vpack.c.b16 %v3263, %v3262
    %v3344 = vpack.c.b16 %v3265, %v3264
    %v3345 = vpack.c.b16 %v3267, %v3266
    %v3346 = vpack.c.b16 %v3269, %v3268
    %v3347 = vpack.c.b16 %v3271, %v3270
    %v3348 = vpack.c.b16 %v3273, %v3272
    %v3349 = vpack.c.b16 %v3275, %v3274
    %v3350 = vpack.c.b16 %v3277, %v3276
    %v3351 = vpack.c.b16 %v3279, %v3278
    %v3352 = vpack.c.b16 %v3281, %v3280
    %v3353 = vpack.c.b16 %v3283, %v3282
    %v3354 = vpack.c.b16 %v3285, %v3284
    %v3355 = vpack.c.b16 %v3287, %v3286
    %v3356 = vpack.c.b16 %v3289, %v3288
    %v3357 = vpack.c.b16 %v3291, %v3290
    %v3358 = vpack.c.b16 %v3293, %v3292
    %v3359 = vpack.c.b16 %v3295, %v3294
    %v3360 = vpack.c.b16 %v3297, %v3296
    %v3361 = vpack.c.b16 %v3299, %v3298
    %v3362 = vpack.c.b16 %v3301, %v3300
    %v3363 = vpack.c.b16 %v3303, %v3302
    %v3364 = vpack.c.b16 %v3305, %v3304
    %v3365 = vpack.c.b16 %v3307, %v3306
    %v3366 = vpack.c.b16 %v3309, %v3308
    %v3367 = vpack.c.b16 %v3311, %v3310
    %v3368 = vpack.c.b16 %v3313, %v3312
    %v3369 = vpack.c.b16 %v3315, %v3314
    %v3370 = vpack.c.b16 %v3317, %v3316
    %v3371 = vpack.c.b16 %v3319, %v3318
    %v3372 = vpack.c.b16 %v3321, %v3320
    %v3373 = vpack.c.b16 %v3323, %v3322
    %v3374 = vpack.c.b16 %v3325, %v3324
    %v3375 = vpack.c.b16 %v3327, %v3326
    %3424 = vmatprep.subr.bf16.mxu0 0
    %3425 = vmatpush1.bf16.msra.mxu0 %v3335
    %3426 = vmatprep.subr.bf16.mxu0 0
    %3427 = vmatpush1.bf16.msra.mxu0 %v3334
    %3428 = vmatprep.subr.bf16.mxu0 0
    %3429 = vmatpush1.bf16.msra.mxu0 %v3333
    %3430 = vmatprep.subr.bf16.mxu0 0
    %3431 = vmatpush1.bf16.msra.mxu0 %v3332
    %3432 = vmatprep.subr.bf16.mxu0 0
    %3433 = vmatpush1.bf16.msra.mxu0 %v3331
    %3434 = vmatprep.subr.bf16.mxu0 0
    %3435 = vmatpush1.bf16.msra.mxu0 %v3330
    %3436 = vmatprep.subr.bf16.mxu0 0
    %3437 = vmatpush1.bf16.msra.mxu0 %v3329
    %3438 = vmatprep.subr.bf16.mxu0 0
    %3439 = vmatpush1.bf16.msra.mxu0 %v3328
    %3440 = vmatprep.subr.bf16.mxu0 0
    %3441 = vmatpush2.bf16.msra.mxu0 %v3343
    %3442 = vmatprep.subr.bf16.mxu0 0
    %3443 = vmatpush2.bf16.msra.mxu0 %v3342
    %3444 = vmatprep.subr.bf16.mxu0 0
    %3445 = vmatpush2.bf16.msra.mxu0 %v3341
    %3446 = vmatprep.subr.bf16.mxu0 0
    %3447 = vmatpush2.bf16.msra.mxu0 %v3340
    %3448 = vmatprep.subr.bf16.mxu0 0
    %3449 = vmatpush2.bf16.msra.mxu0 %v3339
    %3450 = vmatprep.subr.bf16.mxu0 0
    %3451 = vmatpush2.bf16.msra.mxu0 %v3338
    %3452 = vmatprep.subr.bf16.mxu0 0
    %3453 = vmatpush2.bf16.msra.mxu0 %v3337
    %3454 = vmatprep.subr.bf16.mxu0 0
    %3455 = vmatpush2.bf16.msra.mxu0 %v3336
    %3456 = vmatprep.mubr.bf16.mxu0 %v3028
    %3457 = vmatmul.mubr.bf16.gmra.mxu0 %v3027
    %v3458 = vpop.f32.mrf.mxu0
    %v3459 = vadd.f32 %v3134, %v3458
    %v3460 = vpop.f32.mrf.mxu0
    %v3461 = vpop.f32.mrf.mxu0
    %v3462 = vpop.f32.mrf.mxu0
    %3463 = vdwg.mxu0
    %3464 = vmatprep.subr.bf16.mxu0 0
    %3465 = vmatpush1.bf16.msra.mxu0 %v3351
    %3466 = vmatprep.subr.bf16.mxu0 0
    %3467 = vmatpush1.bf16.msra.mxu0 %v3350
    %3468 = vmatprep.subr.bf16.mxu0 0
    %3469 = vmatpush1.bf16.msra.mxu0 %v3349
    %3470 = vmatprep.subr.bf16.mxu0 0
    %3471 = vmatpush1.bf16.msra.mxu0 %v3348
    %3472 = vmatprep.subr.bf16.mxu0 0
    %3473 = vmatpush1.bf16.msra.mxu0 %v3347
    %3474 = vmatprep.subr.bf16.mxu0 0
    %3475 = vmatpush1.bf16.msra.mxu0 %v3346
    %3476 = vmatprep.subr.bf16.mxu0 0
    %3477 = vmatpush1.bf16.msra.mxu0 %v3345
    %3478 = vmatprep.subr.bf16.mxu0 0
    %3479 = vmatpush1.bf16.msra.mxu0 %v3344
    %3480 = vmatprep.subr.bf16.mxu0 0
    %3481 = vmatpush2.bf16.msra.mxu0 %v3359
    %3482 = vmatprep.subr.bf16.mxu0 0
    %3483 = vmatpush2.bf16.msra.mxu0 %v3358
    %3484 = vmatprep.subr.bf16.mxu0 0
    %3485 = vmatpush2.bf16.msra.mxu0 %v3357
    %3486 = vmatprep.subr.bf16.mxu0 0
    %3487 = vmatpush2.bf16.msra.mxu0 %v3356
    %3488 = vmatprep.subr.bf16.mxu0 0
    %3489 = vmatpush2.bf16.msra.mxu0 %v3355
    %3490 = vmatprep.subr.bf16.mxu0 0
    %3491 = vmatpush2.bf16.msra.mxu0 %v3354
    %3492 = vmatprep.subr.bf16.mxu0 0
    %3493 = vmatpush2.bf16.msra.mxu0 %v3353
    %3494 = vmatprep.subr.bf16.mxu0 0
    %3495 = vmatpush2.bf16.msra.mxu0 %v3352
    %3496 = vmatprep.mubr.bf16.mxu0 %v3030
    %3497 = vmatmul.mubr.bf16.gmra.mxu0 %v3029
    %v3498 = vpop.f32.mrf.mxu0
    %v3499 = vadd.f32 %v3459, %v3498
    %v3500 = vpop.f32.mrf.mxu0
    %v3501 = vpop.f32.mrf.mxu0
    %v3502 = vpop.f32.mrf.mxu0
    %3503 = vdwg.mxu0
    %3504 = vmatprep.subr.bf16.mxu0 0
    %3505 = vmatpush1.bf16.msra.mxu0 %v3367
    %3506 = vmatprep.subr.bf16.mxu0 0
    %3507 = vmatpush1.bf16.msra.mxu0 %v3366
    %3508 = vmatprep.subr.bf16.mxu0 0
    %3509 = vmatpush1.bf16.msra.mxu0 %v3365
    %3510 = vmatprep.subr.bf16.mxu0 0
    %3511 = vmatpush1.bf16.msra.mxu0 %v3364
    %3512 = vmatprep.subr.bf16.mxu0 0
    %3513 = vmatpush1.bf16.msra.mxu0 %v3363
    %3514 = vmatprep.subr.bf16.mxu0 0
    %3515 = vmatpush1.bf16.msra.mxu0 %v3362
    %3516 = vmatprep.subr.bf16.mxu0 0
    %3517 = vmatpush1.bf16.msra.mxu0 %v3361
    %3518 = vmatprep.subr.bf16.mxu0 0
    %3519 = vmatpush1.bf16.msra.mxu0 %v3360
    %3520 = vmatprep.subr.bf16.mxu0 0
    %3521 = vmatpush2.bf16.msra.mxu0 %v3375
    %3522 = vmatprep.subr.bf16.mxu0 0
    %3523 = vmatpush2.bf16.msra.mxu0 %v3374
    %3524 = vmatprep.subr.bf16.mxu0 0
    %3525 = vmatpush2.bf16.msra.mxu0 %v3373
    %3526 = vmatprep.subr.bf16.mxu0 0
    %3527 = vmatpush2.bf16.msra.mxu0 %v3372
    %3528 = vmatprep.subr.bf16.mxu0 0
    %3529 = vmatpush2.bf16.msra.mxu0 %v3371
    %3530 = vmatprep.subr.bf16.mxu0 0
    %3531 = vmatpush2.bf16.msra.mxu0 %v3370
    %3532 = vmatprep.subr.bf16.mxu0 0
    %3533 = vmatpush2.bf16.msra.mxu0 %v3369
    %3534 = vmatprep.subr.bf16.mxu0 0
    %3535 = vmatpush2.bf16.msra.mxu0 %v3368
    %3536 = vmatprep.mubr.bf16.mxu0 %v3032
    %3537 = vmatmul.mubr.bf16.gmra.mxu0 %v3031
    %v3538 = vpop.f32.mrf.mxu0
    %v3539 = vadd.f32 %v3499, %v3538
    %v3540 = vpop.f32.mrf.mxu0
    %v3541 = vpop.f32.mrf.mxu0
    %v3542 = vpop.f32.mrf.mxu0
    %3543 = vdwg.mxu0
    %3544 = vst [vmem:[#allocation11] sm:$0xff] %v3539
    // Predicated region
    $region50: #{tpu_custom_call.1} parent=1 // pred_check
      _
    $region51: #{tpu_custom_call.1} parent=1 // pred_check_branch
      %3546 = sbr.rel (0) target = $region53
    $region52: #{tpu_custom_call.1} parent=1 // pred_region
      %s3548 = ssub.s32 128, 128
      %3549 = vsyncadd [#allocation4], %s3548
      %s3551 = sshll.u32 [#allocation11], 4
      %s3552 = int_to_ptr.vmem [resolvable:$true] %s3551
      %3554 = dma.vmem_to_hbm [thread:$0]  %s3552, 128, %s7, [#allocation4]
    $region53: #{tpu_custom_call.1} parent=1 // pred_fallthru
      _
    // Predicated region
    $region54: #{tpu_custom_call.1} parent=1 // pred_check
      _
    $region55: #{tpu_custom_call.1} parent=1 // pred_check_branch
      %3556 = sbr.rel (0) target = $region57
    $region56: #{tpu_custom_call.1} parent=1 // pred_region
      %3557 = dma.done [#allocation4], 128
    $region57: #{tpu_custom_call.1} parent=1 // pred_fallthru
      _
    %3558 = vsyncpa [#allocation3], 1
    %3559 = vsyncpa [#allocation6], 1
    %3560 = vsyncpa [#allocation9], 1
    %3561 = vsyncpa [#allocation4], 1

</llo_original>
